<compile_context>
chip_gen: v5e
topology: v5e:2x2
jax: 0.10.0
libtpu: 0.0.40
codegen_flags: <defaults>
</compile_context>

<pallas_src>
import functools

import jax
import jax.numpy as jnp
from jax import lax
from jax.experimental import pallas as pl
from jax.experimental.pallas import tpu as pltpu


# bf16 MXU operands (fp32 accumulation everywhere).  Set to jnp.float32 only
# if bit-level parity with a fp32 PyTorch reference is required.
MATMUL_DTYPE = jnp.bfloat16
_VMEM_LIMIT = 32 * 1024 * 1024   # <= v7x physical VMEM / 2; plenty for these tiles
_LN_EPS = 1e-5

# TODO(synk): exact erf-GELU is not guaranteed to lower in Mosaic; the fused
# kernel uses the tanh approximation (EUP) by default.  Flip to True if
# lax.erf lowers on your jaxlib to recover exact nn.GELU() semantics.
GELU_EXACT = False


# --------------------------------------------------------------------------
# tiling helpers
# --------------------------------------------------------------------------
def _pick_tile(size, max_tile, quantum):
    """Largest tile <= max_tile that divides `size` and is a multiple of
    `quantum`, else the full dimension (always legal as a block dim)."""
    if size <= max_tile:
        return size
    t = (max_tile // quantum) * quantum
    while t >= quantum:
        if size % t == 0:
            return t
        t -= quantum
    return size


def _pick_row_tile(m, max_tile, quantum=8):
    """Row tile that prefers >= 2 row blocks so both v7x TensorCores get work."""
    if m >= 2 * quantum and m % 2 == 0:
        cap = min(max_tile, m // 2)
        cap = (cap // quantum) * quantum
        if cap >= quantum:
            t = _pick_tile(m, cap, quantum)
            if m % t == 0:
                return t
    return _pick_tile(m, max_tile, quantum)


# --------------------------------------------------------------------------
# fused (LayerNorm ->) matmul (-> bias) kernel
# LN is computed once per row block (j == 0) and cached in a VMEM scratch.
# --------------------------------------------------------------------------
def _make_linear_kernel(nk, has_ln, has_bias):
    def kernel(*refs):
        idx = 0
        x_ref = refs[idx]; idx += 1
        w_ref = refs[idx]; idx += 1
        if has_ln:
            g_ref = refs[idx]; beta_ref = refs[idx + 1]; idx += 2
        if has_bias:
            b_ref = refs[idx]; idx += 1
        o_ref = refs[idx]; idx += 1
        acc_ref = refs[idx]; idx += 1
        xn_ref = refs[idx] if has_ln else None

        @pl.when(pl.program_id(2) == 0)
        def _():
            acc_ref[...] = jnp.zeros_like(acc_ref)

        if has_ln:
            # Row block i is constant while j sweeps (K is un-tiled when LN is
            # fused): normalize once, cache, reuse for the other N tiles.
            @pl.when(pl.program_id(1) == 0)
            def _():
                xf = x_ref[...].astype(jnp.float32)
                mu = jnp.mean(xf, axis=-1, keepdims=True)
                var = jnp.mean((xf - mu) ** 2, axis=-1, keepdims=True)
                xn = (xf - mu) * lax.rsqrt(var + _LN_EPS)
                xn = xn * g_ref[...] + beta_ref[...]
                xn_ref[...] = xn.astype(xn_ref.dtype)
            xm = xn_ref[...]
        else:
            xm = x_ref[...].astype(MATMUL_DTYPE)

        acc_ref[...] += jnp.dot(xm, w_ref[...].astype(MATMUL_DTYPE),
                                preferred_element_type=jnp.float32)

        @pl.when(pl.program_id(2) == nk - 1)
        def _():
            y = acc_ref[...]
            if has_bias:
                y = y + b_ref[...].astype(jnp.float32)
            o_ref[...] = y.astype(o_ref.dtype)

    return kernel


def fused_linear(x, w, b=None, ln=None, tm_max=256, tn_max=256, tk_max=512):
    """out = [LN(x)] @ w [+ b]  with a tiled (M, N, K) grid, fp32 accumulator."""
    M, K = x.shape
    _, N = w.shape
    has_ln = ln is not None
    has_bias = b is not None

    tm = _pick_row_tile(M, tm_max)
    tn = _pick_tile(N, tn_max, 128)
    tk = K if has_ln else _pick_tile(K, tk_max, 128)   # LN needs the full row
    nk = K // tk
    grid = (M // tm, N // tn, nk)

    in_specs = [pl.BlockSpec((tm, tk), lambda i, j, k: (i, k)),
                pl.BlockSpec((tk, tn), lambda i, j, k: (k, j))]
    args = [x, w]
    if has_ln:
        g, beta = ln
        in_specs += [pl.BlockSpec((1, K), lambda i, j, k: (0, 0)),
                     pl.BlockSpec((1, K), lambda i, j, k: (0, 0))]
        args += [g.reshape(1, K), beta.reshape(1, K)]
    if has_bias:
        in_specs.append(pl.BlockSpec((1, tn), lambda i, j, k: (0, j)))
        args.append(b.reshape(1, N))

    scratch = [pltpu.VMEM((tm, tn), jnp.float32)]
    if has_ln:
        scratch.append(pltpu.VMEM((tm, K), MATMUL_DTYPE))   # cached normalized x

    # j must stay on one core when the LN cache is used (cache filled at j==0).
    sem = ("parallel", "arbitrary" if has_ln else "parallel", "arbitrary")

    kernel = _make_linear_kernel(nk, has_ln, has_bias)
    return pl.pallas_call(
        kernel,
        out_shape=jax.ShapeDtypeStruct((M, N), x.dtype),
        grid=grid,
        in_specs=in_specs,
        out_specs=pl.BlockSpec((tm, tn), lambda i, j, k: (i, j)),
        scratch_shapes=scratch,
        compiler_params=pltpu.CompilerParams(
            dimension_semantics=sem,
            vmem_limit_bytes=_VMEM_LIMIT),
    )(*args)


# --------------------------------------------------------------------------
# fused MLP block: LN2 -> FF1 -> GELU -> FF2 -> +bias -> + 2*x, one kernel
# (the (tm, mlp_dim) hidden activation never leaves VMEM)
# TODO(synk): for large dim/mlp_dim, tile the weight K/N axes with an inner
# emit_pipeline instead of keeping W1/W2 fully resident per grid step.
# --------------------------------------------------------------------------
def _mlp_kernel(x_ref, g_ref, b_ref, w1_ref, b1_ref, w2_ref, b2_ref, o_ref):
    x = x_ref[...].astype(jnp.float32)
    mu = jnp.mean(x, axis=-1, keepdims=True)
    var = jnp.mean((x - mu) ** 2, axis=-1, keepdims=True)
    xn = (x - mu) * lax.rsqrt(var + _LN_EPS) * g_ref[...] + b_ref[...]

    h = jnp.dot(xn.astype(MATMUL_DTYPE), w1_ref[...].astype(MATMUL_DTYPE),
                preferred_element_type=jnp.float32)
    h = h + b1_ref[...].astype(jnp.float32)
    if GELU_EXACT:
        h = 0.5 * h * (1.0 + lax.erf(h * 0.7071067811865475))
    else:
        # tanh-approx GELU (tanh is an EUP op; always lowers on Mosaic)
        h = 0.5 * h * (1.0 + jnp.tanh(0.7978845608028654 * (h + 0.044715 * h * h * h)))

    y = jnp.dot(h.astype(MATMUL_DTYPE), w2_ref[...].astype(MATMUL_DTYPE),
                preferred_element_type=jnp.float32)
    # Residual wrapper + outer "+ x"  =>  f(x) + 2*x  (matches PyTorch ref)
    y = y + b2_ref[...].astype(jnp.float32) + 2.0 * x
    o_ref[...] = y.astype(o_ref.dtype)


def fused_mlp(x, g, beta, w1, b1, w2, b2, tm_max=256):
    M, K = x.shape
    Hd = w1.shape[1]
    tm = _pick_row_tile(M, tm_max)
    return pl.pallas_call(
        _mlp_kernel,
        out_shape=jax.ShapeDtypeStruct((M, K), x.dtype),
        grid=(M // tm,),
        in_specs=[pl.BlockSpec((tm, K), lambda i: (i, 0)),
                  pl.BlockSpec((1, K), lambda i: (0, 0)),
                  pl.BlockSpec((1, K), lambda i: (0, 0)),
                  pl.BlockSpec((K, Hd), lambda i: (0, 0)),
                  pl.BlockSpec((1, Hd), lambda i: (0, 0)),
                  pl.BlockSpec((Hd, K), lambda i: (0, 0)),
                  pl.BlockSpec((1, K), lambda i: (0, 0))],
        out_specs=pl.BlockSpec((tm, K), lambda i: (i, 0)),
        compiler_params=pltpu.CompilerParams(
            dimension_semantics=("parallel",),
            vmem_limit_bytes=_VMEM_LIMIT),
    )(x, g.reshape(1, K), beta.reshape(1, K), w1, b1.reshape(1, Hd),
      w2, b2.reshape(1, K))


# --------------------------------------------------------------------------
# re-attention kernel: batched QK^T over heads -> diag/pad mask -> softmax ->
# head mix -> head-LayerNorm -> (A_g @ V_g) @ W_out_g accumulation -> +bias ->
# + 2*residual.  Grid = (B, N/tq); q/k/v arrive head-major (H, ., D).
# --------------------------------------------------------------------------
def _reattn_kernel(q_ref, k_ref, v_ref, wmix_ref, g_ref, b_ref,
                   wout_ref, bout_ref, res_ref, o_ref, *,
                   heads, dim_head, n_valid, tq):
    H, D = heads, dim_head
    q = q_ref[...].astype(MATMUL_DTYPE)       # (H, tq, D) -- scale folded into W_q
    k = k_ref[...].astype(MATMUL_DTYPE)       # (H, Nk, D)
    v = v_ref[...].astype(jnp.float32)        # (H, Nk, D)
    nk = k.shape[1]

    # batched QK^T over the head axis: one MXU einsum, no per-head lane slices
    dots = jnp.einsum('hqd,hkd->hqk', q, k,
                      preferred_element_type=jnp.float32)      # (H, tq, Nk)

    q0 = pl.program_id(1) * tq
    row = lax.broadcasted_iota(jnp.int32, (tq, nk), 0) + q0     # global query idx
    col = lax.broadcasted_iota(jnp.int32, (tq, nk), 1)
    mask = col == row                                           # diagonal -inf mask
    if n_valid < nk:
        mask = mask | (col >= n_valid)                          # padded keys
    dots = jnp.where(mask[None, :, :], jnp.float32(-1e30), dots)

    m = jnp.max(dots, axis=-1, keepdims=True)
    e = jnp.exp(dots - m)
    s = jnp.sum(e, axis=-1, keepdims=True)
    attn = e * pl.reciprocal(s, approx=True)                    # (H, tq, Nk)

    # re-attention head mix: mixed_g = sum_h W[h, g] * attn_h
    # TODO(synk): express as one (H,H)x(H,tq*Nk) MXU matmul once rank-2 x rank-3
    # dot_general is guaranteed to lower in Mosaic; kept as VALU accumulation.
    mixed = []
    for g in range(H):
        acc = attn[0] * wmix_ref[0, g]
        for h in range(1, H):
            acc = acc + attn[h] * wmix_ref[h, g]
        mixed.append(acc)

    # LayerNorm over the head axis, per (i, j) entry
    inv_h = jnp.float32(1.0 / H)
    mu = mixed[0]
    for g in range(1, H):
        mu = mu + mixed[g]
    mu = mu * inv_h
    var = (mixed[0] - mu) ** 2
    for g in range(1, H):
        var = var + (mixed[g] - mu) ** 2
    var = var * inv_h
    rstd = lax.rsqrt(var + _LN_EPS)

    # padded V rows zeroed once (head-LN beta offset would otherwise leak)
    if n_valid < nk:
        kv_valid = lax.broadcasted_iota(jnp.int32, (nk, D), 0) < n_valid
        v = jnp.where(kv_valid[None, :, :], v, 0.0)

    # out-projection fused into the epilogue; start from bias + double residual
    y = bout_ref[...].astype(jnp.float32) + 2.0 * res_ref[...].astype(jnp.float32)
    for g in range(H):
        a_g = ((mixed[g] - mu) * rstd * g_ref[g] + b_ref[g]).astype(MATMUL_DTYPE)
        og = jnp.dot(a_g, v[g].astype(MATMUL_DTYPE),
                     preferred_element_type=jnp.float32)        # (tq, D)
        y = y + jnp.dot(og.astype(MATMUL_DTYPE), wout_ref[g].astype(MATMUL_DTYPE),
                        preferred_element_type=jnp.float32)     # (tq, dim)
    o_ref[...] = y.astype(o_ref.dtype)


def reattention_block(q, k, v, reattn_w, ln_g, ln_b, w_out_hd, b_out, residual,
                      n_valid, tq_max=64):
    """q/k/v: (B, H, Np, D) head-major; residual: (B, Np, dim).
    Returns (B, Np, dim) = out_proj(re-attention(q,k,v)) + b_out + 2*residual."""
    B, H, Np, D = q.shape
    dim = w_out_hd.shape[-1]
    # tq capped at 64 to bound the number of live (tq, Nk) fp32 intermediates
    tq = _pick_tile(Np, tq_max, 8)
    nq = Np // tq

    smem = pl.BlockSpec(memory_space=pltpu.MemorySpace.SMEM)
    kernel = functools.partial(_reattn_kernel, heads=H, dim_head=D,
                               n_valid=n_valid, tq=tq)
    return pl.pallas_call(
        kernel,
        out_shape=jax.ShapeDtypeStruct((B, Np, dim), residual.dtype),
        grid=(B, nq),
        in_specs=[
            pl.BlockSpec((None, H, tq, D), lambda b, qi: (b, 0, qi, 0)),
            pl.BlockSpec((None, H, Np, D), lambda b, qi: (b, 0, 0, 0)),
            pl.BlockSpec((None, H, Np, D), lambda b, qi: (b, 0, 0, 0)),
            smem, smem, smem,
            pl.BlockSpec((H, D, dim), lambda b, qi: (0, 0, 0)),
            pl.BlockSpec((1, dim), lambda b, qi: (0, 0)),
            pl.BlockSpec((None, tq, dim), lambda b, qi: (b, qi, 0)),
        ],
        out_specs=pl.BlockSpec((None, tq, dim), lambda b, qi: (b, qi, 0)),
        compiler_params=pltpu.CompilerParams(
            dimension_semantics=("parallel", "parallel"),
            vmem_limit_bytes=_VMEM_LIMIT),
    )(q, k, v, reattn_w, ln_g, ln_b, w_out_hd, b_out, residual)


# --------------------------------------------------------------------------
# JAX glue (layout only)
# --------------------------------------------------------------------------
def patch_shift(x, patch_size):
    # x: (B, C, H, W) NCHW
    s = patch_size // 2
    xp = jnp.pad(x, ((0, 0), (0, 0), (s, s), (s, s)))
    xm = jnp.mean(xp, axis=1, keepdims=True)
    x_l2 = xm[:, :, s:-s, :-2 * s]
    x_r2 = xm[:, :, s:-s, 2 * s:]
    x_t2 = xm[:, :, :-2 * s, s:-s]
    x_b2 = xm[:, :, 2 * s:, s:-s]
    return jnp.concatenate([x, x_l2, x_r2, x_t2, x_b2], axis=1)


def to_patches(x, p):
    # 'b c (h p1) (w p2) -> b (h w) (p1 p2 c)'
    B, C, H, W = x.shape
    h, w = H // p, W // p
    x = x.reshape(B, C, h, p, w, p)
    x = jnp.transpose(x, (0, 2, 4, 3, 5, 1))
    return x.reshape(B, h * w, p * p * C)


# --------------------------------------------------------------------------
# Parameters (deterministic synthetic init; per-head scale folded into W_qkv
# once here -- exact, since to_qkv has no bias)
# --------------------------------------------------------------------------
def init_params(key, *, channels, patch_size, dim, depth, heads, dim_head,
                mlp_dim, num_patches, num_classes):
    patch_dim = (channels + 4) * patch_size ** 2
    inner = heads * dim_head
    keys = jax.random.split(key, 6 + depth)

    def dense(k, i, o):
        return 0.02 * jax.random.normal(k, (i, o), jnp.float32)

    params = {
        'w_patch': dense(keys[0], patch_dim, dim),
        'b_patch': jnp.zeros((dim,), jnp.float32),
        'pos_emb': jax.random.normal(keys[1], (1, num_patches + 1, dim), jnp.float32),
        'cls': jax.random.normal(keys[2], (1, 1, dim), jnp.float32),
        'head_ln_g': jnp.ones((dim,), jnp.float32),
        'head_ln_b': jnp.zeros((dim,), jnp.float32),
        'w_head': dense(keys[3], dim, num_classes),
        'b_head': jnp.zeros((num_classes,), jnp.float32),
    }
    layers = []
    for l in range(depth):
        k = jax.random.split(keys[6 + l], 5)
        w_qkv = dense(k[0], dim, inner * 3)
        scale = (dim_head ** -0.5) * jnp.ones((heads,), jnp.float32)
        scale_cols = jnp.repeat(scale, dim_head)                  # (inner,)
        # fold learned per-head scale into q columns (precomputed once)
        w_qkv = jnp.concatenate(
            [w_qkv[:, :inner] * scale_cols[None, :], w_qkv[:, inner:]], axis=1)
        layers.append(dict(
            ln1_g=jnp.ones((dim,), jnp.float32), ln1_b=jnp.zeros((dim,), jnp.float32),
            w_qkv=w_qkv,
            reattn_w=jax.random.normal(k[1], (heads, heads), jnp.float32),
            reattn_g=jnp.ones((heads,), jnp.float32), reattn_b=jnp.zeros((heads,), jnp.float32),
            w_out=dense(k[2], inner, dim), b_out=jnp.zeros((dim,), jnp.float32),
            ln2_g=jnp.ones((dim,), jnp.float32), ln2_b=jnp.zeros((dim,), jnp.float32),
            w_ff1=dense(k[3], dim, mlp_dim), b_ff1=jnp.zeros((mlp_dim,), jnp.float32),
            w_ff2=dense(k[4], mlp_dim, dim), b_ff2=jnp.zeros((dim,), jnp.float32),
        ))
    params['layers'] = layers
    return params


# --------------------------------------------------------------------------
# Forward pass
# --------------------------------------------------------------------------
def deepvit_forward(params, img, *, patch_size, heads, dim_head, seq_pad_to=8):
    B = img.shape[0]
    dim = params['w_patch'].shape[1]
    inner = heads * dim_head

    # patch embedding (layout glue + fused matmul)
    x = patch_shift(img, patch_size)
    x = to_patches(x, patch_size)                          # (B, np, patch_dim)
    Nt, Pd = x.shape[1], x.shape[2]
    x = fused_linear(x.reshape(B * Nt, Pd), params['w_patch'],
                     b=params['b_patch']).reshape(B, Nt, dim)

    # cls token + positional embedding (dropout p=0 -> identity)
    cls = jnp.broadcast_to(params['cls'], (B, 1, dim))
    x = jnp.concatenate([cls, x], axis=1)                  # (B, n, dim)
    n = x.shape[1]
    x = x + params['pos_emb'][:, :n]

    # pad the token axis to a multiple of `seq_pad_to` (sublane alignment);
    # padded tokens are masked out of attention inside the kernel.
    n_pad = -(-n // seq_pad_to) * seq_pad_to
    if n_pad != n:
        x = jnp.pad(x, ((0, 0), (0, n_pad - n), (0, 0)))

    x2 = x.reshape(B * n_pad, dim)
    for lyr in params['layers']:
        # --- attention block: LN1 + QKV fused (scale pre-folded) ---
        qkv = fused_linear(x2, lyr['w_qkv'], ln=(lyr['ln1_g'], lyr['ln1_b']))
        # head-major split (B, H, N, D): pure layout, done once in XLA so the
        # kernel needs no per-head 32-lane slices / relayouts.
        qkv5 = qkv.reshape(B, n_pad, 3, heads, dim_head)
        qkv5 = jnp.transpose(qkv5, (2, 0, 3, 1, 4))        # (3, B, H, n_pad, D)
        q, k, v = qkv5[0], qkv5[1], qkv5[2]
        # re-attention + head-LN + A@V + out-proj + bias + 2x residual (one kernel)
        x3 = reattention_block(q, k, v, lyr['reattn_w'], lyr['reattn_g'],
                               lyr['reattn_b'],
                               lyr['w_out'].reshape(heads, dim_head, dim),
                               lyr['b_out'].reshape(1, dim),
                               x2.reshape(B, n_pad, dim), n_valid=n)
        x2 = x3.reshape(B * n_pad, dim)

        # --- feed-forward block: LN2 + FF1 + GELU + FF2 + bias + 2x (one kernel) ---
        x2 = fused_mlp(x2, lyr['ln2_g'], lyr['ln2_b'],
                       lyr['w_ff1'], lyr['b_ff1'], lyr['w_ff2'], lyr['b_ff2'])

    # pool = 'cls' then LayerNorm + classifier head (fused)
    x = x2.reshape(B, n_pad, dim)
    xc = x[:, 0]                                            # (B, dim)
    logits = fused_linear(xc, params['w_head'], b=params['b_head'],
                          ln=(params['head_ln_g'], params['head_ln_b']))
    return logits


# --------------------------------------------------------------------------
if __name__ == "__main__":
    key = jax.random.PRNGKey(0)
    img_size, patch_size, channels = 16, 4, 3
    dim, depth, heads, dim_head, mlp_dim, num_classes = 64, 2, 4, 32, 128, 10
    num_patches = (img_size // patch_size) ** 2

    k_img, k_par = jax.random.split(key)
    img = jax.random.normal(k_img, (2, channels, img_size, img_size), jnp.float32)
    params = init_params(k_par, channels=channels, patch_size=patch_size, dim=dim,
                         depth=depth, heads=heads, dim_head=dim_head, mlp_dim=mlp_dim,
                         num_patches=num_patches, num_classes=num_classes)

    fwd = jax.jit(functools.partial(deepvit_forward, patch_size=patch_size,
                                    heads=heads, dim_head=dim_head))
    out = fwd(params, img)
    jax.block_until_ready(out)
    assert out.shape == (2, num_classes)
    print("KERNEL_OK")
</pallas_src>

<mosaic_0001>
module attributes {stable_mosaic.version = 11 : i64} {
  func.func @kernel(%arg0: i32, %arg1: i32, %arg2: i32, %arg3: memref<16x112xf32, #tpu.memory_space<vmem>>, %arg4: memref<112x64xf32, #tpu.memory_space<vmem>>, %arg5: memref<1x64xf32, #tpu.memory_space<vmem>>, %arg6: memref<16x64xf32, #tpu.memory_space<vmem>>, %arg7: memref<16x64xf32, #tpu.memory_space<vmem>>) attributes {dimension_semantics = [#tpu.dimension_semantics<parallel>, #tpu.dimension_semantics<parallel>, #tpu.dimension_semantics<arbitrary>], iteration_bounds = array<i64: 2, 1, 1>, scalar_prefetch = 0 : i64, scratch_operands = 1 : i64, tpu.core_type = #tpu.core_type<tc>, window_params = [{transform_indices = @transform_0, window_bounds = array<i64: 16, 112>}, {transform_indices = @transform_1, window_bounds = array<i64: 112, 64>}, {transform_indices = @transform_2, window_bounds = array<i64: 1, 64>}, {transform_indices = @transform_3, window_bounds = array<i64: 16, 64>}]} {
    %c0_i32 = arith.constant 0 : i32
    %0 = arith.cmpi eq, %arg2, %c0_i32 : i32
    %1 = arith.extui %0 : i1 to i32
    %c0_i32_0 = arith.constant 0 : i32
    %2 = arith.cmpi ne, %1, %c0_i32_0 : i32
    scf.if %2 {
      %cst_10 = arith.constant 0.000000e+00 : f32
      %14 = vector.broadcast %cst_10 : f32 to vector<16x64xf32>
      %c0_11 = arith.constant 0 : index
      %c0_12 = arith.constant 0 : index
      %15 = vector.load %arg7[%c0_11, %c0_12] : memref<16x64xf32, #tpu.memory_space<vmem>>, vector<16x64xf32>
      tpu.vector_store %arg7[%c0_11, %c0_12], %14 {strides = array<i32>} : memref<16x64xf32, #tpu.memory_space<vmem>>, vector<16x64xf32>,
    } else {
    }
    %c0 = arith.constant 0 : index
    %c0_1 = arith.constant 0 : index
    %3 = vector.load %arg3[%c0, %c0_1] : memref<16x112xf32, #tpu.memory_space<vmem>>, vector<16x112xf32>
    %4 = arith.truncf %3 : vector<16x112xf32> to vector<16x112xbf16>
    %c0_2 = arith.constant 0 : index
    %c0_3 = arith.constant 0 : index
    %5 = vector.load %arg7[%c0_2, %c0_3] : memref<16x64xf32, #tpu.memory_space<vmem>>, vector<16x64xf32>
    %c0_4 = arith.constant 0 : index
    %c0_5 = arith.constant 0 : index
    %6 = vector.load %arg4[%c0_4, %c0_5] : memref<112x64xf32, #tpu.memory_space<vmem>>, vector<112x64xf32>
    %7 = arith.truncf %6 : vector<112x64xf32> to vector<112x64xbf16>
    %cst = arith.constant dense<0.000000e+00> : vector<16x64xf32>
    %8 = tpu.matmul %4, %7, %cst {dimension_numbers = #tpu.dot_dimension_numbers<[1], [0], [0], [1], [0, 0, 1, 1], [], []>} : vector<16x112xbf16>, vector<112x64xbf16>, vector<16x64xf32> -> vector<16x64xf32>
    %9 = arith.addf %5, %8 : vector<16x64xf32>
    %c0_6 = arith.constant 0 : index
    %c0_7 = arith.constant 0 : index
    %10 = vector.load %arg7[%c0_6, %c0_7] : memref<16x64xf32, #tpu.memory_space<vmem>>, vector<16x64xf32>
    tpu.vector_store %arg7[%c0_6, %c0_7], %9 {strides = array<i32>} : memref<16x64xf32, #tpu.memory_space<vmem>>, vector<16x64xf32>,
    %c0_i32_8 = arith.constant 0 : i32
    %11 = arith.cmpi eq, %arg2, %c0_i32_8 : i32
    %12 = arith.extui %11 : i1 to i32
    %c0_i32_9 = arith.constant 0 : i32
    %13 = arith.cmpi ne, %12, %c0_i32_9 : i32
    scf.if %13 {
      %c0_10 = arith.constant 0 : index
      %c0_11 = arith.constant 0 : index
      %14 = vector.load %arg7[%c0_10, %c0_11] : memref<16x64xf32, #tpu.memory_space<vmem>>, vector<16x64xf32>
      %c0_12 = arith.constant 0 : index
      %c0_13 = arith.constant 0 : index
      %15 = vector.load %arg5[%c0_12, %c0_13] : memref<1x64xf32, #tpu.memory_space<vmem>>, vector<1x64xf32>
      %16 = vector.broadcast %15 : vector<1x64xf32> to vector<16x64xf32>
      %17 = arith.addf %14, %16 : vector<16x64xf32>
      %c0_14 = arith.constant 0 : index
      %c0_15 = arith.constant 0 : index
      %18 = vector.load %arg6[%c0_14, %c0_15] : memref<16x64xf32, #tpu.memory_space<vmem>>, vector<16x64xf32>
      tpu.vector_store %arg6[%c0_14, %c0_15], %17 {strides = array<i32>} : memref<16x64xf32, #tpu.memory_space<vmem>>, vector<16x64xf32>,
    } else {
    }
    return
  }
  func.func @transform_0(%arg0: i32, %arg1: i32, %arg2: i32) -> (i32, i32) {
    %c0_i32 = arith.constant 0 : i32
    return %arg0, %arg2 : i32, i32
  }
  func.func @transform_1(%arg0: i32, %arg1: i32, %arg2: i32) -> (i32, i32) {
    %c0_i32 = arith.constant 0 : i32
    return %arg2, %arg1 : i32, i32
  }
  func.func @transform_2(%arg0: i32, %arg1: i32, %arg2: i32) -> (i32, i32) {
    %c0_i32 = arith.constant 0 : i32
    %c0_i32_0 = arith.constant 0 : i32
    return %c0_i32, %arg1 : i32, i32
  }
  func.func @transform_3(%arg0: i32, %arg1: i32, %arg2: i32) -> (i32, i32) {
    %c0_i32 = arith.constant 0 : i32
    return %arg0, %arg1 : i32, i32
  }
}

module attributes {stable_mosaic.version = 11 : i64} {
  func.func @kernel(%arg0: i32, %arg1: i32, %arg2: i32, %arg3: memref<24x64xf32, #tpu.memory_space<vmem>>, %arg4: memref<64x128xf32, #tpu.memory_space<vmem>>, %arg5: memref<1x64xf32, #tpu.memory_space<vmem>>, %arg6: memref<1x64xf32, #tpu.memory_space<vmem>>, %arg7: memref<24x128xf32, #tpu.memory_space<vmem>>, %arg8: memref<24x128xf32, #tpu.memory_space<vmem>>, %arg9: memref<24x64xbf16, #tpu.memory_space<vmem>>) attributes {dimension_semantics = [#tpu.dimension_semantics<parallel>, #tpu.dimension_semantics<arbitrary>, #tpu.dimension_semantics<arbitrary>], iteration_bounds = array<i64: 2, 3, 1>, scalar_prefetch = 0 : i64, scratch_operands = 2 : i64, tpu.core_type = #tpu.core_type<tc>, window_params = [{transform_indices = @transform_0, window_bounds = array<i64: 24, 64>}, {transform_indices = @transform_1, window_bounds = array<i64: 64, 128>}, {pipeline_mode = #tpu.pipeline_mode<synchronous>, transform_indices = @transform_2, window_bounds = array<i64: 1, 64>}, {pipeline_mode = #tpu.pipeline_mode<synchronous>, transform_indices = @transform_3, window_bounds = array<i64: 1, 64>}, {transform_indices = @transform_4, window_bounds = array<i64: 24, 128>}]} {
    %c0_i32 = arith.constant 0 : i32
    %0 = arith.cmpi eq, %arg2, %c0_i32 : i32
    %1 = arith.extui %0 : i1 to i32
    %c0_i32_0 = arith.constant 0 : i32
    %2 = arith.cmpi ne, %1, %c0_i32_0 : i32
    scf.if %2 {
      %cst_12 = arith.constant 0.000000e+00 : f32
      %16 = vector.broadcast %cst_12 : f32 to vector<24x128xf32>
      %c0_13 = arith.constant 0 : index
      %c0_14 = arith.constant 0 : index
      %17 = vector.load %arg8[%c0_13, %c0_14] : memref<24x128xf32, #tpu.memory_space<vmem>>, vector<24x128xf32>
      tpu.vector_store %arg8[%c0_13, %c0_14], %16 {strides = array<i32>} : memref<24x128xf32, #tpu.memory_space<vmem>>, vector<24x128xf32>,
    } else {
    }
    %c0_i32_1 = arith.constant 0 : i32
    %3 = arith.cmpi eq, %arg1, %c0_i32_1 : i32
    %4 = arith.extui %3 : i1 to i32
    %c0_i32_2 = arith.constant 0 : i32
    %5 = arith.cmpi ne, %4, %c0_i32_2 : i32
    scf.if %5 {
      %c0_12 = arith.constant 0 : index
      %c0_13 = arith.constant 0 : index
      %16 = vector.load %arg3[%c0_12, %c0_13] : memref<24x64xf32, #tpu.memory_space<vmem>>, vector<24x64xf32>
      %cst_14 = arith.constant dense<0.000000e+00> : vector<24xf32>
      %17 = vector.multi_reduction <add>, %16, %cst_14 [1] : vector<24x64xf32> to vector<24xf32>
      %18 = vector.shape_cast %17 : vector<24xf32> to vector<24x1xf32>
      %cst_15 = arith.constant 6.400000e+01 : f32
      %19 = vector.broadcast %cst_15 : f32 to vector<24x1xf32>
      %20 = arith.divf %18, %19 : vector<24x1xf32>
      %21 = vector.broadcast %20 : vector<24x1xf32> to vector<24x64xf32>
      %22 = arith.subf %16, %21 : vector<24x64xf32>
      %23 = arith.mulf %22, %22 : vector<24x64xf32>
      %cst_16 = arith.constant dense<0.000000e+00> : vector<24xf32>
      %24 = vector.multi_reduction <add>, %23, %cst_16 [1] : vector<24x64xf32> to vector<24xf32>
      %25 = vector.shape_cast %24 : vector<24xf32> to vector<24x1xf32>
      %cst_17 = arith.constant 6.400000e+01 : f32
      %26 = vector.broadcast %cst_17 : f32 to vector<24x1xf32>
      %27 = arith.divf %25, %26 : vector<24x1xf32>
      %28 = vector.broadcast %20 : vector<24x1xf32> to vector<24x64xf32>
      %29 = arith.subf %16, %28 : vector<24x64xf32>
      %cst_18 = arith.constant 9.99999974E-6 : f32
      %30 = vector.broadcast %cst_18 : f32 to vector<24x1xf32>
      %31 = arith.addf %27, %30 : vector<24x1xf32>
      %32 = math.rsqrt %31 : vector<24x1xf32>
      %33 = vector.broadcast %32 : vector<24x1xf32> to vector<24x64xf32>
      %34 = arith.mulf %29, %33 : vector<24x64xf32>
      %c0_19 = arith.constant 0 : index
      %c0_20 = arith.constant 0 : index
      %35 = vector.load %arg5[%c0_19, %c0_20] : memref<1x64xf32, #tpu.memory_space<vmem>>, vector<1x64xf32>
      %36 = vector.broadcast %35 : vector<1x64xf32> to vector<24x64xf32>
      %37 = arith.mulf %34, %36 : vector<24x64xf32>
      %c0_21 = arith.constant 0 : index
      %c0_22 = arith.constant 0 : index
      %38 = vector.load %arg6[%c0_21, %c0_22] : memref<1x64xf32, #tpu.memory_space<vmem>>, vector<1x64xf32>
      %39 = vector.broadcast %38 : vector<1x64xf32> to vector<24x64xf32>
      %40 = arith.addf %37, %39 : vector<24x64xf32>
      %41 = arith.truncf %40 : vector<24x64xf32> to vector<24x64xbf16>
      %c0_23 = arith.constant 0 : index
      %c0_24 = arith.constant 0 : index
      %42 = vector.load %arg9[%c0_23, %c0_24] : memref<24x64xbf16, #tpu.memory_space<vmem>>, vector<24x64xbf16>
      tpu.vector_store %arg9[%c0_23, %c0_24], %41 {strides = array<i32>} : memref<24x64xbf16, #tpu.memory_space<vmem>>, vector<24x64xbf16>,
    } else {
    }
    %c0 = arith.constant 0 : index
    %c0_3 = arith.constant 0 : index
    %6 = vector.load %arg9[%c0, %c0_3] : memref<24x64xbf16, #tpu.memory_space<vmem>>, vector<24x64xbf16>
    %c0_4 = arith.constant 0 : index
    %c0_5 = arith.constant 0 : index
    %7 = vector.load %arg8[%c0_4, %c0_5] : memref<24x128xf32, #tpu.memory_space<vmem>>, vector<24x128xf32>
    %c0_6 = arith.constant 0 : index
    %c0_7 = arith.constant 0 : index
    %8 = vector.load %arg4[%c0_6, %c0_7] : memref<64x128xf32, #tpu.memory_space<vmem>>, vector<64x128xf32>
    %9 = arith.truncf %8 : vector<64x128xf32> to vector<64x128xbf16>
    %cst = arith.constant dense<0.000000e+00> : vector<24x128xf32>
    %10 = tpu.matmul %6, %9, %cst {dimension_numbers = #tpu.dot_dimension_numbers<[1], [0], [0], [1], [0, 0, 1, 1], [], []>} : vector<24x64xbf16>, vector<64x128xbf16>, vector<24x128xf32> -> vector<24x128xf32>
    %11 = arith.addf %7, %10 : vector<24x128xf32>
    %c0_8 = arith.constant 0 : index
    %c0_9 = arith.constant 0 : index
    %12 = vector.load %arg8[%c0_8, %c0_9] : memref<24x128xf32, #tpu.memory_space<vmem>>, vector<24x128xf32>
    tpu.vector_store %arg8[%c0_8, %c0_9], %11 {strides = array<i32>} : memref<24x128xf32, #tpu.memory_space<vmem>>, vector<24x128xf32>,
    %c0_i32_10 = arith.constant 0 : i32
    %13 = arith.cmpi eq, %arg2, %c0_i32_10 : i32
    %14 = arith.extui %13 : i1 to i32
    %c0_i32_11 = arith.constant 0 : i32
    %15 = arith.cmpi ne, %14, %c0_i32_11 : i32
    scf.if %15 {
      %c0_12 = arith.constant 0 : index
      %c0_13 = arith.constant 0 : index
      %16 = vector.load %arg8[%c0_12, %c0_13] : memref<24x128xf32, #tpu.memory_space<vmem>>, vector<24x128xf32>
      %c0_14 = arith.constant 0 : index
      %c0_15 = arith.constant 0 : index
      %17 = vector.load %arg7[%c0_14, %c0_15] : memref<24x128xf32, #tpu.memory_space<vmem>>, vector<24x128xf32>
      tpu.vector_store %arg7[%c0_14, %c0_15], %16 {strides = array<i32>} : memref<24x128xf32, #tpu.memory_space<vmem>>, vector<24x128xf32>,
    } else {
    }
    return
  }
  func.func @transform_0(%arg0: i32, %arg1: i32, %arg2: i32) -> (i32, i32) {
    %c0_i32 = arith.constant 0 : i32
    return %arg0, %arg2 : i32, i32
  }
  func.func @transform_1(%arg0: i32, %arg1: i32, %arg2: i32) -> (i32, i32) {
    %c0_i32 = arith.constant 0 : i32
    return %arg2, %arg1 : i32, i32
  }
  func.func @transform_2(%arg0: i32, %arg1: i32, %arg2: i32) -> (i32, i32) {
    %c0_i32 = arith.constant 0 : i32
    %c0_i32_0 = arith.constant 0 : i32
    %c0_i32_1 = arith.constant 0 : i32
    return %c0_i32, %c0_i32_0 : i32, i32
  }
  func.func @transform_3(%arg0: i32, %arg1: i32, %arg2: i32) -> (i32, i32) {
    %c0_i32 = arith.constant 0 : i32
    %c0_i32_0 = arith.constant 0 : i32
    %c0_i32_1 = arith.constant 0 : i32
    return %c0_i32, %c0_i32_0 : i32, i32
  }
  func.func @transform_4(%arg0: i32, %arg1: i32, %arg2: i32) -> (i32, i32) {
    %c0_i32 = arith.constant 0 : i32
    return %arg0, %arg1 : i32, i32
  }
}

module attributes {stable_mosaic.version = 11 : i64} {
  func.func @_reattn_kernel(%arg0: i32, %arg1: i32, %arg2: memref<1x4x24x32xf32, #tpu.memory_space<vmem>>, %arg3: memref<1x4x24x32xf32, #tpu.memory_space<vmem>>, %arg4: memref<1x4x24x32xf32, #tpu.memory_space<vmem>>, %arg5: memref<4x4xf32, #tpu.memory_space<smem>>, %arg6: memref<4xf32, #tpu.memory_space<smem>>, %arg7: memref<4xf32, #tpu.memory_space<smem>>, %arg8: memref<4x32x64xf32, #tpu.memory_space<vmem>>, %arg9: memref<1x64xf32, #tpu.memory_space<vmem>>, %arg10: memref<1x24x64xf32, #tpu.memory_space<vmem>>, %arg11: memref<1x24x64xf32, #tpu.memory_space<vmem>>) attributes {dimension_semantics = [#tpu.dimension_semantics<parallel>, #tpu.dimension_semantics<parallel>], iteration_bounds = array<i64: 2, 1>, scalar_prefetch = 0 : i64, scratch_operands = 0 : i64, tpu.core_type = #tpu.core_type<tc>, window_params = [{transform_indices = @transform_0, window_bounds = array<i64: 1, 4, 24, 32>}, {transform_indices = @transform_1, window_bounds = array<i64: 1, 4, 24, 32>}, {transform_indices = @transform_2, window_bounds = array<i64: 1, 4, 24, 32>}, {transform_indices = @transform_3, window_bounds = array<i64: 4, 4>}, {transform_indices = @transform_4, window_bounds = array<i64: 4>}, {transform_indices = @transform_5, window_bounds = array<i64: 4>}, {pipeline_mode = #tpu.pipeline_mode<synchronous>, transform_indices = @transform_6, window_bounds = array<i64: 4, 32, 64>}, {pipeline_mode = #tpu.pipeline_mode<synchronous>, transform_indices = @transform_7, window_bounds = array<i64: 1, 64>}, {transform_indices = @transform_8, window_bounds = array<i64: 1, 24, 64>}, {transform_indices = @transform_9, window_bounds = array<i64: 1, 24, 64>}]} {
    %c0 = arith.constant 0 : index
    %c0_0 = arith.constant 0 : index
    %c0_1 = arith.constant 0 : index
    %c0_2 = arith.constant 0 : index
    %0 = vector.load %arg2[%c0, %c0_0, %c0_1, %c0_2] : memref<1x4x24x32xf32, #tpu.memory_space<vmem>>, vector<1x4x24x32xf32>
    %1 = vector.shape_cast %0 : vector<1x4x24x32xf32> to vector<4x24x32xf32>
    %2 = arith.truncf %1 : vector<4x24x32xf32> to vector<4x24x32xbf16>
    %c0_3 = arith.constant 0 : index
    %c0_4 = arith.constant 0 : index
    %c0_5 = arith.constant 0 : index
    %c0_6 = arith.constant 0 : index
    %3 = vector.load %arg3[%c0_3, %c0_4, %c0_5, %c0_6] : memref<1x4x24x32xf32, #tpu.memory_space<vmem>>, vector<1x4x24x32xf32>
    %4 = vector.shape_cast %3 : vector<1x4x24x32xf32> to vector<4x24x32xf32>
    %5 = arith.truncf %4 : vector<4x24x32xf32> to vector<4x24x32xbf16>
    %c0_7 = arith.constant 0 : index
    %c0_8 = arith.constant 0 : index
    %c0_9 = arith.constant 0 : index
    %c0_10 = arith.constant 0 : index
    %6 = vector.load %arg4[%c0_7, %c0_8, %c0_9, %c0_10] : memref<1x4x24x32xf32, #tpu.memory_space<vmem>>, vector<1x4x24x32xf32>
    %7 = vector.shape_cast %6 : vector<1x4x24x32xf32> to vector<4x24x32xf32>
    "tpu.trace_start"() <{level = 10 : i32, message = "hqd,hkd->hqk"}> : () -> ()
    %cst = arith.constant dense<0.000000e+00> : vector<4x24x24xf32>
    %8 = tpu.matmul %2, %5, %cst {dimension_numbers = #tpu.dot_dimension_numbers<[2], [2], [1], [1], [0, 0, 0, 1, 1, 1], [0], [0]>} : vector<4x24x32xbf16>, vector<4x24x32xbf16>, vector<4x24x24xf32> -> vector<4x24x24xf32>
    "tpu.trace_stop"() : () -> ()
    %c24_i32 = arith.constant 24 : i32
    %9 = arith.muli %arg1, %c24_i32 : i32
    %10 = tpu.iota {dimensions = array<i32: 0>} : vector<24x24xi32>
    %11 = vector.broadcast %9 : i32 to vector<24x24xi32>
    %12 = arith.addi %10, %11 : vector<24x24xi32>
    %13 = tpu.iota {dimensions = array<i32: 1>} : vector<24x24xi32>
    %14 = arith.cmpi eq, %13, %12 : vector<24x24xi32>
    %c17_i32 = arith.constant 17 : i32
    %15 = vector.broadcast %c17_i32 : i32 to vector<24x24xi32>
    %16 = arith.cmpi sge, %13, %15 : vector<24x24xi32>
    %17 = arith.ori %14, %16 : vector<24x24xi1>
    %18 = vector.shape_cast %17 : vector<24x24xi1> to vector<1x24x24xi1>
    %cst_11 = arith.constant -1.000000e+30 : f32
    %19 = vector.shape_cast %18 : vector<1x24x24xi1> to vector<1x24x24xi1>
    %20 = vector.broadcast %19 : vector<1x24x24xi1> to vector<4x24x24xi1>
    %21 = vector.broadcast %cst_11 : f32 to vector<4x24x24xf32>
    %22 = arith.select %20, %21, %8 : vector<4x24x24xi1>, vector<4x24x24xf32>
    %cst_12 = arith.constant dense<0xFF800000> : vector<4x24xf32>
    %23 = vector.multi_reduction <maximumf>, %22, %cst_12 [2] : vector<4x24x24xf32> to vector<4x24xf32>
    %24 = vector.shape_cast %23 : vector<4x24xf32> to vector<4x24x1xf32>
    %25 = vector.broadcast %24 : vector<4x24x1xf32> to vector<4x24x24xf32>
    %26 = arith.subf %22, %25 : vector<4x24x24xf32>
    %27 = math.exp %26 : vector<4x24x24xf32>
    %cst_13 = arith.constant dense<0.000000e+00> : vector<4x24xf32>
    %28 = vector.multi_reduction <add>, %27, %cst_13 [2] : vector<4x24x24xf32> to vector<4x24xf32>
    %29 = vector.shape_cast %28 : vector<4x24xf32> to vector<4x24x1xf32>
    %30 = tpu.reciprocal %29 {approx = true} : vector<4x24x1xf32> -> vector<4x24x1xf32>
    %31 = vector.broadcast %30 : vector<4x24x1xf32> to vector<4x24x24xf32>
    %32 = arith.mulf %27, %31 : vector<4x24x24xf32>
    %33 = vector.extract_strided_slice %32 {offsets = [0, 0, 0], sizes = [1, 24, 24], strides = [1, 1, 1]} : vector<4x24x24xf32> to vector<1x24x24xf32>
    %34 = vector.shape_cast %33 : vector<1x24x24xf32> to vector<24x24xf32>
    %c0_14 = arith.constant 0 : index
    %c0_15 = arith.constant 0 : index
    %35 = memref.load %arg5[%c0_14, %c0_15] : memref<4x4xf32, #tpu.memory_space<smem>>
    %36 = vector.broadcast %35 : f32 to vector<24x24xf32>
    %37 = arith.mulf %34, %36 : vector<24x24xf32>
    %38 = vector.extract_strided_slice %32 {offsets = [1, 0, 0], sizes = [1, 24, 24], strides = [1, 1, 1]} : vector<4x24x24xf32> to vector<1x24x24xf32>
    %39 = vector.shape_cast %38 : vector<1x24x24xf32> to vector<24x24xf32>
    %c1 = arith.constant 1 : index
    %c0_16 = arith.constant 0 : index
    %40 = memref.load %arg5[%c1, %c0_16] : memref<4x4xf32, #tpu.memory_space<smem>>
    %41 = vector.broadcast %40 : f32 to vector<24x24xf32>
    %42 = arith.mulf %39, %41 : vector<24x24xf32>
    %43 = arith.addf %37, %42 : vector<24x24xf32>
    %44 = vector.extract_strided_slice %32 {offsets = [2, 0, 0], sizes = [1, 24, 24], strides = [1, 1, 1]} : vector<4x24x24xf32> to vector<1x24x24xf32>
    %45 = vector.shape_cast %44 : vector<1x24x24xf32> to vector<24x24xf32>
    %c2 = arith.constant 2 : index
    %c0_17 = arith.constant 0 : index
    %46 = memref.load %arg5[%c2, %c0_17] : memref<4x4xf32, #tpu.memory_space<smem>>
    %47 = vector.broadcast %46 : f32 to vector<24x24xf32>
    %48 = arith.mulf %45, %47 : vector<24x24xf32>
    %49 = arith.addf %43, %48 : vector<24x24xf32>
    %50 = vector.extract_strided_slice %32 {offsets = [3, 0, 0], sizes = [1, 24, 24], strides = [1, 1, 1]} : vector<4x24x24xf32> to vector<1x24x24xf32>
    %51 = vector.shape_cast %50 : vector<1x24x24xf32> to vector<24x24xf32>
    %c3 = arith.constant 3 : index
    %c0_18 = arith.constant 0 : index
    %52 = memref.load %arg5[%c3, %c0_18] : memref<4x4xf32, #tpu.memory_space<smem>>
    %53 = vector.broadcast %52 : f32 to vector<24x24xf32>
    %54 = arith.mulf %51, %53 : vector<24x24xf32>
    %55 = arith.addf %49, %54 : vector<24x24xf32>
    %56 = vector.extract_strided_slice %32 {offsets = [0, 0, 0], sizes = [1, 24, 24], strides = [1, 1, 1]} : vector<4x24x24xf32> to vector<1x24x24xf32>
    %57 = vector.shape_cast %56 : vector<1x24x24xf32> to vector<24x24xf32>
    %c0_19 = arith.constant 0 : index
    %c1_20 = arith.constant 1 : index
    %58 = memref.load %arg5[%c0_19, %c1_20] : memref<4x4xf32, #tpu.memory_space<smem>>
    %59 = vector.broadcast %58 : f32 to vector<24x24xf32>
    %60 = arith.mulf %57, %59 : vector<24x24xf32>
    %61 = vector.extract_strided_slice %32 {offsets = [1, 0, 0], sizes = [1, 24, 24], strides = [1, 1, 1]} : vector<4x24x24xf32> to vector<1x24x24xf32>
    %62 = vector.shape_cast %61 : vector<1x24x24xf32> to vector<24x24xf32>
    %c1_21 = arith.constant 1 : index
    %c1_22 = arith.constant 1 : index
    %63 = memref.load %arg5[%c1_21, %c1_22] : memref<4x4xf32, #tpu.memory_space<smem>>
    %64 = vector.broadcast %63 : f32 to vector<24x24xf32>
    %65 = arith.mulf %62, %64 : vector<24x24xf32>
    %66 = arith.addf %60, %65 : vector<24x24xf32>
    %67 = vector.extract_strided_slice %32 {offsets = [2, 0, 0], sizes = [1, 24, 24], strides = [1, 1, 1]} : vector<4x24x24xf32> to vector<1x24x24xf32>
    %68 = vector.shape_cast %67 : vector<1x24x24xf32> to vector<24x24xf32>
    %c2_23 = arith.constant 2 : index
    %c1_24 = arith.constant 1 : index
    %69 = memref.load %arg5[%c2_23, %c1_24] : memref<4x4xf32, #tpu.memory_space<smem>>
    %70 = vector.broadcast %69 : f32 to vector<24x24xf32>
    %71 = arith.mulf %68, %70 : vector<24x24xf32>
    %72 = arith.addf %66, %71 : vector<24x24xf32>
    %73 = vector.extract_strided_slice %32 {offsets = [3, 0, 0], sizes = [1, 24, 24], strides = [1, 1, 1]} : vector<4x24x24xf32> to vector<1x24x24xf32>
    %74 = vector.shape_cast %73 : vector<1x24x24xf32> to vector<24x24xf32>
    %c3_25 = arith.constant 3 : index
    %c1_26 = arith.constant 1 : index
    %75 = memref.load %arg5[%c3_25, %c1_26] : memref<4x4xf32, #tpu.memory_space<smem>>
    %76 = vector.broadcast %75 : f32 to vector<24x24xf32>
    %77 = arith.mulf %74, %76 : vector<24x24xf32>
    %78 = arith.addf %72, %77 : vector<24x24xf32>
    %79 = vector.extract_strided_slice %32 {offsets = [0, 0, 0], sizes = [1, 24, 24], strides = [1, 1, 1]} : vector<4x24x24xf32> to vector<1x24x24xf32>
    %80 = vector.shape_cast %79 : vector<1x24x24xf32> to vector<24x24xf32>
    %c0_27 = arith.constant 0 : index
    %c2_28 = arith.constant 2 : index
    %81 = memref.load %arg5[%c0_27, %c2_28] : memref<4x4xf32, #tpu.memory_space<smem>>
    %82 = vector.broadcast %81 : f32 to vector<24x24xf32>
    %83 = arith.mulf %80, %82 : vector<24x24xf32>
    %84 = vector.extract_strided_slice %32 {offsets = [1, 0, 0], sizes = [1, 24, 24], strides = [1, 1, 1]} : vector<4x24x24xf32> to vector<1x24x24xf32>
    %85 = vector.shape_cast %84 : vector<1x24x24xf32> to vector<24x24xf32>
    %c1_29 = arith.constant 1 : index
    %c2_30 = arith.constant 2 : index
    %86 = memref.load %arg5[%c1_29, %c2_30] : memref<4x4xf32, #tpu.memory_space<smem>>
    %87 = vector.broadcast %86 : f32 to vector<24x24xf32>
    %88 = arith.mulf %85, %87 : vector<24x24xf32>
    %89 = arith.addf %83, %88 : vector<24x24xf32>
    %90 = vector.extract_strided_slice %32 {offsets = [2, 0, 0], sizes = [1, 24, 24], strides = [1, 1, 1]} : vector<4x24x24xf32> to vector<1x24x24xf32>
    %91 = vector.shape_cast %90 : vector<1x24x24xf32> to vector<24x24xf32>
    %c2_31 = arith.constant 2 : index
    %c2_32 = arith.constant 2 : index
    %92 = memref.load %arg5[%c2_31, %c2_32] : memref<4x4xf32, #tpu.memory_space<smem>>
    %93 = vector.broadcast %92 : f32 to vector<24x24xf32>
    %94 = arith.mulf %91, %93 : vector<24x24xf32>
    %95 = arith.addf %89, %94 : vector<24x24xf32>
    %96 = vector.extract_strided_slice %32 {offsets = [3, 0, 0], sizes = [1, 24, 24], strides = [1, 1, 1]} : vector<4x24x24xf32> to vector<1x24x24xf32>
    %97 = vector.shape_cast %96 : vector<1x24x24xf32> to vector<24x24xf32>
    %c3_33 = arith.constant 3 : index
    %c2_34 = arith.constant 2 : index
    %98 = memref.load %arg5[%c3_33, %c2_34] : memref<4x4xf32, #tpu.memory_space<smem>>
    %99 = vector.broadcast %98 : f32 to vector<24x24xf32>
    %100 = arith.mulf %97, %99 : vector<24x24xf32>
    %101 = arith.addf %95, %100 : vector<24x24xf32>
    %102 = vector.extract_strided_slice %32 {offsets = [0, 0, 0], sizes = [1, 24, 24], strides = [1, 1, 1]} : vector<4x24x24xf32> to vector<1x24x24xf32>
    %103 = vector.shape_cast %102 : vector<1x24x24xf32> to vector<24x24xf32>
    %c0_35 = arith.constant 0 : index
    %c3_36 = arith.constant 3 : index
    %104 = memref.load %arg5[%c0_35, %c3_36] : memref<4x4xf32, #tpu.memory_space<smem>>
    %105 = vector.broadcast %104 : f32 to vector<24x24xf32>
    %106 = arith.mulf %103, %105 : vector<24x24xf32>
    %107 = vector.extract_strided_slice %32 {offsets = [1, 0, 0], sizes = [1, 24, 24], strides = [1, 1, 1]} : vector<4x24x24xf32> to vector<1x24x24xf32>
    %108 = vector.shape_cast %107 : vector<1x24x24xf32> to vector<24x24xf32>
    %c1_37 = arith.constant 1 : index
    %c3_38 = arith.constant 3 : index
    %109 = memref.load %arg5[%c1_37, %c3_38] : memref<4x4xf32, #tpu.memory_space<smem>>
    %110 = vector.broadcast %109 : f32 to vector<24x24xf32>
    %111 = arith.mulf %108, %110 : vector<24x24xf32>
    %112 = arith.addf %106, %111 : vector<24x24xf32>
    %113 = vector.extract_strided_slice %32 {offsets = [2, 0, 0], sizes = [1, 24, 24], strides = [1, 1, 1]} : vector<4x24x24xf32> to vector<1x24x24xf32>
    %114 = vector.shape_cast %113 : vector<1x24x24xf32> to vector<24x24xf32>
    %c2_39 = arith.constant 2 : index
    %c3_40 = arith.constant 3 : index
    %115 = memref.load %arg5[%c2_39, %c3_40] : memref<4x4xf32, #tpu.memory_space<smem>>
    %116 = vector.broadcast %115 : f32 to vector<24x24xf32>
    %117 = arith.mulf %114, %116 : vector<24x24xf32>
    %118 = arith.addf %112, %117 : vector<24x24xf32>
    %119 = vector.extract_strided_slice %32 {offsets = [3, 0, 0], sizes = [1, 24, 24], strides = [1, 1, 1]} : vector<4x24x24xf32> to vector<1x24x24xf32>
    %120 = vector.shape_cast %119 : vector<1x24x24xf32> to vector<24x24xf32>
    %c3_41 = arith.constant 3 : index
    %c3_42 = arith.constant 3 : index
    %121 = memref.load %arg5[%c3_41, %c3_42] : memref<4x4xf32, #tpu.memory_space<smem>>
    %122 = vector.broadcast %121 : f32 to vector<24x24xf32>
    %123 = arith.mulf %120, %122 : vector<24x24xf32>
    %124 = arith.addf %118, %123 : vector<24x24xf32>
    %125 = arith.addf %55, %78 : vector<24x24xf32>
    %126 = arith.addf %125, %101 : vector<24x24xf32>
    %127 = arith.addf %126, %124 : vector<24x24xf32>
    %cst_43 = arith.constant 2.500000e-01 : f32
    %128 = vector.broadcast %cst_43 : f32 to vector<24x24xf32>
    %129 = arith.mulf %127, %128 : vector<24x24xf32>
    %130 = arith.subf %55, %129 : vector<24x24xf32>
    %131 = arith.mulf %130, %130 : vector<24x24xf32>
    %132 = arith.subf %78, %129 : vector<24x24xf32>
    %133 = arith.mulf %132, %132 : vector<24x24xf32>
    %134 = arith.addf %131, %133 : vector<24x24xf32>
    %135 = arith.subf %101, %129 : vector<24x24xf32>
    %136 = arith.mulf %135, %135 : vector<24x24xf32>
    %137 = arith.addf %134, %136 : vector<24x24xf32>
    %138 = arith.subf %124, %129 : vector<24x24xf32>
    %139 = arith.mulf %138, %138 : vector<24x24xf32>
    %140 = arith.addf %137, %139 : vector<24x24xf32>
    %cst_44 = arith.constant 2.500000e-01 : f32
    %141 = vector.broadcast %cst_44 : f32 to vector<24x24xf32>
    %142 = arith.mulf %140, %141 : vector<24x24xf32>
    %cst_45 = arith.constant 9.99999974E-6 : f32
    %143 = vector.broadcast %cst_45 : f32 to vector<24x24xf32>
    %144 = arith.addf %142, %143 : vector<24x24xf32>
    %145 = math.rsqrt %144 : vector<24x24xf32>
    %146 = tpu.iota {dimensions = array<i32: 0>} : vector<24x32xi32>
    %c17_i32_46 = arith.constant 17 : i32
    %147 = vector.broadcast %c17_i32_46 : i32 to vector<24x32xi32>
    %148 = arith.cmpi slt, %146, %147 : vector<24x32xi32>
    %149 = vector.shape_cast %148 : vector<24x32xi1> to vector<1x24x32xi1>
    %cst_47 = arith.constant 0.000000e+00 : f32
    %150 = vector.shape_cast %149 : vector<1x24x32xi1> to vector<1x24x32xi1>
    %151 = vector.broadcast %150 : vector<1x24x32xi1> to vector<4x24x32xi1>
    %152 = vector.broadcast %cst_47 : f32 to vector<4x24x32xf32>
    %153 = arith.select %151, %7, %152 : vector<4x24x32xi1>, vector<4x24x32xf32>
    %c0_48 = arith.constant 0 : index
    %c0_49 = arith.constant 0 : index
    %154 = vector.load %arg9[%c0_48, %c0_49] : memref<1x64xf32, #tpu.memory_space<vmem>>, vector<1x64xf32>
    %c0_50 = arith.constant 0 : index
    %c0_51 = arith.constant 0 : index
    %c0_52 = arith.constant 0 : index
    %155 = vector.load %arg10[%c0_50, %c0_51, %c0_52] : memref<1x24x64xf32, #tpu.memory_space<vmem>>, vector<1x24x64xf32>
    %156 = vector.shape_cast %155 : vector<1x24x64xf32> to vector<24x64xf32>
    %cst_53 = arith.constant 2.000000e+00 : f32
    %157 = vector.broadcast %cst_53 : f32 to vector<24x64xf32>
    %158 = arith.mulf %157, %156 : vector<24x64xf32>
    %159 = vector.broadcast %154 : vector<1x64xf32> to vector<24x64xf32>
    %160 = arith.addf %159, %158 : vector<24x64xf32>
    %161 = arith.subf %55, %129 : vector<24x24xf32>
    %162 = arith.mulf %161, %145 : vector<24x24xf32>
    %c0_54 = arith.constant 0 : index
    %163 = memref.load %arg6[%c0_54] : memref<4xf32, #tpu.memory_space<smem>>
    %164 = vector.broadcast %163 : f32 to vector<24x24xf32>
    %165 = arith.mulf %162, %164 : vector<24x24xf32>
    %c0_55 = arith.constant 0 : index
    %166 = memref.load %arg7[%c0_55] : memref<4xf32, #tpu.memory_space<smem>>
    %167 = vector.broadcast %166 : f32 to vector<24x24xf32>
    %168 = arith.addf %165, %167 : vector<24x24xf32>
    %169 = arith.truncf %168 : vector<24x24xf32> to vector<24x24xbf16>
    %170 = vector.extract_strided_slice %153 {offsets = [0, 0, 0], sizes = [1, 24, 32], strides = [1, 1, 1]} : vector<4x24x32xf32> to vector<1x24x32xf32>
    %171 = vector.shape_cast %170 : vector<1x24x32xf32> to vector<24x32xf32>
    %172 = arith.truncf %171 : vector<24x32xf32> to vector<24x32xbf16>
    %cst_56 = arith.constant dense<0.000000e+00> : vector<24x32xf32>
    %173 = tpu.matmul %169, %172, %cst_56 {dimension_numbers = #tpu.dot_dimension_numbers<[1], [0], [0], [1], [0, 0, 1, 1], [], []>} : vector<24x24xbf16>, vector<24x32xbf16>, vector<24x32xf32> -> vector<24x32xf32>
    %174 = arith.truncf %173 : vector<24x32xf32> to vector<24x32xbf16>
    %c0_57 = arith.constant 0 : index
    %c0_58 = arith.constant 0 : index
    %c0_59 = arith.constant 0 : index
    %175 = vector.load %arg8[%c0_57, %c0_58, %c0_59] : memref<4x32x64xf32, #tpu.memory_space<vmem>>, vector<1x32x64xf32>
    %176 = vector.shape_cast %175 : vector<1x32x64xf32> to vector<32x64xf32>
    %177 = arith.truncf %176 : vector<32x64xf32> to vector<32x64xbf16>
    %cst_60 = arith.constant dense<0.000000e+00> : vector<24x64xf32>
    %178 = tpu.matmul %174, %177, %cst_60 {dimension_numbers = #tpu.dot_dimension_numbers<[1], [0], [0], [1], [0, 0, 1, 1], [], []>} : vector<24x32xbf16>, vector<32x64xbf16>, vector<24x64xf32> -> vector<24x64xf32>
    %179 = arith.addf %160, %178 : vector<24x64xf32>
    %180 = arith.subf %78, %129 : vector<24x24xf32>
    %181 = arith.mulf %180, %145 : vector<24x24xf32>
    %c1_61 = arith.constant 1 : index
    %182 = memref.load %arg6[%c1_61] : memref<4xf32, #tpu.memory_space<smem>>
    %183 = vector.broadcast %182 : f32 to vector<24x24xf32>
    %184 = arith.mulf %181, %183 : vector<24x24xf32>
    %c1_62 = arith.constant 1 : index
    %185 = memref.load %arg7[%c1_62] : memref<4xf32, #tpu.memory_space<smem>>
    %186 = vector.broadcast %185 : f32 to vector<24x24xf32>
    %187 = arith.addf %184, %186 : vector<24x24xf32>
    %188 = arith.truncf %187 : vector<24x24xf32> to vector<24x24xbf16>
    %189 = vector.extract_strided_slice %153 {offsets = [1, 0, 0], sizes = [1, 24, 32], strides = [1, 1, 1]} : vector<4x24x32xf32> to vector<1x24x32xf32>
    %190 = vector.shape_cast %189 : vector<1x24x32xf32> to vector<24x32xf32>
    %191 = arith.truncf %190 : vector<24x32xf32> to vector<24x32xbf16>
    %cst_63 = arith.constant dense<0.000000e+00> : vector<24x32xf32>
    %192 = tpu.matmul %188, %191, %cst_63 {dimension_numbers = #tpu.dot_dimension_numbers<[1], [0], [0], [1], [0, 0, 1, 1], [], []>} : vector<24x24xbf16>, vector<24x32xbf16>, vector<24x32xf32> -> vector<24x32xf32>
    %193 = arith.truncf %192 : vector<24x32xf32> to vector<24x32xbf16>
    %c1_64 = arith.constant 1 : index
    %c0_65 = arith.constant 0 : index
    %c0_66 = arith.constant 0 : index
    %194 = vector.load %arg8[%c1_64, %c0_65, %c0_66] : memref<4x32x64xf32, #tpu.memory_space<vmem>>, vector<1x32x64xf32>
    %195 = vector.shape_cast %194 : vector<1x32x64xf32> to vector<32x64xf32>
    %196 = arith.truncf %195 : vector<32x64xf32> to vector<32x64xbf16>
    %cst_67 = arith.constant dense<0.000000e+00> : vector<24x64xf32>
    %197 = tpu.matmul %193, %196, %cst_67 {dimension_numbers = #tpu.dot_dimension_numbers<[1], [0], [0], [1], [0, 0, 1, 1], [], []>} : vector<24x32xbf16>, vector<32x64xbf16>, vector<24x64xf32> -> vector<24x64xf32>
    %198 = arith.addf %179, %197 : vector<24x64xf32>
    %199 = arith.subf %101, %129 : vector<24x24xf32>
    %200 = arith.mulf %199, %145 : vector<24x24xf32>
    %c2_68 = arith.constant 2 : index
    %201 = memref.load %arg6[%c2_68] : memref<4xf32, #tpu.memory_space<smem>>
    %202 = vector.broadcast %201 : f32 to vector<24x24xf32>
    %203 = arith.mulf %200, %202 : vector<24x24xf32>
    %c2_69 = arith.constant 2 : index
    %204 = memref.load %arg7[%c2_69] : memref<4xf32, #tpu.memory_space<smem>>
    %205 = vector.broadcast %204 : f32 to vector<24x24xf32>
    %206 = arith.addf %203, %205 : vector<24x24xf32>
    %207 = arith.truncf %206 : vector<24x24xf32> to vector<24x24xbf16>
    %208 = vector.extract_strided_slice %153 {offsets = [2, 0, 0], sizes = [1, 24, 32], strides = [1, 1, 1]} : vector<4x24x32xf32> to vector<1x24x32xf32>
    %209 = vector.shape_cast %208 : vector<1x24x32xf32> to vector<24x32xf32>
    %210 = arith.truncf %209 : vector<24x32xf32> to vector<24x32xbf16>
    %cst_70 = arith.constant dense<0.000000e+00> : vector<24x32xf32>
    %211 = tpu.matmul %207, %210, %cst_70 {dimension_numbers = #tpu.dot_dimension_numbers<[1], [0], [0], [1], [0, 0, 1, 1], [], []>} : vector<24x24xbf16>, vector<24x32xbf16>, vector<24x32xf32> -> vector<24x32xf32>
    %212 = arith.truncf %211 : vector<24x32xf32> to vector<24x32xbf16>
    %c2_71 = arith.constant 2 : index
    %c0_72 = arith.constant 0 : index
    %c0_73 = arith.constant 0 : index
    %213 = vector.load %arg8[%c2_71, %c0_72, %c0_73] : memref<4x32x64xf32, #tpu.memory_space<vmem>>, vector<1x32x64xf32>
    %214 = vector.shape_cast %213 : vector<1x32x64xf32> to vector<32x64xf32>
    %215 = arith.truncf %214 : vector<32x64xf32> to vector<32x64xbf16>
    %cst_74 = arith.constant dense<0.000000e+00> : vector<24x64xf32>
    %216 = tpu.matmul %212, %215, %cst_74 {dimension_numbers = #tpu.dot_dimension_numbers<[1], [0], [0], [1], [0, 0, 1, 1], [], []>} : vector<24x32xbf16>, vector<32x64xbf16>, vector<24x64xf32> -> vector<24x64xf32>
    %217 = arith.addf %198, %216 : vector<24x64xf32>
    %218 = arith.subf %124, %129 : vector<24x24xf32>
    %219 = arith.mulf %218, %145 : vector<24x24xf32>
    %c3_75 = arith.constant 3 : index
    %220 = memref.load %arg6[%c3_75] : memref<4xf32, #tpu.memory_space<smem>>
    %221 = vector.broadcast %220 : f32 to vector<24x24xf32>
    %222 = arith.mulf %219, %221 : vector<24x24xf32>
    %c3_76 = arith.constant 3 : index
    %223 = memref.load %arg7[%c3_76] : memref<4xf32, #tpu.memory_space<smem>>
    %224 = vector.broadcast %223 : f32 to vector<24x24xf32>
    %225 = arith.addf %222, %224 : vector<24x24xf32>
    %226 = arith.truncf %225 : vector<24x24xf32> to vector<24x24xbf16>
    %227 = vector.extract_strided_slice %153 {offsets = [3, 0, 0], sizes = [1, 24, 32], strides = [1, 1, 1]} : vector<4x24x32xf32> to vector<1x24x32xf32>
    %228 = vector.shape_cast %227 : vector<1x24x32xf32> to vector<24x32xf32>
    %229 = arith.truncf %228 : vector<24x32xf32> to vector<24x32xbf16>
    %cst_77 = arith.constant dense<0.000000e+00> : vector<24x32xf32>
    %230 = tpu.matmul %226, %229, %cst_77 {dimension_numbers = #tpu.dot_dimension_numbers<[1], [0], [0], [1], [0, 0, 1, 1], [], []>} : vector<24x24xbf16>, vector<24x32xbf16>, vector<24x32xf32> -> vector<24x32xf32>
    %231 = arith.truncf %230 : vector<24x32xf32> to vector<24x32xbf16>
    %c3_78 = arith.constant 3 : index
    %c0_79 = arith.constant 0 : index
    %c0_80 = arith.constant 0 : index
    %232 = vector.load %arg8[%c3_78, %c0_79, %c0_80] : memref<4x32x64xf32, #tpu.memory_space<vmem>>, vector<1x32x64xf32>
    %233 = vector.shape_cast %232 : vector<1x32x64xf32> to vector<32x64xf32>
    %234 = arith.truncf %233 : vector<32x64xf32> to vector<32x64xbf16>
    %cst_81 = arith.constant dense<0.000000e+00> : vector<24x64xf32>
    %235 = tpu.matmul %231, %234, %cst_81 {dimension_numbers = #tpu.dot_dimension_numbers<[1], [0], [0], [1], [0, 0, 1, 1], [], []>} : vector<24x32xbf16>, vector<32x64xbf16>, vector<24x64xf32> -> vector<24x64xf32>
    %236 = arith.addf %217, %235 : vector<24x64xf32>
    %c0_82 = arith.constant 0 : index
    %c0_83 = arith.constant 0 : index
    %c0_84 = arith.constant 0 : index
    %237 = vector.load %arg11[%c0_82, %c0_83, %c0_84] : memref<1x24x64xf32, #tpu.memory_space<vmem>>, vector<1x24x64xf32>
    %238 = vector.shape_cast %237 : vector<1x24x64xf32> to vector<24x64xf32>
    %239 = vector.shape_cast %236 : vector<24x64xf32> to vector<1x24x64xf32>
    tpu.vector_store %arg11[%c0_82, %c0_83, %c0_84], %239 {strides = array<i32>} : memref<1x24x64xf32, #tpu.memory_space<vmem>>, vector<1x24x64xf32>,
    return
  }
  func.func @transform_0(%arg0: i32, %arg1: i32) -> (i32, i32, i32, i32) {
    %c0_i32 = arith.constant 0 : i32
    %c0_i32_0 = arith.constant 0 : i32
    %c0_i32_1 = arith.constant 0 : i32
    return %arg0, %c0_i32, %arg1, %c0_i32_0 : i32, i32, i32, i32
  }
  func.func @transform_1(%arg0: i32, %arg1: i32) -> (i32, i32, i32, i32) {
    %c0_i32 = arith.constant 0 : i32
    %c0_i32_0 = arith.constant 0 : i32
    %c0_i32_1 = arith.constant 0 : i32
    %c0_i32_2 = arith.constant 0 : i32
    return %arg0, %c0_i32, %c0_i32_0, %c0_i32_1 : i32, i32, i32, i32
  }
  func.func @transform_2(%arg0: i32, %arg1: i32) -> (i32, i32, i32, i32) {
    %c0_i32 = arith.constant 0 : i32
    %c0_i32_0 = arith.constant 0 : i32
    %c0_i32_1 = arith.constant 0 : i32
    %c0_i32_2 = arith.constant 0 : i32
    return %arg0, %c0_i32, %c0_i32_0, %c0_i32_1 : i32, i32, i32, i32
  }
  func.func @transform_3(%arg0: i32, %arg1: i32) -> (i32, i32) {
    %c0_i32 = arith.constant 0 : i32
    %c0_i32_0 = arith.constant 0 : i32
    %c0_i32_1 = arith.constant 0 : i32
    return %c0_i32, %c0_i32_0 : i32, i32
  }
  func.func @transform_4(%arg0: i32, %arg1: i32) -> i32 {
    %c0_i32 = arith.constant 0 : i32
    %c0_i32_0 = arith.constant 0 : i32
    return %c0_i32 : i32
  }
  func.func @transform_5(%arg0: i32, %arg1: i32) -> i32 {
    %c0_i32 = arith.constant 0 : i32
    %c0_i32_0 = arith.constant 0 : i32
    return %c0_i32 : i32
  }
  func.func @transform_6(%arg0: i32, %arg1: i32) -> (i32, i32, i32) {
    %c0_i32 = arith.constant 0 : i32
    %c0_i32_0 = arith.constant 0 : i32
    %c0_i32_1 = arith.constant 0 : i32
    %c0_i32_2 = arith.constant 0 : i32
    return %c0_i32, %c0_i32_0, %c0_i32_1 : i32, i32, i32
  }
  func.func @transform_7(%arg0: i32, %arg1: i32) -> (i32, i32) {
    %c0_i32 = arith.constant 0 : i32
    %c0_i32_0 = arith.constant 0 : i32
    %c0_i32_1 = arith.constant 0 : i32
    return %c0_i32, %c0_i32_0 : i32, i32
  }
  func.func @transform_8(%arg0: i32, %arg1: i32) -> (i32, i32, i32) {
    %c0_i32 = arith.constant 0 : i32
    %c0_i32_0 = arith.constant 0 : i32
    return %arg0, %arg1, %c0_i32 : i32, i32, i32
  }
  func.func @transform_9(%arg0: i32, %arg1: i32) -> (i32, i32, i32) {
    %c0_i32 = arith.constant 0 : i32
    %c0_i32_0 = arith.constant 0 : i32
    return %arg0, %arg1, %c0_i32 : i32, i32, i32
  }
}

module attributes {stable_mosaic.version = 11 : i64} {
  func.func @_mlp_kernel(%arg0: i32, %arg1: memref<24x64xf32, #tpu.memory_space<vmem>>, %arg2: memref<1x64xf32, #tpu.memory_space<vmem>>, %arg3: memref<1x64xf32, #tpu.memory_space<vmem>>, %arg4: memref<64x128xf32, #tpu.memory_space<vmem>>, %arg5: memref<1x128xf32, #tpu.memory_space<vmem>>, %arg6: memref<128x64xf32, #tpu.memory_space<vmem>>, %arg7: memref<1x64xf32, #tpu.memory_space<vmem>>, %arg8: memref<24x64xf32, #tpu.memory_space<vmem>>) attributes {dimension_semantics = [#tpu.dimension_semantics<parallel>], iteration_bounds = array<i64: 2>, scalar_prefetch = 0 : i64, scratch_operands = 0 : i64, tpu.core_type = #tpu.core_type<tc>, window_params = [{transform_indices = @transform_0, window_bounds = array<i64: 24, 64>}, {pipeline_mode = #tpu.pipeline_mode<synchronous>, transform_indices = @transform_1, window_bounds = array<i64: 1, 64>}, {pipeline_mode = #tpu.pipeline_mode<synchronous>, transform_indices = @transform_2, window_bounds = array<i64: 1, 64>}, {pipeline_mode = #tpu.pipeline_mode<synchronous>, transform_indices = @transform_3, window_bounds = array<i64: 64, 128>}, {pipeline_mode = #tpu.pipeline_mode<synchronous>, transform_indices = @transform_4, window_bounds = array<i64: 1, 128>}, {pipeline_mode = #tpu.pipeline_mode<synchronous>, transform_indices = @transform_5, window_bounds = array<i64: 128, 64>}, {pipeline_mode = #tpu.pipeline_mode<synchronous>, transform_indices = @transform_6, window_bounds = array<i64: 1, 64>}, {transform_indices = @transform_7, window_bounds = array<i64: 24, 64>}]} {
    %c0 = arith.constant 0 : index
    %c0_0 = arith.constant 0 : index
    %0 = vector.load %arg1[%c0, %c0_0] : memref<24x64xf32, #tpu.memory_space<vmem>>, vector<24x64xf32>
    %cst = arith.constant dense<0.000000e+00> : vector<24xf32>
    %1 = vector.multi_reduction <add>, %0, %cst [1] : vector<24x64xf32> to vector<24xf32>
    %2 = vector.shape_cast %1 : vector<24xf32> to vector<24x1xf32>
    %cst_1 = arith.constant 6.400000e+01 : f32
    %3 = vector.broadcast %cst_1 : f32 to vector<24x1xf32>
    %4 = arith.divf %2, %3 : vector<24x1xf32>
    %5 = vector.broadcast %4 : vector<24x1xf32> to vector<24x64xf32>
    %6 = arith.subf %0, %5 : vector<24x64xf32>
    %7 = arith.mulf %6, %6 : vector<24x64xf32>
    %cst_2 = arith.constant dense<0.000000e+00> : vector<24xf32>
    %8 = vector.multi_reduction <add>, %7, %cst_2 [1] : vector<24x64xf32> to vector<24xf32>
    %9 = vector.shape_cast %8 : vector<24xf32> to vector<24x1xf32>
    %cst_3 = arith.constant 6.400000e+01 : f32
    %10 = vector.broadcast %cst_3 : f32 to vector<24x1xf32>
    %11 = arith.divf %9, %10 : vector<24x1xf32>
    %12 = vector.broadcast %4 : vector<24x1xf32> to vector<24x64xf32>
    %13 = arith.subf %0, %12 : vector<24x64xf32>
    %cst_4 = arith.constant 9.99999974E-6 : f32
    %14 = vector.broadcast %cst_4 : f32 to vector<24x1xf32>
    %15 = arith.addf %11, %14 : vector<24x1xf32>
    %16 = math.rsqrt %15 : vector<24x1xf32>
    %17 = vector.broadcast %16 : vector<24x1xf32> to vector<24x64xf32>
    %18 = arith.mulf %13, %17 : vector<24x64xf32>
    %c0_5 = arith.constant 0 : index
    %c0_6 = arith.constant 0 : index
    %19 = vector.load %arg2[%c0_5, %c0_6] : memref<1x64xf32, #tpu.memory_space<vmem>>, vector<1x64xf32>
    %20 = vector.broadcast %19 : vector<1x64xf32> to vector<24x64xf32>
    %21 = arith.mulf %18, %20 : vector<24x64xf32>
    %c0_7 = arith.constant 0 : index
    %c0_8 = arith.constant 0 : index
    %22 = vector.load %arg3[%c0_7, %c0_8] : memref<1x64xf32, #tpu.memory_space<vmem>>, vector<1x64xf32>
    %23 = vector.broadcast %22 : vector<1x64xf32> to vector<24x64xf32>
    %24 = arith.addf %21, %23 : vector<24x64xf32>
    %25 = arith.truncf %24 : vector<24x64xf32> to vector<24x64xbf16>
    %c0_9 = arith.constant 0 : index
    %c0_10 = arith.constant 0 : index
    %26 = vector.load %arg4[%c0_9, %c0_10] : memref<64x128xf32, #tpu.memory_space<vmem>>, vector<64x128xf32>
    %27 = arith.truncf %26 : vector<64x128xf32> to vector<64x128xbf16>
    %cst_11 = arith.constant dense<0.000000e+00> : vector<24x128xf32>
    %28 = tpu.matmul %25, %27, %cst_11 {dimension_numbers = #tpu.dot_dimension_numbers<[1], [0], [0], [1], [0, 0, 1, 1], [], []>} : vector<24x64xbf16>, vector<64x128xbf16>, vector<24x128xf32> -> vector<24x128xf32>
    %c0_12 = arith.constant 0 : index
    %c0_13 = arith.constant 0 : index
    %29 = vector.load %arg5[%c0_12, %c0_13] : memref<1x128xf32, #tpu.memory_space<vmem>>, vector<1x128xf32>
    %30 = vector.broadcast %29 : vector<1x128xf32> to vector<24x128xf32>
    %31 = arith.addf %28, %30 : vector<24x128xf32>
    %cst_14 = arith.constant 5.000000e-01 : f32
    %32 = vector.broadcast %cst_14 : f32 to vector<24x128xf32>
    %33 = arith.mulf %32, %31 : vector<24x128xf32>
    %cst_15 = arith.constant 4.471500e-02 : f32
    %34 = vector.broadcast %cst_15 : f32 to vector<24x128xf32>
    %35 = arith.mulf %34, %31 : vector<24x128xf32>
    %36 = arith.mulf %35, %31 : vector<24x128xf32>
    %37 = arith.mulf %36, %31 : vector<24x128xf32>
    %38 = arith.addf %31, %37 : vector<24x128xf32>
    %cst_16 = arith.constant 0.797884583 : f32
    %39 = vector.broadcast %cst_16 : f32 to vector<24x128xf32>
    %40 = arith.mulf %39, %38 : vector<24x128xf32>
    %41 = math.tanh %40 : vector<24x128xf32>
    %cst_17 = arith.constant 1.000000e+00 : f32
    %42 = vector.broadcast %cst_17 : f32 to vector<24x128xf32>
    %43 = arith.addf %42, %41 : vector<24x128xf32>
    %44 = arith.mulf %33, %43 : vector<24x128xf32>
    %45 = arith.truncf %44 : vector<24x128xf32> to vector<24x128xbf16>
    %c0_18 = arith.constant 0 : index
    %c0_19 = arith.constant 0 : index
    %46 = vector.load %arg6[%c0_18, %c0_19] : memref<128x64xf32, #tpu.memory_space<vmem>>, vector<128x64xf32>
    %47 = arith.truncf %46 : vector<128x64xf32> to vector<128x64xbf16>
    %cst_20 = arith.constant dense<0.000000e+00> : vector<24x64xf32>
    %48 = tpu.matmul %45, %47, %cst_20 {dimension_numbers = #tpu.dot_dimension_numbers<[1], [0], [0], [1], [0, 0, 1, 1], [], []>} : vector<24x128xbf16>, vector<128x64xbf16>, vector<24x64xf32> -> vector<24x64xf32>
    %c0_21 = arith.constant 0 : index
    %c0_22 = arith.constant 0 : index
    %49 = vector.load %arg7[%c0_21, %c0_22] : memref<1x64xf32, #tpu.memory_space<vmem>>, vector<1x64xf32>
    %50 = vector.broadcast %49 : vector<1x64xf32> to vector<24x64xf32>
    %51 = arith.addf %48, %50 : vector<24x64xf32>
    %cst_23 = arith.constant 2.000000e+00 : f32
    %52 = vector.broadcast %cst_23 : f32 to vector<24x64xf32>
    %53 = arith.mulf %52, %0 : vector<24x64xf32>
    %54 = arith.addf %51, %53 : vector<24x64xf32>
    %c0_24 = arith.constant 0 : index
    %c0_25 = arith.constant 0 : index
    %55 = vector.load %arg8[%c0_24, %c0_25] : memref<24x64xf32, #tpu.memory_space<vmem>>, vector<24x64xf32>
    tpu.vector_store %arg8[%c0_24, %c0_25], %54 {strides = array<i32>} : memref<24x64xf32, #tpu.memory_space<vmem>>, vector<24x64xf32>,
    return
  }
  func.func @transform_0(%arg0: i32) -> (i32, i32) {
    %c0_i32 = arith.constant 0 : i32
    %c0_i32_0 = arith.constant 0 : i32
    return %arg0, %c0_i32 : i32, i32
  }
  func.func @transform_1(%arg0: i32) -> (i32, i32) {
    %c0_i32 = arith.constant 0 : i32
    %c0_i32_0 = arith.constant 0 : i32
    %c0_i32_1 = arith.constant 0 : i32
    return %c0_i32, %c0_i32_0 : i32, i32
  }
  func.func @transform_2(%arg0: i32) -> (i32, i32) {
    %c0_i32 = arith.constant 0 : i32
    %c0_i32_0 = arith.constant 0 : i32
    %c0_i32_1 = arith.constant 0 : i32
    return %c0_i32, %c0_i32_0 : i32, i32
  }
  func.func @transform_3(%arg0: i32) -> (i32, i32) {
    %c0_i32 = arith.constant 0 : i32
    %c0_i32_0 = arith.constant 0 : i32
    %c0_i32_1 = arith.constant 0 : i32
    return %c0_i32, %c0_i32_0 : i32, i32
  }
  func.func @transform_4(%arg0: i32) -> (i32, i32) {
    %c0_i32 = arith.constant 0 : i32
    %c0_i32_0 = arith.constant 0 : i32
    %c0_i32_1 = arith.constant 0 : i32
    return %c0_i32, %c0_i32_0 : i32, i32
  }
  func.func @transform_5(%arg0: i32) -> (i32, i32) {
    %c0_i32 = arith.constant 0 : i32
    %c0_i32_0 = arith.constant 0 : i32
    %c0_i32_1 = arith.constant 0 : i32
    return %c0_i32, %c0_i32_0 : i32, i32
  }
  func.func @transform_6(%arg0: i32) -> (i32, i32) {
    %c0_i32 = arith.constant 0 : i32
    %c0_i32_0 = arith.constant 0 : i32
    %c0_i32_1 = arith.constant 0 : i32
    return %c0_i32, %c0_i32_0 : i32, i32
  }
  func.func @transform_7(%arg0: i32) -> (i32, i32) {
    %c0_i32 = arith.constant 0 : i32
    %c0_i32_0 = arith.constant 0 : i32
    return %arg0, %c0_i32 : i32, i32
  }
}

module attributes {stable_mosaic.version = 11 : i64} {
  func.func @kernel(%arg0: i32, %arg1: i32, %arg2: i32, %arg3: memref<2x64xf32, #tpu.memory_space<vmem>>, %arg4: memref<64x10xf32, #tpu.memory_space<vmem>>, %arg5: memref<1x64xf32, #tpu.memory_space<vmem>>, %arg6: memref<1x64xf32, #tpu.memory_space<vmem>>, %arg7: memref<1x10xf32, #tpu.memory_space<vmem>>, %arg8: memref<2x10xf32, #tpu.memory_space<vmem>>, %arg9: memref<2x10xf32, #tpu.memory_space<vmem>>, %arg10: memref<2x64xbf16, #tpu.memory_space<vmem>>) attributes {dimension_semantics = [#tpu.dimension_semantics<parallel>, #tpu.dimension_semantics<arbitrary>, #tpu.dimension_semantics<arbitrary>], iteration_bounds = array<i64: 1, 1, 1>, scalar_prefetch = 0 : i64, scratch_operands = 2 : i64, tpu.core_type = #tpu.core_type<tc>, window_params = [{transform_indices = @transform_0, window_bounds = array<i64: 2, 64>}, {transform_indices = @transform_1, window_bounds = array<i64: 64, 10>}, {pipeline_mode = #tpu.pipeline_mode<synchronous>, transform_indices = @transform_2, window_bounds = array<i64: 1, 64>}, {pipeline_mode = #tpu.pipeline_mode<synchronous>, transform_indices = @transform_3, window_bounds = array<i64: 1, 64>}, {transform_indices = @transform_4, window_bounds = array<i64: 1, 10>}, {transform_indices = @transform_5, window_bounds = array<i64: 2, 10>}]} {
    %c0_i32 = arith.constant 0 : i32
    %0 = arith.cmpi eq, %arg2, %c0_i32 : i32
    %1 = arith.extui %0 : i1 to i32
    %c0_i32_0 = arith.constant 0 : i32
    %2 = arith.cmpi ne, %1, %c0_i32_0 : i32
    scf.if %2 {
      %cst_12 = arith.constant 0.000000e+00 : f32
      %16 = vector.broadcast %cst_12 : f32 to vector<2x10xf32>
      %c0_13 = arith.constant 0 : index
      %c0_14 = arith.constant 0 : index
      %17 = vector.load %arg9[%c0_13, %c0_14] : memref<2x10xf32, #tpu.memory_space<vmem>>, vector<2x10xf32>
      tpu.vector_store %arg9[%c0_13, %c0_14], %16 {strides = array<i32>} : memref<2x10xf32, #tpu.memory_space<vmem>>, vector<2x10xf32>,
    } else {
    }
    %c0_i32_1 = arith.constant 0 : i32
    %3 = arith.cmpi eq, %arg1, %c0_i32_1 : i32
    %4 = arith.extui %3 : i1 to i32
    %c0_i32_2 = arith.constant 0 : i32
    %5 = arith.cmpi ne, %4, %c0_i32_2 : i32
    scf.if %5 {
      %c0_12 = arith.constant 0 : index
      %c0_13 = arith.constant 0 : index
      %16 = vector.load %arg3[%c0_12, %c0_13] : memref<2x64xf32, #tpu.memory_space<vmem>>, vector<2x64xf32>
      %cst_14 = arith.constant dense<0.000000e+00> : vector<2xf32>
      %17 = vector.multi_reduction <add>, %16, %cst_14 [1] : vector<2x64xf32> to vector<2xf32>
      %18 = vector.shape_cast %17 : vector<2xf32> to vector<2x1xf32>
      %cst_15 = arith.constant 6.400000e+01 : f32
      %19 = vector.broadcast %cst_15 : f32 to vector<2x1xf32>
      %20 = arith.divf %18, %19 : vector<2x1xf32>
      %21 = vector.broadcast %20 : vector<2x1xf32> to vector<2x64xf32>
      %22 = arith.subf %16, %21 : vector<2x64xf32>
      %23 = arith.mulf %22, %22 : vector<2x64xf32>
      %cst_16 = arith.constant dense<0.000000e+00> : vector<2xf32>
      %24 = vector.multi_reduction <add>, %23, %cst_16 [1] : vector<2x64xf32> to vector<2xf32>
      %25 = vector.shape_cast %24 : vector<2xf32> to vector<2x1xf32>
      %cst_17 = arith.constant 6.400000e+01 : f32
      %26 = vector.broadcast %cst_17 : f32 to vector<2x1xf32>
      %27 = arith.divf %25, %26 : vector<2x1xf32>
      %28 = vector.broadcast %20 : vector<2x1xf32> to vector<2x64xf32>
      %29 = arith.subf %16, %28 : vector<2x64xf32>
      %cst_18 = arith.constant 9.99999974E-6 : f32
      %30 = vector.broadcast %cst_18 : f32 to vector<2x1xf32>
      %31 = arith.addf %27, %30 : vector<2x1xf32>
      %32 = math.rsqrt %31 : vector<2x1xf32>
      %33 = vector.broadcast %32 : vector<2x1xf32> to vector<2x64xf32>
      %34 = arith.mulf %29, %33 : vector<2x64xf32>
      %c0_19 = arith.constant 0 : index
      %c0_20 = arith.constant 0 : index
      %35 = vector.load %arg5[%c0_19, %c0_20] : memref<1x64xf32, #tpu.memory_space<vmem>>, vector<1x64xf32>
      %36 = vector.broadcast %35 : vector<1x64xf32> to vector<2x64xf32>
      %37 = arith.mulf %34, %36 : vector<2x64xf32>
      %c0_21 = arith.constant 0 : index
      %c0_22 = arith.constant 0 : index
      %38 = vector.load %arg6[%c0_21, %c0_22] : memref<1x64xf32, #tpu.memory_space<vmem>>, vector<1x64xf32>
      %39 = vector.broadcast %38 : vector<1x64xf32> to vector<2x64xf32>
      %40 = arith.addf %37, %39 : vector<2x64xf32>
      %41 = arith.truncf %40 : vector<2x64xf32> to vector<2x64xbf16>
      %c0_23 = arith.constant 0 : index
      %c0_24 = arith.constant 0 : index
      %42 = vector.load %arg10[%c0_23, %c0_24] : memref<2x64xbf16, #tpu.memory_space<vmem>>, vector<2x64xbf16>
      tpu.vector_store %arg10[%c0_23, %c0_24], %41 {strides = array<i32>} : memref<2x64xbf16, #tpu.memory_space<vmem>>, vector<2x64xbf16>,
    } else {
    }
    %c0 = arith.constant 0 : index
    %c0_3 = arith.constant 0 : index
    %6 = vector.load %arg10[%c0, %c0_3] : memref<2x64xbf16, #tpu.memory_space<vmem>>, vector<2x64xbf16>
    %c0_4 = arith.constant 0 : index
    %c0_5 = arith.constant 0 : index
    %7 = vector.load %arg9[%c0_4, %c0_5] : memref<2x10xf32, #tpu.memory_space<vmem>>, vector<2x10xf32>
    %c0_6 = arith.constant 0 : index
    %c0_7 = arith.constant 0 : index
    %8 = vector.load %arg4[%c0_6, %c0_7] : memref<64x10xf32, #tpu.memory_space<vmem>>, vector<64x10xf32>
    %9 = arith.truncf %8 : vector<64x10xf32> to vector<64x10xbf16>
    %cst = arith.constant dense<0.000000e+00> : vector<2x10xf32>
    %10 = tpu.matmul %6, %9, %cst {dimension_numbers = #tpu.dot_dimension_numbers<[1], [0], [0], [1], [0, 0, 1, 1], [], []>} : vector<2x64xbf16>, vector<64x10xbf16>, vector<2x10xf32> -> vector<2x10xf32>
    %11 = arith.addf %7, %10 : vector<2x10xf32>
    %c0_8 = arith.constant 0 : index
    %c0_9 = arith.constant 0 : index
    %12 = vector.load %arg9[%c0_8, %c0_9] : memref<2x10xf32, #tpu.memory_space<vmem>>, vector<2x10xf32>
    tpu.vector_store %arg9[%c0_8, %c0_9], %11 {strides = array<i32>} : memref<2x10xf32, #tpu.memory_space<vmem>>, vector<2x10xf32>,
    %c0_i32_10 = arith.constant 0 : i32
    %13 = arith.cmpi eq, %arg2, %c0_i32_10 : i32
    %14 = arith.extui %13 : i1 to i32
    %c0_i32_11 = arith.constant 0 : i32
    %15 = arith.cmpi ne, %14, %c0_i32_11 : i32
    scf.if %15 {
      %c0_12 = arith.constant 0 : index
      %c0_13 = arith.constant 0 : index
      %16 = vector.load %arg9[%c0_12, %c0_13] : memref<2x10xf32, #tpu.memory_space<vmem>>, vector<2x10xf32>
      %c0_14 = arith.constant 0 : index
      %c0_15 = arith.constant 0 : index
      %17 = vector.load %arg7[%c0_14, %c0_15] : memref<1x10xf32, #tpu.memory_space<vmem>>, vector<1x10xf32>
      %18 = vector.broadcast %17 : vector<1x10xf32> to vector<2x10xf32>
      %19 = arith.addf %16, %18 : vector<2x10xf32>
      %c0_16 = arith.constant 0 : index
      %c0_17 = arith.constant 0 : index
      %20 = vector.load %arg8[%c0_16, %c0_17] : memref<2x10xf32, #tpu.memory_space<vmem>>, vector<2x10xf32>
      tpu.vector_store %arg8[%c0_16, %c0_17], %19 {strides = array<i32>} : memref<2x10xf32, #tpu.memory_space<vmem>>, vector<2x10xf32>,
    } else {
    }
    return
  }
  func.func @transform_0(%arg0: i32, %arg1: i32, %arg2: i32) -> (i32, i32) {
    %c0_i32 = arith.constant 0 : i32
    return %arg0, %arg2 : i32, i32
  }
  func.func @transform_1(%arg0: i32, %arg1: i32, %arg2: i32) -> (i32, i32) {
    %c0_i32 = arith.constant 0 : i32
    return %arg2, %arg1 : i32, i32
  }
  func.func @transform_2(%arg0: i32, %arg1: i32, %arg2: i32) -> (i32, i32) {
    %c0_i32 = arith.constant 0 : i32
    %c0_i32_0 = arith.constant 0 : i32
    %c0_i32_1 = arith.constant 0 : i32
    return %c0_i32, %c0_i32_0 : i32, i32
  }
  func.func @transform_3(%arg0: i32, %arg1: i32, %arg2: i32) -> (i32, i32) {
    %c0_i32 = arith.constant 0 : i32
    %c0_i32_0 = arith.constant 0 : i32
    %c0_i32_1 = arith.constant 0 : i32
    return %c0_i32, %c0_i32_0 : i32, i32
  }
  func.func @transform_4(%arg0: i32, %arg1: i32, %arg2: i32) -> (i32, i32) {
    %c0_i32 = arith.constant 0 : i32
    %c0_i32_0 = arith.constant 0 : i32
    return %c0_i32, %arg1 : i32, i32
  }
  func.func @transform_5(%arg0: i32, %arg1: i32, %arg2: i32) -> (i32, i32) {
    %c0_i32 = arith.constant 0 : i32
    return %arg0, %arg1 : i32, i32
  }
}

</mosaic_0001>

<llo_original>
// kernel: deepvit_forward.8
$region0: #{deepvit_forward.8}
  #allocation0 [shape = 'u32[]', space=smem, size = 0x4, offset = 0x4, fixed_abs, tag = 'smem constant byte address 0x4 - core index']
  #allocation1 [shape = 'u32[72,128]{1,0:T(1,128)}', space=vmem, size = 0x9000, scoped, tag = 'internal scratch']
  #allocation2 [shape = 'f32[16,64]{1,0:T(8,128)}', space=vmem, size = 0x2000, scoped, tag = 'scratch operand']
  %s0 = inlined_call_operand.vmem [shape: f32[32,112], index: 0, kind: input, shape index: {}]
  %s1 = inlined_call_operand.vmem [shape: f32[112,64], index: 1, kind: input, shape index: {}]
  %s2 = inlined_call_operand.vmem [shape: f32[1,64], index: 2, kind: input, shape index: {}]
  %s3 = inlined_call_operand.vmem [shape: f32[32,64], index: 3, kind: output, shape index: {}]
  %s4 = sld [smem:[#allocation0]]
  $region53: #{deepvit_forward.8} parent=0
    _
  %s6 = ssub.s32 1, %s4
  %s7 = scalar_select 0, %s6, %s4
  loop: start=0, step=1, limit=4
  $region2: #{deepvit_forward.8} parent=0 // loop_pre_header
    _
  $region3: #{deepvit_forward.8} parent=0 // loop_header
    %s9 = sphi 0, %s13
    %p10 = scmp.ge.s32.totalorder %s9, 4
    %s16 = sphi 0, %s35
    %s17 = sphi 0, %s31
    %s18 = sphi 0, %s27
    %s19 = sphi 0, %s16
    %s20 = sphi 0, %s17
    %s21 = sphi 0, %s18
    %s22 = sphi 0, %s19
    %s23 = sphi 0, %s20
    %s24 = sphi 0, %s21
    %s40 = sphi 0, %s42
    %s43 = sphi 0, %s40
    %s44 = sphi 0, %s43
    %s60 = sphi 0, %s44
    %s68 = sphi 0, %s70
    %s71 = sphi 0, %s68
    %s72 = sphi 0, %s71
    %s88 = sphi 0, %s72
    %s94 = sphi 0, %s96
    %s97 = sphi 0, %s94
    %s98 = sphi 0, %s97
    %s114 = sphi 0, %s98
    %s122 = sphi 0, %s124
    %s125 = sphi 0, %s122
    %s126 = sphi 0, %s125
    %s142 = sphi 0, %s126
  $region4: #{deepvit_forward.8} parent=0 // loop_header_branch
    %12 = sbr.rel (%p10) target = $region8
  $region5: #{deepvit_forward.8} parent=0 // loop_body
    %s14 = ssub.s32 %s9, 1
    %s15 = ssub.s32 %s9, 2
    %s25 = sadd.s32 1, %s18
    %p26 = scmp.ge.s32.totalorder %s25, 1
    %s27 = scalar_select %p26, 0, %s25
    %s28 = sadd.s32 1, %s17
    %s29 = scalar_select %p26, %s28, %s17
    %p30 = scmp.ge.s32.totalorder %s29, 1
    %s31 = scalar_select %p30, 0, %s29
    %s32 = sadd.s32 1, %s16
    %s33 = scalar_select %p30, %s32, %s16
    %p34 = scmp.ge.s32.totalorder %s33, 2
    %s35 = scalar_select %p34, 0, %s33
    %s36 = ssub.s32 %s16, %s35
    %s37 = ssub.s32 %s18, %s27
    %s38 = sor.u32 %s36, %s37
    %p39 = scmp.eq.s32.totalorder %s38, 0
    %s41 = sadd.s32 %s40, 1
    %s42 = scalar_select %p39, %s40, %s41
    %p45 = pneg %p39
    %p46 = scmp.eq.s32.totalorder %s9, 1
    %p47 = por %p45, %p46
    %p48 = scmp.ne.s32.totalorder %s40, %s43
    %p49 = scmp.eq.s32.totalorder %s9, 0
    %p50 = por %p48, %p49
    %p51 = scmp.ne.s32.totalorder %s40, %s43
    %p52 = scmp.eq.s32.totalorder %s14, 1
    %p53 = por %p51, %p52
    %p54 = scmp.ne.s32.totalorder %s43, %s44
    %p55 = scmp.eq.s32.totalorder %s14, 0
    %p56 = por %p54, %p55
    %p57 = scmp.ne.s32.totalorder %s43, %s44
    %p58 = scmp.eq.s32.totalorder %s15, 1
    %p59 = por %p57, %p58
    %p61 = scmp.ne.s32.totalorder %s44, %s60
    %p62 = scmp.eq.s32.totalorder %s15, 0
    %p63 = por %p61, %p62
    %s64 = ssub.s32 %s18, %s27
    %s65 = ssub.s32 %s17, %s31
    %s66 = sor.u32 %s64, %s65
    %p67 = scmp.eq.s32.totalorder %s66, 0
    %s69 = sadd.s32 %s68, 1
    %s70 = scalar_select %p67, %s68, %s69
    %p73 = pneg %p67
    %p74 = scmp.eq.s32.totalorder %s9, 1
    %p75 = por %p73, %p74
    %p76 = scmp.ne.s32.totalorder %s68, %s71
    %p77 = scmp.eq.s32.totalorder %s9, 0
    %p78 = por %p76, %p77
    %p79 = scmp.ne.s32.totalorder %s68, %s71
    %p80 = scmp.eq.s32.totalorder %s14, 1
    %p81 = por %p79, %p80
    %p82 = scmp.ne.s32.totalorder %s71, %s72
    %p83 = scmp.eq.s32.totalorder %s14, 0
    %p84 = por %p82, %p83
    %p85 = scmp.ne.s32.totalorder %s71, %s72
    %p86 = scmp.eq.s32.totalorder %s15, 1
    %p87 = por %p85, %p86
    %p89 = scmp.ne.s32.totalorder %s72, %s88
    %p90 = scmp.eq.s32.totalorder %s15, 0
    %p91 = por %p89, %p90
    %s92 = ssub.s32 %s17, %s31
    %p93 = scmp.eq.s32.totalorder %s92, 0
    %s95 = sadd.s32 %s94, 1
    %s96 = scalar_select %p93, %s94, %s95
    %p99 = pneg %p93
    %p100 = scmp.eq.s32.totalorder %s9, 1
    %p101 = por %p99, %p100
    %p102 = scmp.ne.s32.totalorder %s94, %s97
    %p103 = scmp.eq.s32.totalorder %s9, 0
    %p104 = por %p102, %p103
    %p105 = scmp.ne.s32.totalorder %s94, %s97
    %p106 = scmp.eq.s32.totalorder %s14, 1
    %p107 = por %p105, %p106
    %p108 = scmp.ne.s32.totalorder %s97, %s98
    %p109 = scmp.eq.s32.totalorder %s14, 0
    %p110 = por %p108, %p109
    %p111 = scmp.ne.s32.totalorder %s97, %s98
    %p112 = scmp.eq.s32.totalorder %s15, 1
    %p113 = por %p111, %p112
    %p115 = scmp.ne.s32.totalorder %s98, %s114
    %p116 = scmp.eq.s32.totalorder %s15, 0
    %p117 = por %p115, %p116
    %s118 = ssub.s32 %s16, %s35
    %s119 = ssub.s32 %s17, %s31
    %s120 = sor.u32 %s118, %s119
    %p121 = scmp.eq.s32.totalorder %s120, 0
    %s123 = sadd.s32 %s122, 1
    %s124 = scalar_select %p121, %s122, %s123
    %p127 = pneg %p121
    %p128 = scmp.eq.s32.totalorder %s9, 1
    %p129 = por %p127, %p128
    %p130 = scmp.ne.s32.totalorder %s122, %s125
    %p131 = scmp.eq.s32.totalorder %s9, 0
    %p132 = por %p130, %p131
    %p133 = scmp.ne.s32.totalorder %s122, %s125
    %p134 = scmp.eq.s32.totalorder %s14, 1
    %p135 = por %p133, %p134
    %p136 = scmp.ne.s32.totalorder %s125, %s126
    %p137 = scmp.eq.s32.totalorder %s14, 0
    %p138 = por %p136, %p137
    %p139 = scmp.ne.s32.totalorder %s125, %s126
    %p140 = scmp.eq.s32.totalorder %s15, 1
    %p141 = por %p139, %p140
    %p143 = scmp.ne.s32.totalorder %s126, %s142
    %p144 = scmp.eq.s32.totalorder %s15, 0
    %p145 = por %p143, %p144
    %p146 = scmp.le.s32.totalorder 1, %s9
    %p147 = scmp.lt.s32.totalorder %s9, 3
    %p148 = pnand %p146, %p147
    %p149 = pneg %p148
    // Predicated region
    $region9: #{deepvit_forward.8} parent=5 // pred_check
      _
    $region10: #{deepvit_forward.8} parent=5 // pred_check_branch
      %151 = sbr.rel (%p148) target = $region12
    $region11: #{deepvit_forward.8} parent=5 // pred_region
      %s152 = ssub.s32 %s9, 1
      // Predicated region
      $region13: #{deepvit_forward.8} parent=11 // pred_check
        %p153 = pneg %p84
      $region14: #{deepvit_forward.8} parent=11 // pred_check_branch
        %155 = sbr.rel (%p153) target = $region16
      $region15: #{deepvit_forward.8} parent=11 // pred_region
        %s156 = smul.u32 14, %s21
        %p157 = scmp.lt.s32.totalorder %s156, 13
        %s158 = scalar_select %p157, %s156, 13
        %p159 = scmp.lt.s32.totalorder %s20, 0
        %s160 = scalar_select %p159, %s20, 0
        %s161 = sadd.s32 %s160, %s158
        %s162 = smul.addr %s161, 8
        %s163 = scalar_lea.vmem %s1, %s162
        %s164 = smul.u32 14, %s21
      $region16: #{deepvit_forward.8} parent=11 // pred_fallthru
        _
      // Predicated region
      $region17: #{deepvit_forward.8} parent=11 // pred_check
        %p165 = pneg %p110
      $region18: #{deepvit_forward.8} parent=11 // pred_check_branch
        %167 = sbr.rel (%p165) target = $region20
      $region19: #{deepvit_forward.8} parent=11 // pred_region
        %p168 = scmp.lt.s32.totalorder %s20, 0
        %s169 = scalar_select %p168, %s20, 0
        %s170 = scalar_lea.vmem %s2, %s169
      $region20: #{deepvit_forward.8} parent=11 // pred_fallthru
        _
    $region12: #{deepvit_forward.8} parent=5 // pred_fallthru
      _
    %p171 = scmp.lt.s32.totalorder %s9, 2
    // Predicated region
    $region21: #{deepvit_forward.8} parent=5 // pred_check
      %p172 = pneg %p171
    $region22: #{deepvit_forward.8} parent=5 // pred_check_branch
      %174 = sbr.rel (%p172) target = $region24
    $region23: #{deepvit_forward.8} parent=5 // pred_region
      // Predicated region
      $region25: #{deepvit_forward.8} parent=23 // pred_check
        %p175 = pneg %p50
      $region26: #{deepvit_forward.8} parent=23 // pred_check_branch
        %177 = sbr.rel (%p175) target = $region28
      $region27: #{deepvit_forward.8} parent=23 // pred_region
        %s178 = smul.u32 2, %s16
        %p179 = scmp.lt.s32.totalorder %s178, 3
        %s180 = scalar_select %p179, %s178, 3
        %p181 = scmp.lt.s32.totalorder %s18, 0
        %s182 = scalar_select %p181, %s18, 0
        %s183 = sadd.s32 %s182, %s180
        %s184 = smul.addr %s183, 8
        %s185 = scalar_lea.vmem %s0, %s184
        %s186 = smul.u32 2, %s16
      $region28: #{deepvit_forward.8} parent=23 // pred_fallthru
        _
    $region24: #{deepvit_forward.8} parent=5 // pred_fallthru
      _
    %p187 = scmp.le.s32.totalorder 1, %s9
    %p188 = scmp.lt.s32.totalorder %s9, 3
    %p189 = pnand %p187, %p188
    %p190 = pneg %p189
    // Predicated region
    $region29: #{deepvit_forward.8} parent=5 // pred_check
      _
    $region30: #{deepvit_forward.8} parent=5 // pred_check_branch
      %192 = sbr.rel (%p189) target = $region32
    $region31: #{deepvit_forward.8} parent=5 // pred_region
      %s193 = ssub.s32 %s9, 1
      %s194 = smul.u32 2, %s19
      %p195 = scmp.lt.s32.totalorder %s194, 3
      %s196 = scalar_select %p195, %s194, 3
      %p197 = scmp.lt.s32.totalorder %s21, 0
      %s198 = scalar_select %p197, %s21, 0
      %s199 = sadd.s32 %s198, %s196
      %s200 = smul.addr %s199, 8
      %s201 = scalar_lea.vmem %s0, %s200
      %p202 = pneg %p56
      %p203 = pneg %p53
      %s204 = smul.u32 14, %s21
      %p205 = scmp.lt.s32.totalorder %s204, 13
      %s206 = scalar_select %p205, %s204, 13
      %p207 = scmp.lt.s32.totalorder %s20, 0
      %s208 = scalar_select %p207, %s20, 0
      %s209 = sadd.s32 %s208, %s206
      %s210 = smul.addr %s209, 8
      %s211 = scalar_lea.vmem %s1, %s210
      %p212 = pneg %p84
      %p213 = pneg %p81
      %p214 = scmp.lt.s32.totalorder %s20, 0
      %s215 = scalar_select %p214, %s20, 0
      %s216 = scalar_lea.vmem %s2, %s215
      %p217 = pneg %p110
      %p218 = pneg %p107
      %p219 = pneg %p138
      %p220 = pneg %p135
      %s221 = smul.u32 2, %s19
      %p222 = scmp.lt.s32.totalorder %s221, 3
      %s223 = scalar_select %p222, %s221, 3
      %p224 = scmp.lt.s32.totalorder %s20, 0
      %s225 = scalar_select %p224, %s20, 0
      %s226 = sadd.s32 %s225, %s223
      %s227 = smul.addr %s226, 8
      %s228 = scalar_lea.vmem %s3, %s227
      %s229 = smul.u32 2, %s19
      %p230 = scmp.lt.s32.totalorder %s229, 3
      %s231 = scalar_select %p230, %s229, 3
      %p232 = scmp.lt.s32.totalorder %s21, 0
      %s233 = scalar_select %p232, %s21, 0
      %s234 = sadd.s32 %s233, %s231
      %s235 = smul.addr %s234, 8
      %s236 = scalar_lea.vmem %s0, %s235
      %s237 = smul.u32 2, %s19
      %s238 = smul.u32 14, %s21
      %p239 = scmp.lt.s32.totalorder %s238, 13
      %s240 = scalar_select %p239, %s238, 13
      %p241 = scmp.lt.s32.totalorder %s20, 0
      %s242 = scalar_select %p241, %s20, 0
      %s243 = sadd.s32 %s242, %s240
      %s244 = smul.addr %s243, 8
      %s245 = scalar_lea.vmem %s1, %s244
      %s246 = smul.u32 14, %s21
      %p247 = scmp.lt.s32.totalorder %s20, 0
      %s248 = scalar_select %p247, %s20, 0
      %s249 = scalar_lea.vmem %s2, %s248
      %s250 = smul.u32 2, %s19
      %p251 = scmp.lt.s32.totalorder %s250, 3
      %s252 = scalar_select %p251, %s250, 3
      %p253 = scmp.lt.s32.totalorder %s20, 0
      %s254 = scalar_select %p253, %s20, 0
      %s255 = sadd.s32 %s254, %s252
      %s256 = smul.addr %s255, 8
      %s257 = scalar_lea.vmem %s3, %s256
      %s258 = smul.u32 2, %s19
      %p260 = scmp.eq.s32.totalorder %s21, 0
      // Predicated region
      $region33: #{deepvit_forward.8} parent=31 // pred_check
        %p261 = pneg %p260
      $region34: #{deepvit_forward.8} parent=31 // pred_check_branch
        %263 = sbr.rel (%p261) target = $region36
      $region35: #{deepvit_forward.8} parent=31 // pred_region
        %vm264 = vcmask 523264
        %265 = vst.msk [vmem:[#allocation2] sm:$0xff] %vm264, 0.0
        %266 = vst.msk [vmem:[#allocation2 + $0x8] sm:$0xff] %vm264, 0.0
      $region36: #{deepvit_forward.8} parent=31 // pred_fallthru
        _
      %v267 = vld [vmem:[%s236] sm:$0xff]
      %v268 = vld [vmem:[%s236 + $0x8] sm:$0xff]
      %v269 = vpack.c.bf16 %v268, %v267
      %v270 = vld [vmem:[#allocation2] sm:$0xff]
      %v271 = vld [vmem:[#allocation2 + $0x8] sm:$0xff]
      %v272 = vld [vmem:[%s245] sm:$0xff]
      %v273 = vld [vmem:[%s245 + $0x8] sm:$0xff]
      %v274 = vld [vmem:[%s245 + $0x10] sm:$0xff]
      %v275 = vld [vmem:[%s245 + $0x18] sm:$0xff]
      %v276 = vld [vmem:[%s245 + $0x20] sm:$0xff]
      %v277 = vld [vmem:[%s245 + $0x28] sm:$0xff]
      %v278 = vld [vmem:[%s245 + $0x30] sm:$0xff]
      %v279 = vld [vmem:[%s245 + $0x38] sm:$0xff]
      %v280 = vld [vmem:[%s245 + $0x40] sm:$0xff]
      %v281 = vld [vmem:[%s245 + $0x48] sm:$0xff]
      %v282 = vld [vmem:[%s245 + $0x50] sm:$0xff]
      %v283 = vld [vmem:[%s245 + $0x58] sm:$0xff]
      %v284 = vld [vmem:[%s245 + $0x60] sm:$0xff]
      %v285 = vld [vmem:[%s245 + $0x68] sm:$0xff]
      %v286 = vpack.c.bf16 %v273, %v272
      %v287 = vpack.c.bf16 %v275, %v274
      %v288 = vpack.c.bf16 %v277, %v276
      %v289 = vpack.c.bf16 %v279, %v278
      %v290 = vpack.c.bf16 %v281, %v280
      %v291 = vpack.c.bf16 %v283, %v282
      %v292 = vpack.c.bf16 %v285, %v284
      %vm293 = vcmask 916480
      %v295 = vsel %vm293, %v269, 0
      %297 = vmatpush.bf16.msra.mxu0 0
      %298 = vmatpush.bf16.msra.mxu0 %v292
      %299 = vmatpush.bf16.msra.mxu0 %v291
      %300 = vmatpush.bf16.msra.mxu0 %v290
      %301 = vmatpush.bf16.msra.mxu0 %v289
      %302 = vmatpush.bf16.msra.mxu0 %v288
      %303 = vmatpush.bf16.msra.mxu0 %v287
      %304 = vmatpush.bf16.msra.mxu0 %v286
      %305 = vmatmul.bf16.gmra.mxu0 %v295
      %v306 = vpop.f32.mrf.mxu0
      %v307 = vadd.f32 0.0, %v306
      %v308 = vpop.f32.mrf.mxu0
      %v309 = vadd.f32 0.0, %v308
      %310 = vdwg.mxu0
      %v311 = vadd.f32 %v270, %v307
      %v312 = vadd.f32 %v271, %v309
      %vm313 = vcmask 523264
      %314 = vst.msk [vmem:[#allocation2] sm:$0xff] %vm313, %v311
      %315 = vst.msk [vmem:[#allocation2 + $0x8] sm:$0xff] %vm313, %v312
      // Predicated region
      $region37: #{deepvit_forward.8} parent=31 // pred_check
        %p316 = pneg %p260
      $region38: #{deepvit_forward.8} parent=31 // pred_check_branch
        %318 = sbr.rel (%p316) target = $region40
      $region39: #{deepvit_forward.8} parent=31 // pred_region
        %v319 = vld [vmem:[#allocation2] sm:$0xff]
        %v320 = vld [vmem:[#allocation2 + $0x8] sm:$0xff]
        %v321 = vld [vmem:[%s249] sm:$0x1]
        %v323 = vperm.slane %v321, 0
        %v325 = vadd.f32 %v319, %v323
        %v326 = vadd.f32 %v320, %v323
        %327 = vst.msk [vmem:[%s257] sm:$0xff] %vm313, %v325
        %328 = vst.msk [vmem:[%s257 + $0x8] sm:$0xff] %vm313, %v326
      $region40: #{deepvit_forward.8} parent=31 // pred_fallthru
        _
      %s329 = smul.u32 2, %s19
      %p330 = scmp.lt.s32.totalorder %s329, 3
      %s331 = scalar_select %p330, %s329, 3
      %p332 = scmp.lt.s32.totalorder %s20, 0
      %s333 = scalar_select %p332, %s20, 0
      %s334 = sadd.s32 %s333, %s331
      %s335 = smul.addr %s334, 8
      %s336 = scalar_lea.vmem %s3, %s335
      // Predicated region
      $region41: #{deepvit_forward.8} parent=31 // pred_check
        %p337 = pneg %p135
      $region42: #{deepvit_forward.8} parent=31 // pred_check_branch
        %339 = sbr.rel (%p337) target = $region44
      $region43: #{deepvit_forward.8} parent=31 // pred_region
        %s340 = smul.u32 2, %s19
      $region44: #{deepvit_forward.8} parent=31 // pred_fallthru
        _
    $region32: #{deepvit_forward.8} parent=5 // pred_fallthru
      _
    %p341 = scmp.le.s32.totalorder 2, %s9
    // Predicated region
    $region45: #{deepvit_forward.8} parent=5 // pred_check
      %p342 = pneg %p341
    $region46: #{deepvit_forward.8} parent=5 // pred_check_branch
      %344 = sbr.rel (%p342) target = $region48
    $region47: #{deepvit_forward.8} parent=5 // pred_region
      %s345 = ssub.s32 %s9, 2
      // Predicated region
      $region49: #{deepvit_forward.8} parent=47 // pred_check
        %p346 = pneg %p141
      $region50: #{deepvit_forward.8} parent=47 // pred_check_branch
        %348 = sbr.rel (%p346) target = $region52
      $region51: #{deepvit_forward.8} parent=47 // pred_region
        %s349 = smul.u32 2, %s22
        %p350 = scmp.lt.s32.totalorder %s349, 3
        %s351 = scalar_select %p350, %s349, 3
        %p352 = scmp.lt.s32.totalorder %s23, 0
        %s353 = scalar_select %p352, %s23, 0
        %s354 = sadd.s32 %s353, %s351
        %s355 = smul.addr %s354, 8
        %s356 = scalar_lea.vmem %s3, %s355
      $region52: #{deepvit_forward.8} parent=47 // pred_fallthru
        _
    $region48: #{deepvit_forward.8} parent=5 // pred_fallthru
      _
  $region6: #{deepvit_forward.8} parent=0 // loop_footer
    %s13 = sadd.s32 1, %s9
  $region7: #{deepvit_forward.8} parent=0 // loop_footer_branch
    %8 = sbr.rel target = $region3
  $region8: #{deepvit_forward.8} parent=0 // loop_exit
    _

// kernel: deepvit_forward.9
$region0: #{deepvit_forward.9}
  #allocation0 [shape = 'u32[]', space=smem, size = 0x4, offset = 0x4, fixed_abs, tag = 'smem constant byte address 0x4 - core index']
  #allocation1 [shape = 'u32[72,128]{1,0:T(1,128)}', space=vmem, size = 0x9000, scoped, tag = 'internal scratch']
  #allocation2 [shape = 'f32[24,128]{1,0:T(8,128)}', space=vmem, size = 0x3000, scoped, tag = 'scratch operand']
  #allocation3 [shape = 'bf16[24,64]{1,0:T(8,128)(2,1)}', space=vmem, size = 0x1800, scoped, tag = 'scratch operand']
  %s0 = inlined_call_operand.vmem [shape: f32[48,64], index: 0, kind: input, shape index: {}]
  %s1 = inlined_call_operand.vmem [shape: f32[64,384], index: 1, kind: input, shape index: {}]
  %s2 = inlined_call_operand.vmem [shape: f32[1,64], index: 2, kind: input, shape index: {}]
  %s3 = inlined_call_operand.vmem [shape: f32[1,64], index: 3, kind: input, shape index: {}]
  %s4 = inlined_call_operand.vmem [shape: f32[48,384], index: 4, kind: output, shape index: {}]
  %s5 = sld [smem:[#allocation0]]
  $region133: #{deepvit_forward.9} parent=0
    _
  %s7 = ssub.s32 1, %s5
  %s8 = scalar_select 0, %s7, %s5
  $region1: #{deepvit_forward.9} parent=0
    #allocation4 [shape = 'u8[65536]{0}', space=vmem, size = 0x10000, scoped, tag = 'input window, operand 1']
    #allocation5 [shape = 'u8[24576]{0}', space=vmem, size = 0x6000, scoped, tag = 'output window, operand 0']
    loop: start=0, step=1, limit=8
    $region2: #{deepvit_forward.9} parent=1 // loop_pre_header
      _
    $region3: #{deepvit_forward.9} parent=1 // loop_header
      %s10 = sphi 0, %s14
      %p11 = scmp.ge.s32.totalorder %s10, 8
      %s17 = sphi 0, %s36
      %s18 = sphi 0, %s32
      %s19 = sphi 0, %s28
      %s20 = sphi 0, %s17
      %s21 = sphi 0, %s18
      %s22 = sphi 0, %s19
      %s23 = sphi 0, %s20
      %s24 = sphi 0, %s21
      %s25 = sphi 0, %s22
      %s41 = sphi 0, %s43
      %s44 = sphi 0, %s41
      %s45 = sphi 0, %s44
      %s61 = sphi 0, %s45
      %s69 = sphi 0, %s71
      %s72 = sphi 0, %s69
      %s73 = sphi 0, %s72
      %s89 = sphi 0, %s73
      %s93 = sphi 0, %s93
      %s95 = sphi 0, %s93
      %s96 = sphi 0, %s95
      %s110 = sphi 0, %s96
      %s114 = sphi 0, %s114
      %s116 = sphi 0, %s114
      %s117 = sphi 0, %s116
      %s131 = sphi 0, %s117
      %s139 = sphi 0, %s141
      %s142 = sphi 0, %s139
      %s143 = sphi 0, %s142
      %s159 = sphi 0, %s143
    $region4: #{deepvit_forward.9} parent=1 // loop_header_branch
      %13 = sbr.rel (%p11) target = $region8
    $region5: #{deepvit_forward.9} parent=1 // loop_body
      %s15 = ssub.s32 %s10, 1
      %s16 = ssub.s32 %s10, 2
      %s26 = sadd.s32 1, %s19
      %p27 = scmp.ge.s32.totalorder %s26, 1
      %s28 = scalar_select %p27, 0, %s26
      %s29 = sadd.s32 1, %s18
      %s30 = scalar_select %p27, %s29, %s18
      %p31 = scmp.ge.s32.totalorder %s30, 3
      %s32 = scalar_select %p31, 0, %s30
      %s33 = sadd.s32 1, %s17
      %s34 = scalar_select %p31, %s33, %s17
      %p35 = scmp.ge.s32.totalorder %s34, 2
      %s36 = scalar_select %p35, 0, %s34
      %s37 = ssub.s32 %s17, %s36
      %s38 = ssub.s32 %s19, %s28
      %s39 = sor.u32 %s37, %s38
      %p40 = scmp.eq.s32.totalorder %s39, 0
      %s42 = sadd.s32 %s41, 1
      %s43 = scalar_select %p40, %s41, %s42
      %p46 = pneg %p40
      %p47 = scmp.eq.s32.totalorder %s10, 5
      %p48 = por %p46, %p47
      %p49 = scmp.ne.s32.totalorder %s41, %s44
      %p50 = scmp.eq.s32.totalorder %s10, 0
      %p51 = por %p49, %p50
      %p52 = scmp.ne.s32.totalorder %s41, %s44
      %p53 = scmp.eq.s32.totalorder %s15, 5
      %p54 = por %p52, %p53
      %p55 = scmp.ne.s32.totalorder %s44, %s45
      %p56 = scmp.eq.s32.totalorder %s15, 0
      %p57 = por %p55, %p56
      %p58 = scmp.ne.s32.totalorder %s44, %s45
      %p59 = scmp.eq.s32.totalorder %s16, 5
      %p60 = por %p58, %p59
      %p62 = scmp.ne.s32.totalorder %s45, %s61
      %p63 = scmp.eq.s32.totalorder %s16, 0
      %p64 = por %p62, %p63
      %s65 = ssub.s32 %s19, %s28
      %s66 = ssub.s32 %s18, %s32
      %s67 = sor.u32 %s65, %s66
      %p68 = scmp.eq.s32.totalorder %s67, 0
      %s70 = sadd.s32 %s69, 1
      %s71 = scalar_select %p68, %s69, %s70
      %p74 = pneg %p68
      %p75 = scmp.eq.s32.totalorder %s10, 5
      %p76 = por %p74, %p75
      %p77 = scmp.ne.s32.totalorder %s69, %s72
      %p78 = scmp.eq.s32.totalorder %s10, 0
      %p79 = por %p77, %p78
      %p80 = scmp.ne.s32.totalorder %s69, %s72
      %p81 = scmp.eq.s32.totalorder %s15, 5
      %p82 = por %p80, %p81
      %p83 = scmp.ne.s32.totalorder %s72, %s73
      %p84 = scmp.eq.s32.totalorder %s15, 0
      %p85 = por %p83, %p84
      %p86 = scmp.ne.s32.totalorder %s72, %s73
      %p87 = scmp.eq.s32.totalorder %s16, 5
      %p88 = por %p86, %p87
      %p90 = scmp.ne.s32.totalorder %s73, %s89
      %p91 = scmp.eq.s32.totalorder %s16, 0
      %p92 = por %p90, %p91
      %s94 = sadd.s32 %s93, 1
      %p97 = scmp.eq.s32.totalorder %s10, 5
      %p98 = scmp.ne.s32.totalorder %s93, %s95
      %p99 = scmp.eq.s32.totalorder %s10, 0
      %p100 = por %p98, %p99
      %p101 = scmp.ne.s32.totalorder %s93, %s95
      %p102 = scmp.eq.s32.totalorder %s15, 5
      %p103 = por %p101, %p102
      %p104 = scmp.ne.s32.totalorder %s95, %s96
      %p105 = scmp.eq.s32.totalorder %s15, 0
      %p106 = por %p104, %p105
      %p107 = scmp.ne.s32.totalorder %s95, %s96
      %p108 = scmp.eq.s32.totalorder %s16, 5
      %p109 = por %p107, %p108
      %p111 = scmp.ne.s32.totalorder %s96, %s110
      %p112 = scmp.eq.s32.totalorder %s16, 0
      %p113 = por %p111, %p112
      %s115 = sadd.s32 %s114, 1
      %p118 = scmp.eq.s32.totalorder %s10, 5
      %p119 = scmp.ne.s32.totalorder %s114, %s116
      %p120 = scmp.eq.s32.totalorder %s10, 0
      %p121 = por %p119, %p120
      %p122 = scmp.ne.s32.totalorder %s114, %s116
      %p123 = scmp.eq.s32.totalorder %s15, 5
      %p124 = por %p122, %p123
      %p125 = scmp.ne.s32.totalorder %s116, %s117
      %p126 = scmp.eq.s32.totalorder %s15, 0
      %p127 = por %p125, %p126
      %p128 = scmp.ne.s32.totalorder %s116, %s117
      %p129 = scmp.eq.s32.totalorder %s16, 5
      %p130 = por %p128, %p129
      %p132 = scmp.ne.s32.totalorder %s117, %s131
      %p133 = scmp.eq.s32.totalorder %s16, 0
      %p134 = por %p132, %p133
      %s135 = ssub.s32 %s17, %s36
      %s136 = ssub.s32 %s18, %s32
      %s137 = sor.u32 %s135, %s136
      %p138 = scmp.eq.s32.totalorder %s137, 0
      %s140 = sadd.s32 %s139, 1
      %s141 = scalar_select %p138, %s139, %s140
      %p144 = pneg %p138
      %p145 = scmp.eq.s32.totalorder %s10, 5
      %p146 = por %p144, %p145
      %p147 = scmp.ne.s32.totalorder %s139, %s142
      %p148 = scmp.eq.s32.totalorder %s10, 0
      %p149 = por %p147, %p148
      %p150 = scmp.ne.s32.totalorder %s139, %s142
      %p151 = scmp.eq.s32.totalorder %s15, 5
      %p152 = por %p150, %p151
      %p153 = scmp.ne.s32.totalorder %s142, %s143
      %p154 = scmp.eq.s32.totalorder %s15, 0
      %p155 = por %p153, %p154
      %p156 = scmp.ne.s32.totalorder %s142, %s143
      %p157 = scmp.eq.s32.totalorder %s16, 5
      %p158 = por %p156, %p157
      %p160 = scmp.ne.s32.totalorder %s143, %s159
      %p161 = scmp.eq.s32.totalorder %s16, 0
      %p162 = por %p160, %p161
      %p163 = scmp.le.s32.totalorder 1, %s10
      %p164 = scmp.lt.s32.totalorder %s10, 7
      %p165 = pnand %p163, %p164
      %p166 = pneg %p165
      // Predicated region
      $region9: #{deepvit_forward.9} parent=5 // pred_check
        _
      $region10: #{deepvit_forward.9} parent=5 // pred_check_branch
        %168 = sbr.rel (%p165) target = $region12
      $region11: #{deepvit_forward.9} parent=5 // pred_region
        %s169 = ssub.s32 %s10, 1
        // Predicated region
        $region13: #{deepvit_forward.9} parent=11 // pred_check
          %p170 = pneg %p106
        $region14: #{deepvit_forward.9} parent=11 // pred_check_branch
          %172 = sbr.rel (%p170) target = $region16
        $region15: #{deepvit_forward.9} parent=11 // pred_region
          _
        $region16: #{deepvit_forward.9} parent=11 // pred_fallthru
          _
        // Predicated region
        $region17: #{deepvit_forward.9} parent=11 // pred_check
          %p173 = pneg %p127
        $region18: #{deepvit_forward.9} parent=11 // pred_check_branch
          %175 = sbr.rel (%p173) target = $region20
        $region19: #{deepvit_forward.9} parent=11 // pred_region
          _
        $region20: #{deepvit_forward.9} parent=11 // pred_fallthru
          _
      $region12: #{deepvit_forward.9} parent=5 // pred_fallthru
        _
      %p176 = scmp.lt.s32.totalorder %s10, 6
      // Predicated region
      $region21: #{deepvit_forward.9} parent=5 // pred_check
        %p177 = pneg %p176
      $region22: #{deepvit_forward.9} parent=5 // pred_check_branch
        %179 = sbr.rel (%p177) target = $region24
      $region23: #{deepvit_forward.9} parent=5 // pred_region
        // Predicated region
        $region25: #{deepvit_forward.9} parent=23 // pred_check
          %p180 = pneg %p51
        $region26: #{deepvit_forward.9} parent=23 // pred_check_branch
          %182 = sbr.rel (%p180) target = $region28
        $region27: #{deepvit_forward.9} parent=23 // pred_region
          %s183 = smul.u32 3, %s17
          %p184 = scmp.lt.s32.totalorder %s183, 5
          %s185 = scalar_select %p184, %s183, 5
          %p186 = scmp.lt.s32.totalorder %s19, 0
          %s187 = scalar_select %p186, %s19, 0
          %s188 = sadd.s32 %s187, %s185
          %s189 = smul.addr %s188, 8
          %s190 = scalar_lea.vmem %s0, %s189
          %s191 = smul.u32 3, %s17
        $region28: #{deepvit_forward.9} parent=23 // pred_fallthru
          _
        // Predicated region
        $region29: #{deepvit_forward.9} parent=23 // pred_check
          %p192 = pneg %p79
        $region30: #{deepvit_forward.9} parent=23 // pred_check_branch
          %194 = sbr.rel (%p192) target = $region32
        $region31: #{deepvit_forward.9} parent=23 // pred_region
          %s195 = sand.u32 %s69, 1
          %s196 = sand.u32 %s69, 1
          %s197 = smul.addr %s196, 64
          %s198 = scalar_lea.vmem [#allocation4], %s197
          %s199 = smul.u32 8, %s19
          %s200 = smul.addr %s199, 3
          %s201 = sadd.s32 %s18, %s200
          %s202 = smul.addr %s201, 8
          %s203 = scalar_lea.vmem %s1, %s202
          // Predicated region
          $region33: #{deepvit_forward.9} parent=31 // pred_check
            _
          $region34: #{deepvit_forward.9} parent=31 // pred_check_branch
            %205 = sbr.rel (0) target = $region36
          $region35: #{deepvit_forward.9} parent=31 // pred_region
            // Predicated region
            $region37: #{deepvit_forward.9} parent=35 // pred_check
              _
            $region38: #{deepvit_forward.9} parent=35 // pred_check_branch
              %207 = sbr.rel (0) target = $region40
            $region39: #{deepvit_forward.9} parent=35 // pred_region
              // Predicated region
              $region52: #{deepvit_forward.9} parent=39 // pred_check
                _
              $region53: #{deepvit_forward.9} parent=39 // pred_check_branch
                %237 = sbr.rel (0) target = $region55
              $region54: #{deepvit_forward.9} parent=39 // pred_region
                loop: start=0, step=1, limit=1
                $region56: #{deepvit_forward.9} parent=54 // loop_pre_header
                  _
                $region57: #{deepvit_forward.9} parent=54 // loop_header
                  %s239 = sphi 0, %s243
                  %p240 = scmp.ge.s32.totalorder %s239, 1
                  %s244 = sphi %s203, %s203
                  %s245 = sphi %s198, %s198
                $region58: #{deepvit_forward.9} parent=54 // loop_header_branch
                  %242 = sbr.rel (%p240) target = $region62
                $region59: #{deepvit_forward.9} parent=54 // loop_body
                  %v246 = vld [vmem:[%s244] sm:$0xff]
                  %247 = vst [vmem:[%s245] sm:$0xff] %v246
                  %v248 = vld [vmem:[%s244 + $0x18] sm:$0xff]
                  %249 = vst [vmem:[%s245 + $0x8] sm:$0xff] %v248
                  %v250 = vld [vmem:[%s244 + $0x30] sm:$0xff]
                  %251 = vst [vmem:[%s245 + $0x10] sm:$0xff] %v250
                  %v252 = vld [vmem:[%s244 + $0x48] sm:$0xff]
                  %253 = vst [vmem:[%s245 + $0x18] sm:$0xff] %v252
                  %v254 = vld [vmem:[%s244 + $0x60] sm:$0xff]
                  %255 = vst [vmem:[%s245 + $0x20] sm:$0xff] %v254
                  %v256 = vld [vmem:[%s244 + $0x78] sm:$0xff]
                  %257 = vst [vmem:[%s245 + $0x28] sm:$0xff] %v256
                  %v258 = vld [vmem:[%s244 + $0x90] sm:$0xff]
                  %259 = vst [vmem:[%s245 + $0x30] sm:$0xff] %v258
                  %v260 = vld [vmem:[%s244 + $0xa8] sm:$0xff]
                  %261 = vst [vmem:[%s245 + $0x38] sm:$0xff] %v260
                $region60: #{deepvit_forward.9} parent=54 // loop_footer
                  %s243 = sadd.s32 1, %s239
                $region61: #{deepvit_forward.9} parent=54 // loop_footer_branch
                  %238 = sbr.rel target = $region57
                $region62: #{deepvit_forward.9} parent=54 // loop_exit
                  _
              $region55: #{deepvit_forward.9} parent=39 // pred_fallthru
                _
              // Predicated region
              $region63: #{deepvit_forward.9} parent=39 // pred_check
                _
              $region64: #{deepvit_forward.9} parent=39 // pred_check_branch
                %263 = sbr.rel target = $region66
              $region65: #{deepvit_forward.9} parent=39 // pred_region
                _
              $region66: #{deepvit_forward.9} parent=39 // pred_fallthru
                _
            $region40: #{deepvit_forward.9} parent=35 // pred_fallthru
              _
            // Predicated region
            $region41: #{deepvit_forward.9} parent=35 // pred_check
              _
            $region42: #{deepvit_forward.9} parent=35 // pred_check_branch
              %209 = sbr.rel target = $region44
            $region43: #{deepvit_forward.9} parent=35 // pred_region
              %s211 = ssub.s32 256, 1
              loop: start=0, step=1, limit=1
              $region45: #{deepvit_forward.9} parent=43 // loop_pre_header
                _
              $region46: #{deepvit_forward.9} parent=43 // loop_header
                %s213 = sphi 0, %s217
                %p214 = scmp.ge.s32.totalorder %s213, 1
                %s218 = sphi %s203, %s203
                %s219 = sphi %s198, %s198
              $region47: #{deepvit_forward.9} parent=43 // loop_header_branch
                %216 = sbr.rel (%p214) target = $region51
              $region48: #{deepvit_forward.9} parent=43 // loop_body
                %v220 = vld [vmem:[%s218] sm:%s211]
                %221 = vst [vmem:[%s219] sm:%s211] %v220
                %v222 = vld [vmem:[%s218 + $0x18] sm:%s211]
                %223 = vst [vmem:[%s219 + $0x8] sm:%s211] %v222
                %v224 = vld [vmem:[%s218 + $0x30] sm:%s211]
                %225 = vst [vmem:[%s219 + $0x10] sm:%s211] %v224
                %v226 = vld [vmem:[%s218 + $0x48] sm:%s211]
                %227 = vst [vmem:[%s219 + $0x18] sm:%s211] %v226
                %v228 = vld [vmem:[%s218 + $0x60] sm:%s211]
                %229 = vst [vmem:[%s219 + $0x20] sm:%s211] %v228
                %v230 = vld [vmem:[%s218 + $0x78] sm:%s211]
                %231 = vst [vmem:[%s219 + $0x28] sm:%s211] %v230
                %v232 = vld [vmem:[%s218 + $0x90] sm:%s211]
                %233 = vst [vmem:[%s219 + $0x30] sm:%s211] %v232
                %v234 = vld [vmem:[%s218 + $0xa8] sm:%s211]
                %235 = vst [vmem:[%s219 + $0x38] sm:%s211] %v234
              $region49: #{deepvit_forward.9} parent=43 // loop_footer
                %s217 = sadd.s32 1, %s213
              $region50: #{deepvit_forward.9} parent=43 // loop_footer_branch
                %212 = sbr.rel target = $region46
              $region51: #{deepvit_forward.9} parent=43 // loop_exit
                _
            $region44: #{deepvit_forward.9} parent=35 // pred_fallthru
              _
          $region36: #{deepvit_forward.9} parent=31 // pred_fallthru
            _
          %264 = vnop
        $region32: #{deepvit_forward.9} parent=23 // pred_fallthru
          _
      $region24: #{deepvit_forward.9} parent=5 // pred_fallthru
        _
      %p265 = scmp.le.s32.totalorder 1, %s10
      %p266 = scmp.lt.s32.totalorder %s10, 7
      %p267 = pnand %p265, %p266
      %p268 = pneg %p267
      // Predicated region
      $region67: #{deepvit_forward.9} parent=5 // pred_check
        _
      $region68: #{deepvit_forward.9} parent=5 // pred_check_branch
        %270 = sbr.rel (%p267) target = $region70
      $region69: #{deepvit_forward.9} parent=5 // pred_region
        %s271 = ssub.s32 %s10, 1
        %s272 = sand.u32 %s72, 1
        %s273 = sand.u32 %s72, 1
        %s274 = smul.addr %s273, 64
        %s275 = scalar_lea.vmem [#allocation4], %s274
        // Predicated region
        $region71: #{deepvit_forward.9} parent=69 // pred_check
          %p276 = pneg %p85
        $region72: #{deepvit_forward.9} parent=69 // pred_check_branch
          %278 = sbr.rel (%p276) target = $region74
        $region73: #{deepvit_forward.9} parent=69 // pred_region
          _
        $region74: #{deepvit_forward.9} parent=69 // pred_fallthru
          _
        %s279 = smul.u32 3, %s20
        %p280 = scmp.lt.s32.totalorder %s279, 5
        %s281 = scalar_select %p280, %s279, 5
        %p282 = scmp.lt.s32.totalorder %s22, 0
        %s283 = scalar_select %p282, %s22, 0
        %s284 = sadd.s32 %s283, %s281
        %s285 = smul.addr %s284, 8
        %s286 = scalar_lea.vmem %s0, %s285
        %p287 = pneg %p57
        %p288 = pneg %p54
        %s289 = sand.u32 %s72, 1
        %s290 = sand.u32 %s72, 1
        %s291 = smul.addr %s290, 64
        %s292 = scalar_lea.vmem [#allocation4], %s291
        %p293 = pneg %p85
        %p294 = pneg %p82
        %p295 = pneg %p106
        %p296 = pneg %p103
        %p297 = pneg %p127
        %p298 = pneg %p124
        %p299 = pneg %p155
        %p300 = pneg %p152
        %s301 = sand.u32 %s142, 1
        %s302 = sand.u32 %s142, 1
        %s303 = smul.addr %s302, 24
        %s304 = scalar_lea.vmem [#allocation5], %s303
        %s305 = smul.u32 3, %s20
        %p306 = scmp.lt.s32.totalorder %s305, 5
        %s307 = scalar_select %p306, %s305, 5
        %p308 = scmp.lt.s32.totalorder %s22, 0
        %s309 = scalar_select %p308, %s22, 0
        %s310 = sadd.s32 %s309, %s307
        %s311 = smul.addr %s310, 8
        %s312 = scalar_lea.vmem %s0, %s311
        %s313 = smul.u32 3, %s20
        %s314 = smul.u32 8, %s22
        %s315 = smul.u32 3, %s20
        %p317 = scmp.eq.s32.totalorder %s22, 0
        // Predicated region
        $region75: #{deepvit_forward.9} parent=69 // pred_check
          %p318 = pneg %p317
        $region76: #{deepvit_forward.9} parent=69 // pred_check_branch
          %320 = sbr.rel (%p318) target = $region78
        $region77: #{deepvit_forward.9} parent=69 // pred_region
          %321 = vst [vmem:[#allocation2] sm:$0xff] 0.0
          %322 = vst [vmem:[#allocation2 + $0x8] sm:$0xff] 0.0
          %323 = vst [vmem:[#allocation2 + $0x10] sm:$0xff] 0.0
        $region78: #{deepvit_forward.9} parent=69 // pred_fallthru
          _
        %p324 = scmp.eq.s32.totalorder %s21, 0
        // Predicated region
        $region79: #{deepvit_forward.9} parent=69 // pred_check
          %p325 = pneg %p324
        $region80: #{deepvit_forward.9} parent=69 // pred_check_branch
          %327 = sbr.rel (%p325) target = $region82
        $region81: #{deepvit_forward.9} parent=69 // pred_region
          %v328 = vld [vmem:[%s312] sm:$0xff]
          %v329 = vld [vmem:[%s312 + $0x8] sm:$0xff]
          %v330 = vld [vmem:[%s312 + $0x10] sm:$0xff]
          %vm331 = vcmask 523264
          %v332 = vsel %vm331, %v328, 0.0
          %333 = vadd.xlane.f32.xlu0 %v332
          %v334 = vpop.xlane.xlu0 %333
          %v335 = vsel %vm331, %v329, 0.0
          %336 = vadd.xlane.f32.xlu0 %v335
          %v337 = vpop.xlane.xlu0 %336
          %v338 = vsel %vm331, %v330, 0.0
          %339 = vadd.xlane.f32.xlu0 %v338
          %v340 = vpop.xlane.xlu0 %339
          %v341 = vrcp.pop 64.0
          %v342 = vmul.f32 64.0, %v341
          %v343 = vsub.f32 1.0, %v342
          %v344 = vmul.f32 %v341, %v343
          %v345 = vadd.f32 %v341, %v344
          %vm346 = vweird.f32 %v341
          %v347 = vsel %vm346, %v341, %v345
          %v348 = vmul.f32 %v334, %v347
          %v349 = vmul.f32 %v337, %v347
          %v350 = vmul.f32 %v340, %v347
          %v351 = vsub.f32 %v328, %v348
          %v352 = vsub.f32 %v329, %v349
          %v353 = vsub.f32 %v330, %v350
          %v354 = vmul.f32 %v351, %v351
          %v355 = vmul.f32 %v352, %v352
          %v356 = vmul.f32 %v353, %v353
          %v357 = vsel %vm331, %v354, 0.0
          %358 = vadd.xlane.f32.xlu0 %v357
          %v359 = vpop.xlane.xlu0 %358
          %v360 = vsel %vm331, %v355, 0.0
          %361 = vadd.xlane.f32.xlu0 %v360
          %v362 = vpop.xlane.xlu0 %361
          %v363 = vsel %vm331, %v356, 0.0
          %364 = vadd.xlane.f32.xlu0 %v363
          %v365 = vpop.xlane.xlu0 %364
          %v366 = vmul.f32 %v359, %v347
          %v367 = vmul.f32 %v362, %v347
          %v368 = vmul.f32 %v365, %v347
          %v369 = vadd.f32 %v366, 1e-05
          %v370 = vadd.f32 %v367, 1e-05
          %v371 = vadd.f32 %v368, 1e-05
          %v372 = vrsqrt.pop %v369
          %v373 = vmul.f32 %v372, %v369
          %v374 = vmul.f32 %v373, %v372
          %v375 = vmul.f32 0.5, %v374
          %v376 = vsub.f32 1.5, %v375
          %v377 = vmul.f32 %v372, %v376
          %vm378 = vweird.f32 %v369
          %vm379 = vweird.f32 %v372
          %vm380 = vmor %vm378, %vm379
          %v381 = vsel %vm380, %v372, %v377
          %v382 = vrsqrt.pop %v370
          %v383 = vmul.f32 %v382, %v370
          %v384 = vmul.f32 %v383, %v382
          %v385 = vmul.f32 0.5, %v384
          %v386 = vsub.f32 1.5, %v385
          %v387 = vmul.f32 %v382, %v386
          %vm388 = vweird.f32 %v370
          %vm389 = vweird.f32 %v382
          %vm390 = vmor %vm388, %vm389
          %v391 = vsel %vm390, %v382, %v387
          %v392 = vrsqrt.pop %v371
          %v393 = vmul.f32 %v392, %v371
          %v394 = vmul.f32 %v393, %v392
          %v395 = vmul.f32 0.5, %v394
          %v396 = vsub.f32 1.5, %v395
          %v397 = vmul.f32 %v392, %v396
          %vm398 = vweird.f32 %v371
          %vm399 = vweird.f32 %v392
          %vm400 = vmor %vm398, %vm399
          %v401 = vsel %vm400, %v392, %v397
          %v402 = vmul.f32 %v351, %v381
          %v403 = vmul.f32 %v352, %v391
          %v404 = vmul.f32 %v353, %v401
          %v405 = vld [vmem:[%s2] sm:$0x1]
          %v407 = vperm.slane %v405, 0
          %v409 = vmul.f32 %v402, %v407
          %v410 = vmul.f32 %v403, %v407
          %v411 = vmul.f32 %v404, %v407
          %v412 = vld [vmem:[%s3] sm:$0x1]
          %v414 = vperm.slane %v412, 0
          %v416 = vadd.f32 %v409, %v414
          %v417 = vadd.f32 %v410, %v414
          %v418 = vadd.f32 %v411, %v414
          %v419 = vpack.c.bf16 %v416, %v416
          %v420 = vpack.c.bf16 %v417, %v417
          %v421 = vpack.c.bf16 %v418, %v418
          %vm422 = vcmask 519168
          %423 = vst.msk [vmem:[#allocation3] sm:$0xf] %vm422, %v419
          %424 = vst.msk [vmem:[#allocation3 + $0x4] sm:$0xf] %vm422, %v420
          %425 = vst.msk [vmem:[#allocation3 + $0x8] sm:$0xf] %vm422, %v421
        $region82: #{deepvit_forward.9} parent=69 // pred_fallthru
          _
        %v426 = vld [vmem:[#allocation3] sm:$0xf]
        %v427 = vld [vmem:[#allocation3 + $0x4] sm:$0xf]
        %v428 = vld [vmem:[#allocation3 + $0x8] sm:$0xf]
        %v429 = vld [vmem:[#allocation2] sm:$0xff]
        %v430 = vld [vmem:[#allocation2 + $0x8] sm:$0xff]
        %v431 = vld [vmem:[#allocation2 + $0x10] sm:$0xff]
        %v432 = vld [vmem:[%s275] sm:$0xff]
        %v433 = vld [vmem:[%s275 + $0x8] sm:$0xff]
        %v434 = vld [vmem:[%s275 + $0x10] sm:$0xff]
        %v435 = vld [vmem:[%s275 + $0x18] sm:$0xff]
        %v436 = vld [vmem:[%s275 + $0x20] sm:$0xff]
        %v437 = vld [vmem:[%s275 + $0x28] sm:$0xff]
        %v438 = vld [vmem:[%s275 + $0x30] sm:$0xff]
        %v439 = vld [vmem:[%s275 + $0x38] sm:$0xff]
        %v440 = vpack.c.bf16 %v433, %v432
        %v441 = vpack.c.bf16 %v435, %v434
        %v442 = vpack.c.bf16 %v437, %v436
        %v443 = vpack.c.bf16 %v439, %v438
        %v447 = vunpack.c.l.b16 %v426
        %v448 = vunpack.c.l.b16 %v427
        %v449 = vunpack.c.l.b16 %v428
        %v450 = vpack.c.b16 %v448, %v447
        %v451 = vpack.c.b16 %v449, %v449
        %vm452 = vcmask 523264
        %v454 = vsel %vm452, %v450, 0
        %v457 = vsel %vm452, %v451, 0
        %459 = vmatpush.bf16.msra.mxu0 0
        %460 = vmatpush.bf16.msra.mxu0 0
        %461 = vmatpush.bf16.msra.mxu0 0
        %462 = vmatpush.bf16.msra.mxu0 0
        %463 = vmatpush.bf16.msra.mxu0 %v443
        %464 = vmatpush.bf16.msra.mxu0 %v442
        %465 = vmatpush.bf16.msra.mxu0 %v441
        %466 = vmatpush.bf16.msra.mxu0 %v440
        %467 = vmatmul.bf16.gmra.mxu0 %v454
        %v468 = vpop.f32.mrf.mxu0
        %v469 = vadd.f32 0.0, %v468
        %v470 = vpop.f32.mrf.mxu0
        %v471 = vadd.f32 0.0, %v470
        %472 = vmatmul.bf16.gmra.mxu0 %v457
        %v473 = vpop.f32.mrf.mxu0
        %v474 = vadd.f32 0.0, %v473
        %v475 = vpop.f32.mrf.mxu0
        %476 = vdwg.mxu0
        %v477 = vadd.f32 %v429, %v469
        %v478 = vadd.f32 %v430, %v471
        %v479 = vadd.f32 %v431, %v474
        %480 = vst [vmem:[#allocation2] sm:$0xff] %v477
        %481 = vst [vmem:[#allocation2 + $0x8] sm:$0xff] %v478
        %482 = vst [vmem:[#allocation2 + $0x10] sm:$0xff] %v479
        // Predicated region
        $region83: #{deepvit_forward.9} parent=69 // pred_check
          %p483 = pneg %p317
        $region84: #{deepvit_forward.9} parent=69 // pred_check_branch
          %485 = sbr.rel (%p483) target = $region86
        $region85: #{deepvit_forward.9} parent=69 // pred_region
          %v486 = vld [vmem:[#allocation2] sm:$0xff]
          %v487 = vld [vmem:[#allocation2 + $0x8] sm:$0xff]
          %v488 = vld [vmem:[#allocation2 + $0x10] sm:$0xff]
          %489 = vst [vmem:[%s304] sm:$0xff] %v486
          %490 = vst [vmem:[%s304 + $0x8] sm:$0xff] %v487
          %491 = vst [vmem:[%s304 + $0x10] sm:$0xff] %v488
        $region86: #{deepvit_forward.9} parent=69 // pred_fallthru
          _
        %s492 = sand.u32 %s142, 1
        %s493 = sand.u32 %s142, 1
        %s494 = smul.addr %s493, 24
        %s495 = scalar_lea.vmem [#allocation5], %s494
        // Predicated region
        $region87: #{deepvit_forward.9} parent=69 // pred_check
          %p496 = pneg %p152
        $region88: #{deepvit_forward.9} parent=69 // pred_check_branch
          %498 = sbr.rel (%p496) target = $region90
        $region89: #{deepvit_forward.9} parent=69 // pred_region
          %s499 = smul.u32 3, %s20
          %s500 = smul.addr %s499, 3
          %s501 = sadd.s32 %s21, %s500
          %s502 = smul.addr %s501, 8
          %s503 = scalar_lea.vmem %s4, %s502
          // Predicated region
          $region91: #{deepvit_forward.9} parent=89 // pred_check
            _
          $region92: #{deepvit_forward.9} parent=89 // pred_check_branch
            %505 = sbr.rel (0) target = $region94
          $region93: #{deepvit_forward.9} parent=89 // pred_region
            // Predicated region
            $region95: #{deepvit_forward.9} parent=93 // pred_check
              _
            $region96: #{deepvit_forward.9} parent=93 // pred_check_branch
              %507 = sbr.rel (0) target = $region98
            $region97: #{deepvit_forward.9} parent=93 // pred_region
              // Predicated region
              $region110: #{deepvit_forward.9} parent=97 // pred_check
                _
              $region111: #{deepvit_forward.9} parent=97 // pred_check_branch
                %527 = sbr.rel (0) target = $region113
              $region112: #{deepvit_forward.9} parent=97 // pred_region
                loop: start=0, step=1, limit=1
                $region114: #{deepvit_forward.9} parent=112 // loop_pre_header
                  _
                $region115: #{deepvit_forward.9} parent=112 // loop_header
                  %s529 = sphi 0, %s533
                  %p530 = scmp.ge.s32.totalorder %s529, 1
                  %s534 = sphi %s495, %s495
                  %s535 = sphi %s503, %s503
                $region116: #{deepvit_forward.9} parent=112 // loop_header_branch
                  %532 = sbr.rel (%p530) target = $region120
                $region117: #{deepvit_forward.9} parent=112 // loop_body
                  %v536 = vld [vmem:[%s534] sm:$0xff]
                  %537 = vst [vmem:[%s535] sm:$0xff] %v536
                  %v538 = vld [vmem:[%s534 + $0x8] sm:$0xff]
                  %539 = vst [vmem:[%s535 + $0x18] sm:$0xff] %v538
                  %v540 = vld [vmem:[%s534 + $0x10] sm:$0xff]
                  %541 = vst [vmem:[%s535 + $0x30] sm:$0xff] %v540
                $region118: #{deepvit_forward.9} parent=112 // loop_footer
                  %s533 = sadd.s32 1, %s529
                $region119: #{deepvit_forward.9} parent=112 // loop_footer_branch
                  %528 = sbr.rel target = $region115
                $region120: #{deepvit_forward.9} parent=112 // loop_exit
                  _
              $region113: #{deepvit_forward.9} parent=97 // pred_fallthru
                _
              // Predicated region
              $region121: #{deepvit_forward.9} parent=97 // pred_check
                _
              $region122: #{deepvit_forward.9} parent=97 // pred_check_branch
                %543 = sbr.rel target = $region124
              $region123: #{deepvit_forward.9} parent=97 // pred_region
                _
              $region124: #{deepvit_forward.9} parent=97 // pred_fallthru
                _
            $region98: #{deepvit_forward.9} parent=93 // pred_fallthru
              _
            // Predicated region
            $region99: #{deepvit_forward.9} parent=93 // pred_check
              _
            $region100: #{deepvit_forward.9} parent=93 // pred_check_branch
              %509 = sbr.rel target = $region102
            $region101: #{deepvit_forward.9} parent=93 // pred_region
              %s511 = ssub.s32 256, 1
              loop: start=0, step=1, limit=1
              $region103: #{deepvit_forward.9} parent=101 // loop_pre_header
                _
              $region104: #{deepvit_forward.9} parent=101 // loop_header
                %s513 = sphi 0, %s517
                %p514 = scmp.ge.s32.totalorder %s513, 1
                %s518 = sphi %s495, %s495
                %s519 = sphi %s503, %s503
              $region105: #{deepvit_forward.9} parent=101 // loop_header_branch
                %516 = sbr.rel (%p514) target = $region109
              $region106: #{deepvit_forward.9} parent=101 // loop_body
                %v520 = vld [vmem:[%s518] sm:%s511]
                %521 = vst [vmem:[%s519] sm:%s511] %v520
                %v522 = vld [vmem:[%s518 + $0x8] sm:%s511]
                %523 = vst [vmem:[%s519 + $0x18] sm:%s511] %v522
                %v524 = vld [vmem:[%s518 + $0x10] sm:%s511]
                %525 = vst [vmem:[%s519 + $0x30] sm:%s511] %v524
              $region107: #{deepvit_forward.9} parent=101 // loop_footer
                %s517 = sadd.s32 1, %s513
              $region108: #{deepvit_forward.9} parent=101 // loop_footer_branch
                %512 = sbr.rel target = $region104
              $region109: #{deepvit_forward.9} parent=101 // loop_exit
                _
            $region102: #{deepvit_forward.9} parent=93 // pred_fallthru
              _
          $region94: #{deepvit_forward.9} parent=89 // pred_fallthru
            _
          %544 = vnop
        $region90: #{deepvit_forward.9} parent=69 // pred_fallthru
          _
      $region70: #{deepvit_forward.9} parent=5 // pred_fallthru
        _
      %p545 = scmp.le.s32.totalorder 2, %s10
      // Predicated region
      $region125: #{deepvit_forward.9} parent=5 // pred_check
        %p546 = pneg %p545
      $region126: #{deepvit_forward.9} parent=5 // pred_check_branch
        %548 = sbr.rel (%p546) target = $region128
      $region127: #{deepvit_forward.9} parent=5 // pred_region
        %s549 = ssub.s32 %s10, 2
        // Predicated region
        $region129: #{deepvit_forward.9} parent=127 // pred_check
          %p550 = pneg %p158
        $region130: #{deepvit_forward.9} parent=127 // pred_check_branch
          %552 = sbr.rel (%p550) target = $region132
        $region131: #{deepvit_forward.9} parent=127 // pred_region
          %s553 = sand.u32 %s143, 1
          %s554 = sand.u32 %s143, 1
          %s555 = smul.addr %s554, 24
          %s556 = scalar_lea.vmem [#allocation5], %s555
        $region132: #{deepvit_forward.9} parent=127 // pred_fallthru
          _
      $region128: #{deepvit_forward.9} parent=5 // pred_fallthru
        _
    $region6: #{deepvit_forward.9} parent=1 // loop_footer
      %s14 = sadd.s32 1, %s10
    $region7: #{deepvit_forward.9} parent=1 // loop_footer_branch
      %9 = sbr.rel target = $region3
    $region8: #{deepvit_forward.9} parent=1 // loop_exit
      _

// kernel: deepvit_forward.11
$region0: #{deepvit_forward.11}
  #allocation0 [shape = 'u32[]', space=smem, size = 0x4, offset = 0x4, fixed_abs, tag = 'smem constant byte address 0x4 - core index']
  #allocation1 [shape = 'u32[72,128]{1,0:T(1,128)}', space=vmem, size = 0x9000, scoped, tag = 'internal scratch']
  %s0 = inlined_call_operand.vmem [shape: f32[48,64], index: 0, kind: input, shape index: {}]
  %s1 = inlined_call_operand.vmem [shape: f32[1,64], index: 1, kind: input, shape index: {}]
  %s2 = inlined_call_operand.vmem [shape: f32[1,64], index: 2, kind: input, shape index: {}]
  %s3 = inlined_call_operand.vmem [shape: f32[64,128], index: 3, kind: input, shape index: {}]
  %s4 = inlined_call_operand.vmem [shape: f32[1,128], index: 4, kind: input, shape index: {}]
  %s5 = inlined_call_operand.vmem [shape: f32[128,64], index: 5, kind: input, shape index: {}]
  %s6 = inlined_call_operand.vmem [shape: f32[1,64], index: 6, kind: input, shape index: {}]
  %s7 = inlined_call_operand.vmem [shape: f32[48,64], index: 7, kind: output, shape index: {}]
  %s8 = sld [smem:[#allocation0]]
  $region61: #{deepvit_forward.11} parent=0
    _
  %s10 = ssub.s32 1, %s8
  %s11 = scalar_select 0, %s10, %s8
  loop: start=0, step=1, limit=4
  $region2: #{deepvit_forward.11} parent=0 // loop_pre_header
    _
  $region3: #{deepvit_forward.11} parent=0 // loop_header
    %s13 = sphi 0, %s17
    %p14 = scmp.ge.s32.totalorder %s13, 4
    %s23 = sphi 0, %s25
    %s26 = sphi 0, %s23
    %s27 = sphi 0, %s26
    %s43 = sphi 0, %s27
    %s47 = sphi 0, %s47
    %s49 = sphi 0, %s47
    %s50 = sphi 0, %s49
    %s64 = sphi 0, %s50
    %s68 = sphi 0, %s68
    %s70 = sphi 0, %s68
    %s71 = sphi 0, %s70
    %s85 = sphi 0, %s71
    %s89 = sphi 0, %s89
    %s91 = sphi 0, %s89
    %s92 = sphi 0, %s91
    %s106 = sphi 0, %s92
    %s110 = sphi 0, %s110
    %s112 = sphi 0, %s110
    %s113 = sphi 0, %s112
    %s127 = sphi 0, %s113
    %s131 = sphi 0, %s131
    %s133 = sphi 0, %s131
    %s134 = sphi 0, %s133
    %s148 = sphi 0, %s134
    %s152 = sphi 0, %s152
    %s154 = sphi 0, %s152
    %s155 = sphi 0, %s154
    %s169 = sphi 0, %s155
    %s175 = sphi 0, %s177
    %s178 = sphi 0, %s175
    %s179 = sphi 0, %s178
    %s195 = sphi 0, %s179
  $region4: #{deepvit_forward.11} parent=0 // loop_header_branch
    %16 = sbr.rel (%p14) target = $region8
  $region5: #{deepvit_forward.11} parent=0 // loop_body
    %s18 = ssub.s32 %s13, 1
    %s19 = ssub.s32 %s13, 2
    %s20 = sadd.s32 %s13, 1
    %s21 = ssub.s32 %s13, %s20
    %p22 = scmp.eq.s32.totalorder %s21, 0
    %s24 = sadd.s32 %s23, 1
    %s25 = scalar_select %p22, %s23, %s24
    %p28 = pneg %p22
    %p29 = scmp.eq.s32.totalorder %s13, 1
    %p30 = por %p28, %p29
    %p31 = scmp.ne.s32.totalorder %s23, %s26
    %p32 = scmp.eq.s32.totalorder %s13, 0
    %p33 = por %p31, %p32
    %p34 = scmp.ne.s32.totalorder %s23, %s26
    %p35 = scmp.eq.s32.totalorder %s18, 1
    %p36 = por %p34, %p35
    %p37 = scmp.ne.s32.totalorder %s26, %s27
    %p38 = scmp.eq.s32.totalorder %s18, 0
    %p39 = por %p37, %p38
    %p40 = scmp.ne.s32.totalorder %s26, %s27
    %p41 = scmp.eq.s32.totalorder %s19, 1
    %p42 = por %p40, %p41
    %p44 = scmp.ne.s32.totalorder %s27, %s43
    %p45 = scmp.eq.s32.totalorder %s19, 0
    %p46 = por %p44, %p45
    %s48 = sadd.s32 %s47, 1
    %p51 = scmp.eq.s32.totalorder %s13, 1
    %p52 = scmp.ne.s32.totalorder %s47, %s49
    %p53 = scmp.eq.s32.totalorder %s13, 0
    %p54 = por %p52, %p53
    %p55 = scmp.ne.s32.totalorder %s47, %s49
    %p56 = scmp.eq.s32.totalorder %s18, 1
    %p57 = por %p55, %p56
    %p58 = scmp.ne.s32.totalorder %s49, %s50
    %p59 = scmp.eq.s32.totalorder %s18, 0
    %p60 = por %p58, %p59
    %p61 = scmp.ne.s32.totalorder %s49, %s50
    %p62 = scmp.eq.s32.totalorder %s19, 1
    %p63 = por %p61, %p62
    %p65 = scmp.ne.s32.totalorder %s50, %s64
    %p66 = scmp.eq.s32.totalorder %s19, 0
    %p67 = por %p65, %p66
    %s69 = sadd.s32 %s68, 1
    %p72 = scmp.eq.s32.totalorder %s13, 1
    %p73 = scmp.ne.s32.totalorder %s68, %s70
    %p74 = scmp.eq.s32.totalorder %s13, 0
    %p75 = por %p73, %p74
    %p76 = scmp.ne.s32.totalorder %s68, %s70
    %p77 = scmp.eq.s32.totalorder %s18, 1
    %p78 = por %p76, %p77
    %p79 = scmp.ne.s32.totalorder %s70, %s71
    %p80 = scmp.eq.s32.totalorder %s18, 0
    %p81 = por %p79, %p80
    %p82 = scmp.ne.s32.totalorder %s70, %s71
    %p83 = scmp.eq.s32.totalorder %s19, 1
    %p84 = por %p82, %p83
    %p86 = scmp.ne.s32.totalorder %s71, %s85
    %p87 = scmp.eq.s32.totalorder %s19, 0
    %p88 = por %p86, %p87
    %s90 = sadd.s32 %s89, 1
    %p93 = scmp.eq.s32.totalorder %s13, 1
    %p94 = scmp.ne.s32.totalorder %s89, %s91
    %p95 = scmp.eq.s32.totalorder %s13, 0
    %p96 = por %p94, %p95
    %p97 = scmp.ne.s32.totalorder %s89, %s91
    %p98 = scmp.eq.s32.totalorder %s18, 1
    %p99 = por %p97, %p98
    %p100 = scmp.ne.s32.totalorder %s91, %s92
    %p101 = scmp.eq.s32.totalorder %s18, 0
    %p102 = por %p100, %p101
    %p103 = scmp.ne.s32.totalorder %s91, %s92
    %p104 = scmp.eq.s32.totalorder %s19, 1
    %p105 = por %p103, %p104
    %p107 = scmp.ne.s32.totalorder %s92, %s106
    %p108 = scmp.eq.s32.totalorder %s19, 0
    %p109 = por %p107, %p108
    %s111 = sadd.s32 %s110, 1
    %p114 = scmp.eq.s32.totalorder %s13, 1
    %p115 = scmp.ne.s32.totalorder %s110, %s112
    %p116 = scmp.eq.s32.totalorder %s13, 0
    %p117 = por %p115, %p116
    %p118 = scmp.ne.s32.totalorder %s110, %s112
    %p119 = scmp.eq.s32.totalorder %s18, 1
    %p120 = por %p118, %p119
    %p121 = scmp.ne.s32.totalorder %s112, %s113
    %p122 = scmp.eq.s32.totalorder %s18, 0
    %p123 = por %p121, %p122
    %p124 = scmp.ne.s32.totalorder %s112, %s113
    %p125 = scmp.eq.s32.totalorder %s19, 1
    %p126 = por %p124, %p125
    %p128 = scmp.ne.s32.totalorder %s113, %s127
    %p129 = scmp.eq.s32.totalorder %s19, 0
    %p130 = por %p128, %p129
    %s132 = sadd.s32 %s131, 1
    %p135 = scmp.eq.s32.totalorder %s13, 1
    %p136 = scmp.ne.s32.totalorder %s131, %s133
    %p137 = scmp.eq.s32.totalorder %s13, 0
    %p138 = por %p136, %p137
    %p139 = scmp.ne.s32.totalorder %s131, %s133
    %p140 = scmp.eq.s32.totalorder %s18, 1
    %p141 = por %p139, %p140
    %p142 = scmp.ne.s32.totalorder %s133, %s134
    %p143 = scmp.eq.s32.totalorder %s18, 0
    %p144 = por %p142, %p143
    %p145 = scmp.ne.s32.totalorder %s133, %s134
    %p146 = scmp.eq.s32.totalorder %s19, 1
    %p147 = por %p145, %p146
    %p149 = scmp.ne.s32.totalorder %s134, %s148
    %p150 = scmp.eq.s32.totalorder %s19, 0
    %p151 = por %p149, %p150
    %s153 = sadd.s32 %s152, 1
    %p156 = scmp.eq.s32.totalorder %s13, 1
    %p157 = scmp.ne.s32.totalorder %s152, %s154
    %p158 = scmp.eq.s32.totalorder %s13, 0
    %p159 = por %p157, %p158
    %p160 = scmp.ne.s32.totalorder %s152, %s154
    %p161 = scmp.eq.s32.totalorder %s18, 1
    %p162 = por %p160, %p161
    %p163 = scmp.ne.s32.totalorder %s154, %s155
    %p164 = scmp.eq.s32.totalorder %s18, 0
    %p165 = por %p163, %p164
    %p166 = scmp.ne.s32.totalorder %s154, %s155
    %p167 = scmp.eq.s32.totalorder %s19, 1
    %p168 = por %p166, %p167
    %p170 = scmp.ne.s32.totalorder %s155, %s169
    %p171 = scmp.eq.s32.totalorder %s19, 0
    %p172 = por %p170, %p171
    %s173 = ssub.s32 %s13, %s20
    %p174 = scmp.eq.s32.totalorder %s173, 0
    %s176 = sadd.s32 %s175, 1
    %s177 = scalar_select %p174, %s175, %s176
    %p180 = pneg %p174
    %p181 = scmp.eq.s32.totalorder %s13, 1
    %p182 = por %p180, %p181
    %p183 = scmp.ne.s32.totalorder %s175, %s178
    %p184 = scmp.eq.s32.totalorder %s13, 0
    %p185 = por %p183, %p184
    %p186 = scmp.ne.s32.totalorder %s175, %s178
    %p187 = scmp.eq.s32.totalorder %s18, 1
    %p188 = por %p186, %p187
    %p189 = scmp.ne.s32.totalorder %s178, %s179
    %p190 = scmp.eq.s32.totalorder %s18, 0
    %p191 = por %p189, %p190
    %p192 = scmp.ne.s32.totalorder %s178, %s179
    %p193 = scmp.eq.s32.totalorder %s19, 1
    %p194 = por %p192, %p193
    %p196 = scmp.ne.s32.totalorder %s179, %s195
    %p197 = scmp.eq.s32.totalorder %s19, 0
    %p198 = por %p196, %p197
    %p199 = scmp.le.s32.totalorder 1, %s13
    %p200 = scmp.lt.s32.totalorder %s13, 3
    %p201 = pnand %p199, %p200
    %p202 = pneg %p201
    // Predicated region
    $region9: #{deepvit_forward.11} parent=5 // pred_check
      _
    $region10: #{deepvit_forward.11} parent=5 // pred_check_branch
      %204 = sbr.rel (%p201) target = $region12
    $region11: #{deepvit_forward.11} parent=5 // pred_region
      %s205 = ssub.s32 %s13, 1
      // Predicated region
      $region13: #{deepvit_forward.11} parent=11 // pred_check
        %p206 = pneg %p60
      $region14: #{deepvit_forward.11} parent=11 // pred_check_branch
        %208 = sbr.rel (%p206) target = $region16
      $region15: #{deepvit_forward.11} parent=11 // pred_region
        _
      $region16: #{deepvit_forward.11} parent=11 // pred_fallthru
        _
      // Predicated region
      $region17: #{deepvit_forward.11} parent=11 // pred_check
        %p209 = pneg %p81
      $region18: #{deepvit_forward.11} parent=11 // pred_check_branch
        %211 = sbr.rel (%p209) target = $region20
      $region19: #{deepvit_forward.11} parent=11 // pred_region
        _
      $region20: #{deepvit_forward.11} parent=11 // pred_fallthru
        _
      // Predicated region
      $region21: #{deepvit_forward.11} parent=11 // pred_check
        %p212 = pneg %p102
      $region22: #{deepvit_forward.11} parent=11 // pred_check_branch
        %214 = sbr.rel (%p212) target = $region24
      $region23: #{deepvit_forward.11} parent=11 // pred_region
        _
      $region24: #{deepvit_forward.11} parent=11 // pred_fallthru
        _
      // Predicated region
      $region25: #{deepvit_forward.11} parent=11 // pred_check
        %p215 = pneg %p123
      $region26: #{deepvit_forward.11} parent=11 // pred_check_branch
        %217 = sbr.rel (%p215) target = $region28
      $region27: #{deepvit_forward.11} parent=11 // pred_region
        _
      $region28: #{deepvit_forward.11} parent=11 // pred_fallthru
        _
      // Predicated region
      $region29: #{deepvit_forward.11} parent=11 // pred_check
        %p218 = pneg %p144
      $region30: #{deepvit_forward.11} parent=11 // pred_check_branch
        %220 = sbr.rel (%p218) target = $region32
      $region31: #{deepvit_forward.11} parent=11 // pred_region
        _
      $region32: #{deepvit_forward.11} parent=11 // pred_fallthru
        _
      // Predicated region
      $region33: #{deepvit_forward.11} parent=11 // pred_check
        %p221 = pneg %p165
      $region34: #{deepvit_forward.11} parent=11 // pred_check_branch
        %223 = sbr.rel (%p221) target = $region36
      $region35: #{deepvit_forward.11} parent=11 // pred_region
        _
      $region36: #{deepvit_forward.11} parent=11 // pred_fallthru
        _
    $region12: #{deepvit_forward.11} parent=5 // pred_fallthru
      _
    %p224 = scmp.lt.s32.totalorder %s13, 2
    // Predicated region
    $region37: #{deepvit_forward.11} parent=5 // pred_check
      %p225 = pneg %p224
    $region38: #{deepvit_forward.11} parent=5 // pred_check_branch
      %227 = sbr.rel (%p225) target = $region40
    $region39: #{deepvit_forward.11} parent=5 // pred_region
      // Predicated region
      $region41: #{deepvit_forward.11} parent=39 // pred_check
        %p228 = pneg %p33
      $region42: #{deepvit_forward.11} parent=39 // pred_check_branch
        %230 = sbr.rel (%p228) target = $region44
      $region43: #{deepvit_forward.11} parent=39 // pred_region
        %s231 = smul.u32 3, %s13
        %p232 = scmp.lt.s32.totalorder %s231, 5
        %s233 = scalar_select %p232, %s231, 5
        %s234 = smul.addr %s233, 8
        %s235 = scalar_lea.vmem %s0, %s234
        %s236 = smul.u32 3, %s13
      $region44: #{deepvit_forward.11} parent=39 // pred_fallthru
        _
    $region40: #{deepvit_forward.11} parent=5 // pred_fallthru
      _
    %p237 = scmp.le.s32.totalorder 1, %s13
    %p238 = scmp.lt.s32.totalorder %s13, 3
    %p239 = pnand %p237, %p238
    %p240 = pneg %p239
    // Predicated region
    $region45: #{deepvit_forward.11} parent=5 // pred_check
      _
    $region46: #{deepvit_forward.11} parent=5 // pred_check_branch
      %242 = sbr.rel (%p239) target = $region48
    $region47: #{deepvit_forward.11} parent=5 // pred_region
      %s243 = ssub.s32 %s13, 1
      %s244 = smul.u32 3, %s18
      %p245 = scmp.lt.s32.totalorder %s244, 5
      %s246 = scalar_select %p245, %s244, 5
      %s247 = smul.addr %s246, 8
      %s248 = scalar_lea.vmem %s0, %s247
      %p249 = pneg %p39
      %p250 = pneg %p36
      %p251 = pneg %p60
      %p252 = pneg %p57
      %p253 = pneg %p81
      %p254 = pneg %p78
      %p255 = pneg %p102
      %p256 = pneg %p99
      %p257 = pneg %p123
      %p258 = pneg %p120
      %p259 = pneg %p144
      %p260 = pneg %p141
      %p261 = pneg %p165
      %p262 = pneg %p162
      %p263 = pneg %p191
      %p264 = pneg %p188
      %s265 = smul.u32 3, %s18
      %p266 = scmp.lt.s32.totalorder %s265, 5
      %s267 = scalar_select %p266, %s265, 5
      %s268 = smul.addr %s267, 8
      %s269 = scalar_lea.vmem %s7, %s268
      %s270 = smul.u32 3, %s18
      %p271 = scmp.lt.s32.totalorder %s270, 5
      %s272 = scalar_select %p271, %s270, 5
      %s273 = smul.addr %s272, 8
      %s274 = scalar_lea.vmem %s0, %s273
      %s275 = smul.u32 3, %s18
      %s276 = smul.u32 3, %s18
      %p277 = scmp.lt.s32.totalorder %s276, 5
      %s278 = scalar_select %p277, %s276, 5
      %s279 = smul.addr %s278, 8
      %s280 = scalar_lea.vmem %s7, %s279
      %s281 = smul.u32 3, %s18
      %v283 = vld [vmem:[%s274] sm:$0xff]
      %v284 = vld [vmem:[%s274 + $0x8] sm:$0xff]
      %v285 = vld [vmem:[%s274 + $0x10] sm:$0xff]
      %vm286 = vcmask 523264
      %v287 = vsel %vm286, %v283, 0.0
      %288 = vadd.xlane.f32.xlu0 %v287
      %v289 = vpop.xlane.xlu0 %288
      %v290 = vsel %vm286, %v284, 0.0
      %291 = vadd.xlane.f32.xlu0 %v290
      %v292 = vpop.xlane.xlu0 %291
      %v293 = vsel %vm286, %v285, 0.0
      %294 = vadd.xlane.f32.xlu0 %v293
      %v295 = vpop.xlane.xlu0 %294
      %v296 = vrcp.pop 64.0
      %v297 = vmul.f32 64.0, %v296
      %v298 = vsub.f32 1.0, %v297
      %v299 = vmul.f32 %v296, %v298
      %v300 = vadd.f32 %v296, %v299
      %vm301 = vweird.f32 %v296
      %v302 = vsel %vm301, %v296, %v300
      %v303 = vmul.f32 %v289, %v302
      %v304 = vmul.f32 %v292, %v302
      %v305 = vmul.f32 %v295, %v302
      %v306 = vsub.f32 %v283, %v303
      %v307 = vsub.f32 %v284, %v304
      %v308 = vsub.f32 %v285, %v305
      %v309 = vmul.f32 %v306, %v306
      %v310 = vmul.f32 %v307, %v307
      %v311 = vmul.f32 %v308, %v308
      %v312 = vsel %vm286, %v309, 0.0
      %313 = vadd.xlane.f32.xlu0 %v312
      %v314 = vpop.xlane.xlu0 %313
      %v315 = vsel %vm286, %v310, 0.0
      %316 = vadd.xlane.f32.xlu0 %v315
      %v317 = vpop.xlane.xlu0 %316
      %v318 = vsel %vm286, %v311, 0.0
      %319 = vadd.xlane.f32.xlu0 %v318
      %v320 = vpop.xlane.xlu0 %319
      %v321 = vmul.f32 %v314, %v302
      %v322 = vmul.f32 %v317, %v302
      %v323 = vmul.f32 %v320, %v302
      %v324 = vadd.f32 %v321, 1e-05
      %v325 = vadd.f32 %v322, 1e-05
      %v326 = vadd.f32 %v323, 1e-05
      %v327 = vrsqrt.pop %v324
      %v328 = vmul.f32 %v327, %v324
      %v329 = vmul.f32 %v328, %v327
      %v330 = vmul.f32 0.5, %v329
      %v331 = vsub.f32 1.5, %v330
      %v332 = vmul.f32 %v327, %v331
      %vm333 = vweird.f32 %v324
      %vm334 = vweird.f32 %v327
      %vm335 = vmor %vm333, %vm334
      %v336 = vsel %vm335, %v327, %v332
      %v337 = vrsqrt.pop %v325
      %v338 = vmul.f32 %v337, %v325
      %v339 = vmul.f32 %v338, %v337
      %v340 = vmul.f32 0.5, %v339
      %v341 = vsub.f32 1.5, %v340
      %v342 = vmul.f32 %v337, %v341
      %vm343 = vweird.f32 %v325
      %vm344 = vweird.f32 %v337
      %vm345 = vmor %vm343, %vm344
      %v346 = vsel %vm345, %v337, %v342
      %v347 = vrsqrt.pop %v326
      %v348 = vmul.f32 %v347, %v326
      %v349 = vmul.f32 %v348, %v347
      %v350 = vmul.f32 0.5, %v349
      %v351 = vsub.f32 1.5, %v350
      %v352 = vmul.f32 %v347, %v351
      %vm353 = vweird.f32 %v326
      %vm354 = vweird.f32 %v347
      %vm355 = vmor %vm353, %vm354
      %v356 = vsel %vm355, %v347, %v352
      %v357 = vmul.f32 %v306, %v336
      %v358 = vmul.f32 %v307, %v346
      %v359 = vmul.f32 %v308, %v356
      %v360 = vld [vmem:[%s1] sm:$0x1]
      %v362 = vperm.slane %v360, 0
      %v364 = vmul.f32 %v357, %v362
      %v365 = vmul.f32 %v358, %v362
      %v366 = vmul.f32 %v359, %v362
      %v367 = vld [vmem:[%s2] sm:$0x1]
      %v369 = vperm.slane %v367, 0
      %v371 = vadd.f32 %v364, %v369
      %v372 = vadd.f32 %v365, %v369
      %v373 = vadd.f32 %v366, %v369
      %v374 = vpack.c.bf16 %v372, %v371
      %v375 = vpack.c.bf16 %v373, %v373
      %v376 = vld [vmem:[%s3] sm:$0xff]
      %v377 = vld [vmem:[%s3 + $0x8] sm:$0xff]
      %v378 = vld [vmem:[%s3 + $0x10] sm:$0xff]
      %v379 = vld [vmem:[%s3 + $0x18] sm:$0xff]
      %v380 = vld [vmem:[%s3 + $0x20] sm:$0xff]
      %v381 = vld [vmem:[%s3 + $0x28] sm:$0xff]
      %v382 = vld [vmem:[%s3 + $0x30] sm:$0xff]
      %v383 = vld [vmem:[%s3 + $0x38] sm:$0xff]
      %v384 = vpack.c.bf16 %v377, %v376
      %v385 = vpack.c.bf16 %v379, %v378
      %v386 = vpack.c.bf16 %v381, %v380
      %v387 = vpack.c.bf16 %v383, %v382
      %v388 = vld [vmem:[%s4] sm:$0x1]
      %v390 = vperm.slane %v388, 0
      %v393 = vsel %vm286, %v374, 0
      %v396 = vsel %vm286, %v375, 0
      %398 = vmatpush.bf16.msra.mxu0 0
      %399 = vmatpush.bf16.msra.mxu0 0
      %400 = vmatpush.bf16.msra.mxu0 0
      %401 = vmatpush.bf16.msra.mxu0 0
      %402 = vmatpush.bf16.msra.mxu0 %v387
      %403 = vmatpush.bf16.msra.mxu0 %v386
      %404 = vmatpush.bf16.msra.mxu0 %v385
      %405 = vmatpush.bf16.msra.mxu0 %v384
      %406 = vmatmul.bf16.gmra.mxu0 %v393
      %v407 = vpop.f32.mrf.mxu0
      %v408 = vadd.f32 %v390, %v407
      %v409 = vpop.f32.mrf.mxu0
      %v410 = vadd.f32 %v390, %v409
      %411 = vmatmul.bf16.gmra.mxu0 %v396
      %v412 = vpop.f32.mrf.mxu0
      %v413 = vadd.f32 %v390, %v412
      %v414 = vpop.f32.mrf.mxu0
      %415 = vdwg.mxu0
      %v416 = vmul.f32 %v408, 0.5
      %v417 = vmul.f32 %v410, 0.5
      %v418 = vmul.f32 %v413, 0.5
      %v419 = vmul.f32 %v408, 0.044715
      %v420 = vmul.f32 %v410, 0.044715
      %v421 = vmul.f32 %v413, 0.044715
      %v422 = vmul.f32 %v419, %v408
      %v423 = vmul.f32 %v420, %v410
      %v424 = vmul.f32 %v421, %v413
      %v425 = vmul.f32 %v422, %v408
      %v426 = vmul.f32 %v423, %v410
      %v427 = vmul.f32 %v424, %v413
      %v428 = vadd.f32 %v408, %v425
      %v429 = vadd.f32 %v410, %v426
      %v430 = vadd.f32 %v413, %v427
      %v431 = vmul.f32 %v428, 0.7978846
      %v432 = vmul.f32 %v429, 0.7978846
      %v433 = vmul.f32 %v430, 0.7978846
      %v434 = vtanh.pop %v431
      %v435 = vtanh.pop %v432
      %v436 = vtanh.pop %v433
      %v437 = vadd.f32 %v434, 1.0
      %v438 = vadd.f32 %v435, 1.0
      %v439 = vadd.f32 %v436, 1.0
      %v440 = vmul.f32 %v416, %v437
      %v441 = vmul.f32 %v417, %v438
      %v442 = vmul.f32 %v418, %v439
      %v443 = vpack.c.bf16 %v441, %v440
      %v444 = vpack.c.bf16 %v442, %v442
      %v445 = vld [vmem:[%s5] sm:$0xff]
      %v446 = vld [vmem:[%s5 + $0x8] sm:$0xff]
      %v447 = vld [vmem:[%s5 + $0x10] sm:$0xff]
      %v448 = vld [vmem:[%s5 + $0x18] sm:$0xff]
      %v449 = vld [vmem:[%s5 + $0x20] sm:$0xff]
      %v450 = vld [vmem:[%s5 + $0x28] sm:$0xff]
      %v451 = vld [vmem:[%s5 + $0x30] sm:$0xff]
      %v452 = vld [vmem:[%s5 + $0x38] sm:$0xff]
      %v453 = vld [vmem:[%s5 + $0x40] sm:$0xff]
      %v454 = vld [vmem:[%s5 + $0x48] sm:$0xff]
      %v455 = vld [vmem:[%s5 + $0x50] sm:$0xff]
      %v456 = vld [vmem:[%s5 + $0x58] sm:$0xff]
      %v457 = vld [vmem:[%s5 + $0x60] sm:$0xff]
      %v458 = vld [vmem:[%s5 + $0x68] sm:$0xff]
      %v459 = vld [vmem:[%s5 + $0x70] sm:$0xff]
      %v460 = vld [vmem:[%s5 + $0x78] sm:$0xff]
      %v461 = vpack.c.bf16 %v446, %v445
      %v462 = vpack.c.bf16 %v448, %v447
      %v463 = vpack.c.bf16 %v450, %v449
      %v464 = vpack.c.bf16 %v452, %v451
      %v465 = vpack.c.bf16 %v454, %v453
      %v466 = vpack.c.bf16 %v456, %v455
      %v467 = vpack.c.bf16 %v458, %v457
      %v468 = vpack.c.bf16 %v460, %v459
      %v469 = vld [vmem:[%s6] sm:$0x1]
      %v471 = vperm.slane %v469, 0
      %473 = vmatpush.bf16.msra.mxu0 %v468
      %474 = vmatpush.bf16.msra.mxu0 %v467
      %475 = vmatpush.bf16.msra.mxu0 %v466
      %476 = vmatpush.bf16.msra.mxu0 %v465
      %477 = vmatpush.bf16.msra.mxu0 %v464
      %478 = vmatpush.bf16.msra.mxu0 %v463
      %479 = vmatpush.bf16.msra.mxu0 %v462
      %480 = vmatpush.bf16.msra.mxu0 %v461
      %481 = vmatmul.bf16.gmra.mxu0 %v443
      %v482 = vpop.f32.mrf.mxu0
      %v483 = vadd.f32 %v471, %v482
      %v484 = vpop.f32.mrf.mxu0
      %v485 = vadd.f32 %v471, %v484
      %486 = vmatmul.bf16.gmra.mxu0 %v444
      %v487 = vpop.f32.mrf.mxu0
      %v488 = vadd.f32 %v471, %v487
      %v489 = vpop.f32.mrf.mxu0
      %490 = vdwg.mxu0
      %v491 = vmul.f32 %v283, 2.0
      %v492 = vmul.f32 %v284, 2.0
      %v493 = vmul.f32 %v285, 2.0
      %v494 = vadd.f32 %v483, %v491
      %v495 = vadd.f32 %v485, %v492
      %v496 = vadd.f32 %v488, %v493
      %497 = vst.msk [vmem:[%s280] sm:$0xff] %vm286, %v494
      %498 = vst.msk [vmem:[%s280 + $0x8] sm:$0xff] %vm286, %v495
      %499 = vst.msk [vmem:[%s280 + $0x10] sm:$0xff] %vm286, %v496
      %s500 = smul.u32 3, %s18
      %p501 = scmp.lt.s32.totalorder %s500, 5
      %s502 = scalar_select %p501, %s500, 5
      %s503 = smul.addr %s502, 8
      %s504 = scalar_lea.vmem %s7, %s503
      // Predicated region
      $region49: #{deepvit_forward.11} parent=47 // pred_check
        %p505 = pneg %p188
      $region50: #{deepvit_forward.11} parent=47 // pred_check_branch
        %507 = sbr.rel (%p505) target = $region52
      $region51: #{deepvit_forward.11} parent=47 // pred_region
        %s508 = smul.u32 3, %s18
      $region52: #{deepvit_forward.11} parent=47 // pred_fallthru
        _
    $region48: #{deepvit_forward.11} parent=5 // pred_fallthru
      _
    %p509 = scmp.le.s32.totalorder 2, %s13
    // Predicated region
    $region53: #{deepvit_forward.11} parent=5 // pred_check
      %p510 = pneg %p509
    $region54: #{deepvit_forward.11} parent=5 // pred_check_branch
      %512 = sbr.rel (%p510) target = $region56
    $region55: #{deepvit_forward.11} parent=5 // pred_region
      %s513 = ssub.s32 %s13, 2
      // Predicated region
      $region57: #{deepvit_forward.11} parent=55 // pred_check
        %p514 = pneg %p194
      $region58: #{deepvit_forward.11} parent=55 // pred_check_branch
        %516 = sbr.rel (%p514) target = $region60
      $region59: #{deepvit_forward.11} parent=55 // pred_region
        %s517 = smul.u32 3, %s19
        %p518 = scmp.lt.s32.totalorder %s517, 5
        %s519 = scalar_select %p518, %s517, 5
        %s520 = smul.addr %s519, 8
        %s521 = scalar_lea.vmem %s7, %s520
      $region60: #{deepvit_forward.11} parent=55 // pred_fallthru
        _
    $region56: #{deepvit_forward.11} parent=5 // pred_fallthru
      _
  $region6: #{deepvit_forward.11} parent=0 // loop_footer
    %s17 = sadd.s32 1, %s13
  $region7: #{deepvit_forward.11} parent=0 // loop_footer_branch
    %12 = sbr.rel target = $region3
  $region8: #{deepvit_forward.11} parent=0 // loop_exit
    _

// kernel: deepvit_forward.15
$region0: #{deepvit_forward.15}
  #allocation0 [shape = 'u32[]', space=smem, size = 0x4, offset = 0x4, fixed_abs, tag = 'smem constant byte address 0x4 - core index']
  #allocation1 [shape = 'u32[72,128]{1,0:T(1,128)}', space=vmem, size = 0x9000, scoped, tag = 'internal scratch']
  #allocation2 [shape = 'f32[2,10]{1,0:T(2,128)}', space=vmem, size = 0x400, scoped, tag = 'scratch operand']
  #allocation3 [shape = 'bf16[2,64]{1,0:T(2,128)(2,1)}', space=vmem, size = 0x200, scoped, tag = 'scratch operand']
  %s0 = inlined_call_operand.vmem [shape: f32[2,64], index: 0, kind: input, shape index: {}]
  %s1 = inlined_call_operand.vmem [shape: f32[64,10], index: 1, kind: input, shape index: {}]
  %s2 = inlined_call_operand.vmem [shape: f32[1,64], index: 2, kind: input, shape index: {}]
  %s3 = inlined_call_operand.vmem [shape: f32[1,64], index: 3, kind: input, shape index: {}]
  %s4 = inlined_call_operand.vmem [shape: f32[1,10], index: 4, kind: input, shape index: {}]
  %s5 = inlined_call_operand.hbm [shape: f32[2,10], index: 5, kind: output, shape index: {}]
  %s6 = sld [smem:[#allocation0]]
  $region42: #{deepvit_forward.15} parent=0
    _
  %s8 = ssub.s32 1, %s6
  %s9 = scalar_select 0, %s8, %s6
  $region1: #{deepvit_forward.15} parent=0
    #allocation4 [shape = 'u8[1024]{0}', space=vmem, size = 0x400, scoped, tag = 'output window, operand 0, single buffered']
    #allocation5 [shape = 's32[1]{0}', space=sflag, size = 0x4, scoped, tag = 'scoped memory for deepvit_forward.15']
    %10 = vsyncpa [#allocation5], 0
    // Predicated region
    $region2: #{deepvit_forward.15} parent=1 // pred_check
      _
    $region3: #{deepvit_forward.15} parent=1 // pred_check_branch
      %12 = sbr.rel (0) target = $region5
    $region4: #{deepvit_forward.15} parent=1 // pred_region
      _
    $region5: #{deepvit_forward.15} parent=1 // pred_fallthru
      _
    // Predicated region
    $region6: #{deepvit_forward.15} parent=1 // pred_check
      _
    $region7: #{deepvit_forward.15} parent=1 // pred_check_branch
      %14 = sbr.rel (0) target = $region9
    $region8: #{deepvit_forward.15} parent=1 // pred_region
      _
    $region9: #{deepvit_forward.15} parent=1 // pred_fallthru
      _
    // Predicated region
    $region10: #{deepvit_forward.15} parent=1 // pred_check
      _
    $region11: #{deepvit_forward.15} parent=1 // pred_check_branch
      %16 = sbr.rel (0) target = $region13
    $region12: #{deepvit_forward.15} parent=1 // pred_region
      _
    $region13: #{deepvit_forward.15} parent=1 // pred_fallthru
      _
    // Predicated region
    $region14: #{deepvit_forward.15} parent=1 // pred_check
      _
    $region15: #{deepvit_forward.15} parent=1 // pred_check_branch
      %18 = sbr.rel (0) target = $region17
    $region16: #{deepvit_forward.15} parent=1 // pred_region
      _
    $region17: #{deepvit_forward.15} parent=1 // pred_fallthru
      _
    // Predicated region
    $region18: #{deepvit_forward.15} parent=1 // pred_check
      _
    $region19: #{deepvit_forward.15} parent=1 // pred_check_branch
      %20 = sbr.rel (0) target = $region21
    $region20: #{deepvit_forward.15} parent=1 // pred_region
      _
    $region21: #{deepvit_forward.15} parent=1 // pred_fallthru
      _
    %p22 = scmp.eq.s32.totalorder 0, 0
    // Predicated region
    $region22: #{deepvit_forward.15} parent=1 // pred_check
      %p23 = pneg %p22
    $region23: #{deepvit_forward.15} parent=1 // pred_check_branch
      %25 = sbr.rel (%p23) target = $region25
    $region24: #{deepvit_forward.15} parent=1 // pred_region
      %vm26 = vcmask 74752
      %27 = vst.msk [vmem:[#allocation2] sm:$0x3] %vm26, 0.0
    $region25: #{deepvit_forward.15} parent=1 // pred_fallthru
      _
    %p28 = scmp.eq.s32.totalorder 0, 0
    // Predicated region
    $region26: #{deepvit_forward.15} parent=1 // pred_check
      %p29 = pneg %p28
    $region27: #{deepvit_forward.15} parent=1 // pred_check_branch
      %31 = sbr.rel (%p29) target = $region29
    $region28: #{deepvit_forward.15} parent=1 // pred_region
      %v32 = vld [vmem:[%s0] sm:$0x3]
      %vm33 = vcmask 517120
      %v34 = vsel %vm33, %v32, 0.0
      %35 = vadd.xlane.f32.xlu0 %v34
      %v36 = vpop.xlane.xlu0 %35
      %v37 = vrcp.pop 64.0
      %v38 = vmul.f32 64.0, %v37
      %v39 = vsub.f32 1.0, %v38
      %v40 = vmul.f32 %v37, %v39
      %v41 = vadd.f32 %v37, %v40
      %vm42 = vweird.f32 %v37
      %v43 = vsel %vm42, %v37, %v41
      %v44 = vmul.f32 %v36, %v43
      %v45 = vsub.f32 %v32, %v44
      %v46 = vmul.f32 %v45, %v45
      %v47 = vsel %vm33, %v46, 0.0
      %48 = vadd.xlane.f32.xlu0 %v47
      %v49 = vpop.xlane.xlu0 %48
      %v50 = vmul.f32 %v49, %v43
      %v51 = vadd.f32 %v50, 1e-05
      %v52 = vrsqrt.pop %v51
      %v53 = vmul.f32 %v52, %v51
      %v54 = vmul.f32 %v53, %v52
      %v55 = vmul.f32 0.5, %v54
      %v56 = vsub.f32 1.5, %v55
      %v57 = vmul.f32 %v52, %v56
      %vm58 = vweird.f32 %v51
      %vm59 = vweird.f32 %v52
      %vm60 = vmor %vm58, %vm59
      %v61 = vsel %vm60, %v52, %v57
      %v62 = vmul.f32 %v45, %v61
      %v63 = vld [vmem:[%s2] sm:$0x1]
      %v65 = vperm.slane %v63, 0
      %v67 = vmul.f32 %v62, %v65
      %v68 = vld [vmem:[%s3] sm:$0x1]
      %v70 = vperm.slane %v68, 0
      %v72 = vadd.f32 %v67, %v70
      %v73 = vpack.c.bf16 %v72, %v72
      %vm74 = vcmask 516096
      %75 = vst.msk [vmem:[#allocation3] sm:$0x1] %vm74, %v73
    $region29: #{deepvit_forward.15} parent=1 // pred_fallthru
      _
    %v76 = vld [vmem:[#allocation3] sm:$0x1]
    %v77 = vld [vmem:[#allocation2] sm:$0x3]
    %v78 = vld [vmem:[%s1] sm:$0xff]
    %v79 = vld [vmem:[%s1 + $0x8] sm:$0xff]
    %v80 = vld [vmem:[%s1 + $0x10] sm:$0xff]
    %v81 = vld [vmem:[%s1 + $0x18] sm:$0xff]
    %v82 = vld [vmem:[%s1 + $0x20] sm:$0xff]
    %v83 = vld [vmem:[%s1 + $0x28] sm:$0xff]
    %v84 = vld [vmem:[%s1 + $0x30] sm:$0xff]
    %v85 = vld [vmem:[%s1 + $0x38] sm:$0xff]
    %v86 = vpack.c.bf16 %v79, %v78
    %v87 = vpack.c.bf16 %v81, %v80
    %v88 = vpack.c.bf16 %v83, %v82
    %v89 = vpack.c.bf16 %v85, %v84
    %vm90 = vcmask 523264
    %v92 = vsel %vm90, %v76, 0
    %94 = vmatpush.bf16.msra.mxu0 0
    %95 = vmatpush.bf16.msra.mxu0 0
    %96 = vmatpush.bf16.msra.mxu0 0
    %97 = vmatpush.bf16.msra.mxu0 0
    %98 = vmatpush.bf16.msra.mxu0 %v89
    %99 = vmatpush.bf16.msra.mxu0 %v88
    %100 = vmatpush.bf16.msra.mxu0 %v87
    %101 = vmatpush.bf16.msra.mxu0 %v86
    %102 = vmatmul.bf16.gmra.mxu0 %v92
    %v103 = vpop.f32.mrf.mxu0
    %v104 = vadd.f32 0.0, %v103
    %v105 = vpop.f32.mrf.mxu0
    %106 = vdwg.mxu0
    %v107 = vadd.f32 %v77, %v104
    %vm108 = vcmask 74752
    %109 = vst.msk [vmem:[#allocation2] sm:$0x3] %vm108, %v107
    // Predicated region
    $region30: #{deepvit_forward.15} parent=1 // pred_check
      %p110 = pneg %p22
    $region31: #{deepvit_forward.15} parent=1 // pred_check_branch
      %112 = sbr.rel (%p110) target = $region33
    $region32: #{deepvit_forward.15} parent=1 // pred_region
      %v113 = vld [vmem:[#allocation2] sm:$0x3]
      %v114 = vld [vmem:[%s4] sm:$0x1]
      %v116 = vperm.slane %v114, 0
      %v118 = vadd.f32 %v113, %v116
      %119 = vst.msk [vmem:[#allocation4] sm:$0x3] %vm108, %v118
    $region33: #{deepvit_forward.15} parent=1 // pred_fallthru
      _
    // Predicated region
    $region34: #{deepvit_forward.15} parent=1 // pred_check
      _
    $region35: #{deepvit_forward.15} parent=1 // pred_check_branch
      %121 = sbr.rel (0) target = $region37
    $region36: #{deepvit_forward.15} parent=1 // pred_region
      %123 = vsyncadd [#allocation5], 0
      %s125 = sshll.u32 [#allocation4], 4
      %s126 = int_to_ptr.vmem [resolvable:$true] %s125
      %s127 = sshll.u32 %s5, 4
      %s128 = int_to_ptr.hbm [resolvable:$true] %s127
      %130 = dma.vmem_to_hbm [thread:$0]  %s126, 32, %s128, [#allocation5]
    $region37: #{deepvit_forward.15} parent=1 // pred_fallthru
      _
    // Predicated region
    $region38: #{deepvit_forward.15} parent=1 // pred_check
      _
    $region39: #{deepvit_forward.15} parent=1 // pred_check_branch
      %132 = sbr.rel (0) target = $region41
    $region40: #{deepvit_forward.15} parent=1 // pred_region
      %134 = dma.done [#allocation5], 32
    $region41: #{deepvit_forward.15} parent=1 // pred_fallthru
      _
    %135 = vsyncpa [#allocation5], 1

// kernel: deepvit_forward.10
$region0: #{deepvit_forward.10}
  #allocation0 [shape = 'u32[]', space=smem, size = 0x4, offset = 0x4, fixed_abs, tag = 'smem constant byte address 0x4 - core index']
  #allocation1 [shape = 'u32[72,128]{1,0:T(1,128)}', space=vmem, size = 0x9000, scoped, tag = 'internal scratch']
  %s0 = inlined_call_operand.vmem [shape: f32[2,4,24,32], index: 0, kind: input, shape index: {}]
  %s1 = inlined_call_operand.vmem [shape: f32[2,4,24,32], index: 1, kind: input, shape index: {}]
  %s2 = inlined_call_operand.vmem [shape: f32[2,4,24,32], index: 2, kind: input, shape index: {}]
  %s3 = inlined_call_operand.vmem [shape: f32[4,4], index: 3, kind: input, shape index: {}]
  %s4 = inlined_call_operand.vmem [shape: f32[4], index: 4, kind: input, shape index: {}]
  %s5 = inlined_call_operand.vmem [shape: f32[4], index: 5, kind: input, shape index: {}]
  %s6 = inlined_call_operand.vmem [shape: f32[4,32,64], index: 6, kind: input, shape index: {}]
  %s7 = inlined_call_operand.vmem [shape: f32[1,64], index: 7, kind: input, shape index: {}]
  %s8 = inlined_call_operand.vmem [shape: f32[2,24,64], index: 8, kind: input, shape index: {}]
  %s9 = inlined_call_operand.vmem [shape: f32[2,24,64], index: 9, kind: output, shape index: {}]
  %s10 = sld [smem:[#allocation0]]
  $region81: #{deepvit_forward.10} parent=0
    _
  %s12 = ssub.s32 1, %s10
  %s13 = scalar_select 0, %s12, %s10
  $region1: #{deepvit_forward.10} parent=0
    #allocation2 [shape = 'u8[2048]{0}', space=smem, size = 0x800, scoped, tag = 'input window, operand 3, single buffered']
    #allocation3 [shape = 's32[2]{0}', space=sflag, size = 0x8, scoped, tag = 'scoped memory for deepvit_forward.10']
    #allocation4 [shape = 'u8[512]{0}', space=smem, size = 0x200, scoped, tag = 'input window, operand 4, single buffered']
    #allocation5 [shape = 's32[1]{0}', space=sflag, size = 0x4, scoped, tag = 'scoped memory for deepvit_forward.10']
    #allocation6 [shape = 'u8[512]{0}', space=smem, size = 0x200, scoped, tag = 'input window, operand 5, single buffered']
    %14 = vsyncpa [#allocation3], 0
    %15 = vsyncpa [#allocation5], 0
    loop: start=0, step=1, limit=4
    $region2: #{deepvit_forward.10} parent=1 // loop_pre_header
      _
    $region3: #{deepvit_forward.10} parent=1 // loop_header
      %s17 = sphi 0, %s21
      %p18 = scmp.ge.s32.totalorder %s17, 4
      %s24 = sphi 0, %s36
      %s25 = sphi 0, %s32
      %s26 = sphi 0, %s24
      %s27 = sphi 0, %s25
      %s28 = sphi 0, %s26
      %s29 = sphi 0, %s27
      %s41 = sphi 0, %s43
      %s44 = sphi 0, %s41
      %s45 = sphi 0, %s44
      %s61 = sphi 0, %s45
      %s67 = sphi 0, %s69
      %s70 = sphi 0, %s67
      %s71 = sphi 0, %s70
      %s87 = sphi 0, %s71
      %s93 = sphi 0, %s95
      %s96 = sphi 0, %s93
      %s97 = sphi 0, %s96
      %s113 = sphi 0, %s97
      %s117 = sphi 0, %s117
      %s119 = sphi 0, %s117
      %s120 = sphi 0, %s119
      %s134 = sphi 0, %s120
      %s138 = sphi 0, %s138
      %s140 = sphi 0, %s138
      %s141 = sphi 0, %s140
      %s155 = sphi 0, %s141
      %s159 = sphi 0, %s159
      %s161 = sphi 0, %s159
      %s162 = sphi 0, %s161
      %s176 = sphi 0, %s162
      %s180 = sphi 0, %s180
      %s182 = sphi 0, %s180
      %s183 = sphi 0, %s182
      %s197 = sphi 0, %s183
      %s201 = sphi 0, %s201
      %s203 = sphi 0, %s201
      %s204 = sphi 0, %s203
      %s218 = sphi 0, %s204
      %s226 = sphi 0, %s228
      %s229 = sphi 0, %s226
      %s230 = sphi 0, %s229
      %s246 = sphi 0, %s230
      %s254 = sphi 0, %s256
      %s257 = sphi 0, %s254
      %s258 = sphi 0, %s257
      %s274 = sphi 0, %s258
    $region4: #{deepvit_forward.10} parent=1 // loop_header_branch
      %20 = sbr.rel (%p18) target = $region8
    $region5: #{deepvit_forward.10} parent=1 // loop_body
      %s22 = ssub.s32 %s17, 1
      %s23 = ssub.s32 %s17, 2
      %s30 = sadd.s32 1, %s25
      %p31 = scmp.ge.s32.totalorder %s30, 1
      %s32 = scalar_select %p31, 0, %s30
      %s33 = sadd.s32 1, %s24
      %s34 = scalar_select %p31, %s33, %s24
      %p35 = scmp.ge.s32.totalorder %s34, 2
      %s36 = scalar_select %p35, 0, %s34
      %s37 = ssub.s32 %s24, %s36
      %s38 = ssub.s32 %s25, %s32
      %s39 = sor.u32 %s37, %s38
      %p40 = scmp.eq.s32.totalorder %s39, 0
      %s42 = sadd.s32 %s41, 1
      %s43 = scalar_select %p40, %s41, %s42
      %p46 = pneg %p40
      %p47 = scmp.eq.s32.totalorder %s17, 1
      %p48 = por %p46, %p47
      %p49 = scmp.ne.s32.totalorder %s41, %s44
      %p50 = scmp.eq.s32.totalorder %s17, 0
      %p51 = por %p49, %p50
      %p52 = scmp.ne.s32.totalorder %s41, %s44
      %p53 = scmp.eq.s32.totalorder %s22, 1
      %p54 = por %p52, %p53
      %p55 = scmp.ne.s32.totalorder %s44, %s45
      %p56 = scmp.eq.s32.totalorder %s22, 0
      %p57 = por %p55, %p56
      %p58 = scmp.ne.s32.totalorder %s44, %s45
      %p59 = scmp.eq.s32.totalorder %s23, 1
      %p60 = por %p58, %p59
      %p62 = scmp.ne.s32.totalorder %s45, %s61
      %p63 = scmp.eq.s32.totalorder %s23, 0
      %p64 = por %p62, %p63
      %s65 = ssub.s32 %s24, %s36
      %p66 = scmp.eq.s32.totalorder %s65, 0
      %s68 = sadd.s32 %s67, 1
      %s69 = scalar_select %p66, %s67, %s68
      %p72 = pneg %p66
      %p73 = scmp.eq.s32.totalorder %s17, 1
      %p74 = por %p72, %p73
      %p75 = scmp.ne.s32.totalorder %s67, %s70
      %p76 = scmp.eq.s32.totalorder %s17, 0
      %p77 = por %p75, %p76
      %p78 = scmp.ne.s32.totalorder %s67, %s70
      %p79 = scmp.eq.s32.totalorder %s22, 1
      %p80 = por %p78, %p79
      %p81 = scmp.ne.s32.totalorder %s70, %s71
      %p82 = scmp.eq.s32.totalorder %s22, 0
      %p83 = por %p81, %p82
      %p84 = scmp.ne.s32.totalorder %s70, %s71
      %p85 = scmp.eq.s32.totalorder %s23, 1
      %p86 = por %p84, %p85
      %p88 = scmp.ne.s32.totalorder %s71, %s87
      %p89 = scmp.eq.s32.totalorder %s23, 0
      %p90 = por %p88, %p89
      %s91 = ssub.s32 %s24, %s36
      %p92 = scmp.eq.s32.totalorder %s91, 0
      %s94 = sadd.s32 %s93, 1
      %s95 = scalar_select %p92, %s93, %s94
      %p98 = pneg %p92
      %p99 = scmp.eq.s32.totalorder %s17, 1
      %p100 = por %p98, %p99
      %p101 = scmp.ne.s32.totalorder %s93, %s96
      %p102 = scmp.eq.s32.totalorder %s17, 0
      %p103 = por %p101, %p102
      %p104 = scmp.ne.s32.totalorder %s93, %s96
      %p105 = scmp.eq.s32.totalorder %s22, 1
      %p106 = por %p104, %p105
      %p107 = scmp.ne.s32.totalorder %s96, %s97
      %p108 = scmp.eq.s32.totalorder %s22, 0
      %p109 = por %p107, %p108
      %p110 = scmp.ne.s32.totalorder %s96, %s97
      %p111 = scmp.eq.s32.totalorder %s23, 1
      %p112 = por %p110, %p111
      %p114 = scmp.ne.s32.totalorder %s97, %s113
      %p115 = scmp.eq.s32.totalorder %s23, 0
      %p116 = por %p114, %p115
      %s118 = sadd.s32 %s117, 1
      %p121 = scmp.eq.s32.totalorder %s17, 1
      %p122 = scmp.ne.s32.totalorder %s117, %s119
      %p123 = scmp.eq.s32.totalorder %s17, 0
      %p124 = por %p122, %p123
      %p125 = scmp.ne.s32.totalorder %s117, %s119
      %p126 = scmp.eq.s32.totalorder %s22, 1
      %p127 = por %p125, %p126
      %p128 = scmp.ne.s32.totalorder %s119, %s120
      %p129 = scmp.eq.s32.totalorder %s22, 0
      %p130 = por %p128, %p129
      %p131 = scmp.ne.s32.totalorder %s119, %s120
      %p132 = scmp.eq.s32.totalorder %s23, 1
      %p133 = por %p131, %p132
      %p135 = scmp.ne.s32.totalorder %s120, %s134
      %p136 = scmp.eq.s32.totalorder %s23, 0
      %p137 = por %p135, %p136
      %s139 = sadd.s32 %s138, 1
      %p142 = scmp.eq.s32.totalorder %s17, 1
      %p143 = scmp.ne.s32.totalorder %s138, %s140
      %p144 = scmp.eq.s32.totalorder %s17, 0
      %p145 = por %p143, %p144
      %p146 = scmp.ne.s32.totalorder %s138, %s140
      %p147 = scmp.eq.s32.totalorder %s22, 1
      %p148 = por %p146, %p147
      %p149 = scmp.ne.s32.totalorder %s140, %s141
      %p150 = scmp.eq.s32.totalorder %s22, 0
      %p151 = por %p149, %p150
      %p152 = scmp.ne.s32.totalorder %s140, %s141
      %p153 = scmp.eq.s32.totalorder %s23, 1
      %p154 = por %p152, %p153
      %p156 = scmp.ne.s32.totalorder %s141, %s155
      %p157 = scmp.eq.s32.totalorder %s23, 0
      %p158 = por %p156, %p157
      %s160 = sadd.s32 %s159, 1
      %p163 = scmp.eq.s32.totalorder %s17, 1
      %p164 = scmp.ne.s32.totalorder %s159, %s161
      %p165 = scmp.eq.s32.totalorder %s17, 0
      %p166 = por %p164, %p165
      %p167 = scmp.ne.s32.totalorder %s159, %s161
      %p168 = scmp.eq.s32.totalorder %s22, 1
      %p169 = por %p167, %p168
      %p170 = scmp.ne.s32.totalorder %s161, %s162
      %p171 = scmp.eq.s32.totalorder %s22, 0
      %p172 = por %p170, %p171
      %p173 = scmp.ne.s32.totalorder %s161, %s162
      %p174 = scmp.eq.s32.totalorder %s23, 1
      %p175 = por %p173, %p174
      %p177 = scmp.ne.s32.totalorder %s162, %s176
      %p178 = scmp.eq.s32.totalorder %s23, 0
      %p179 = por %p177, %p178
      %s181 = sadd.s32 %s180, 1
      %p184 = scmp.eq.s32.totalorder %s17, 1
      %p185 = scmp.ne.s32.totalorder %s180, %s182
      %p186 = scmp.eq.s32.totalorder %s17, 0
      %p187 = por %p185, %p186
      %p188 = scmp.ne.s32.totalorder %s180, %s182
      %p189 = scmp.eq.s32.totalorder %s22, 1
      %p190 = por %p188, %p189
      %p191 = scmp.ne.s32.totalorder %s182, %s183
      %p192 = scmp.eq.s32.totalorder %s22, 0
      %p193 = por %p191, %p192
      %p194 = scmp.ne.s32.totalorder %s182, %s183
      %p195 = scmp.eq.s32.totalorder %s23, 1
      %p196 = por %p194, %p195
      %p198 = scmp.ne.s32.totalorder %s183, %s197
      %p199 = scmp.eq.s32.totalorder %s23, 0
      %p200 = por %p198, %p199
      %s202 = sadd.s32 %s201, 1
      %p205 = scmp.eq.s32.totalorder %s17, 1
      %p206 = scmp.ne.s32.totalorder %s201, %s203
      %p207 = scmp.eq.s32.totalorder %s17, 0
      %p208 = por %p206, %p207
      %p209 = scmp.ne.s32.totalorder %s201, %s203
      %p210 = scmp.eq.s32.totalorder %s22, 1
      %p211 = por %p209, %p210
      %p212 = scmp.ne.s32.totalorder %s203, %s204
      %p213 = scmp.eq.s32.totalorder %s22, 0
      %p214 = por %p212, %p213
      %p215 = scmp.ne.s32.totalorder %s203, %s204
      %p216 = scmp.eq.s32.totalorder %s23, 1
      %p217 = por %p215, %p216
      %p219 = scmp.ne.s32.totalorder %s204, %s218
      %p220 = scmp.eq.s32.totalorder %s23, 0
      %p221 = por %p219, %p220
      %s222 = ssub.s32 %s24, %s36
      %s223 = ssub.s32 %s25, %s32
      %s224 = sor.u32 %s222, %s223
      %p225 = scmp.eq.s32.totalorder %s224, 0
      %s227 = sadd.s32 %s226, 1
      %s228 = scalar_select %p225, %s226, %s227
      %p231 = pneg %p225
      %p232 = scmp.eq.s32.totalorder %s17, 1
      %p233 = por %p231, %p232
      %p234 = scmp.ne.s32.totalorder %s226, %s229
      %p235 = scmp.eq.s32.totalorder %s17, 0
      %p236 = por %p234, %p235
      %p237 = scmp.ne.s32.totalorder %s226, %s229
      %p238 = scmp.eq.s32.totalorder %s22, 1
      %p239 = por %p237, %p238
      %p240 = scmp.ne.s32.totalorder %s229, %s230
      %p241 = scmp.eq.s32.totalorder %s22, 0
      %p242 = por %p240, %p241
      %p243 = scmp.ne.s32.totalorder %s229, %s230
      %p244 = scmp.eq.s32.totalorder %s23, 1
      %p245 = por %p243, %p244
      %p247 = scmp.ne.s32.totalorder %s230, %s246
      %p248 = scmp.eq.s32.totalorder %s23, 0
      %p249 = por %p247, %p248
      %s250 = ssub.s32 %s24, %s36
      %s251 = ssub.s32 %s25, %s32
      %s252 = sor.u32 %s250, %s251
      %p253 = scmp.eq.s32.totalorder %s252, 0
      %s255 = sadd.s32 %s254, 1
      %s256 = scalar_select %p253, %s254, %s255
      %p259 = pneg %p253
      %p260 = scmp.eq.s32.totalorder %s17, 1
      %p261 = por %p259, %p260
      %p262 = scmp.ne.s32.totalorder %s254, %s257
      %p263 = scmp.eq.s32.totalorder %s17, 0
      %p264 = por %p262, %p263
      %p265 = scmp.ne.s32.totalorder %s254, %s257
      %p266 = scmp.eq.s32.totalorder %s22, 1
      %p267 = por %p265, %p266
      %p268 = scmp.ne.s32.totalorder %s257, %s258
      %p269 = scmp.eq.s32.totalorder %s22, 0
      %p270 = por %p268, %p269
      %p271 = scmp.ne.s32.totalorder %s257, %s258
      %p272 = scmp.eq.s32.totalorder %s23, 1
      %p273 = por %p271, %p272
      %p275 = scmp.ne.s32.totalorder %s258, %s274
      %p276 = scmp.eq.s32.totalorder %s23, 0
      %p277 = por %p275, %p276
      %p278 = scmp.le.s32.totalorder 1, %s17
      %p279 = scmp.lt.s32.totalorder %s17, 3
      %p280 = pnand %p278, %p279
      %p281 = pneg %p280
      // Predicated region
      $region9: #{deepvit_forward.10} parent=5 // pred_check
        _
      $region10: #{deepvit_forward.10} parent=5 // pred_check_branch
        %283 = sbr.rel (%p280) target = $region12
      $region11: #{deepvit_forward.10} parent=5 // pred_region
        %s284 = ssub.s32 %s17, 1
        // Predicated region
        $region13: #{deepvit_forward.10} parent=11 // pred_check
          %p285 = pneg %p130
        $region14: #{deepvit_forward.10} parent=11 // pred_check_branch
          %287 = sbr.rel (%p285) target = $region16
        $region15: #{deepvit_forward.10} parent=11 // pred_region
          %289 = vsyncadd [#allocation3], 0
          %s291 = sshll.u32 %s3, 4
          %s292 = int_to_ptr.vmem [resolvable:$true] %s291
          %294 = dma.vmem_to_smem %s292, 64, [#allocation2], [#allocation3]
        $region16: #{deepvit_forward.10} parent=11 // pred_fallthru
          _
        // Predicated region
        $region17: #{deepvit_forward.10} parent=11 // pred_check
          %p295 = pneg %p151
        $region18: #{deepvit_forward.10} parent=11 // pred_check_branch
          %297 = sbr.rel (%p295) target = $region20
        $region19: #{deepvit_forward.10} parent=11 // pred_region
          %299 = vsyncadd [#allocation5], 0
          %s301 = sshll.u32 %s4, 4
          %s302 = int_to_ptr.vmem [resolvable:$true] %s301
          %304 = dma.vmem_to_smem %s302, 16, [#allocation4], [#allocation5]
        $region20: #{deepvit_forward.10} parent=11 // pred_fallthru
          _
        // Predicated region
        $region21: #{deepvit_forward.10} parent=11 // pred_check
          %p305 = pneg %p172
        $region22: #{deepvit_forward.10} parent=11 // pred_check_branch
          %307 = sbr.rel (%p305) target = $region24
        $region23: #{deepvit_forward.10} parent=11 // pred_region
          %309 = vsyncadd [#allocation5], 0
          %s311 = sshll.u32 %s5, 4
          %s312 = int_to_ptr.vmem [resolvable:$true] %s311
          %314 = dma.vmem_to_smem %s312, 16, [#allocation6], [#allocation5]
        $region24: #{deepvit_forward.10} parent=11 // pred_fallthru
          _
        // Predicated region
        $region25: #{deepvit_forward.10} parent=11 // pred_check
          %p315 = pneg %p193
        $region26: #{deepvit_forward.10} parent=11 // pred_check_branch
          %317 = sbr.rel (%p315) target = $region28
        $region27: #{deepvit_forward.10} parent=11 // pred_region
          _
        $region28: #{deepvit_forward.10} parent=11 // pred_fallthru
          _
        // Predicated region
        $region29: #{deepvit_forward.10} parent=11 // pred_check
          %p318 = pneg %p214
        $region30: #{deepvit_forward.10} parent=11 // pred_check_branch
          %320 = sbr.rel (%p318) target = $region32
        $region31: #{deepvit_forward.10} parent=11 // pred_region
          _
        $region32: #{deepvit_forward.10} parent=11 // pred_fallthru
          _
      $region12: #{deepvit_forward.10} parent=5 // pred_fallthru
        _
      %p321 = scmp.lt.s32.totalorder %s17, 2
      // Predicated region
      $region33: #{deepvit_forward.10} parent=5 // pred_check
        %p322 = pneg %p321
      $region34: #{deepvit_forward.10} parent=5 // pred_check_branch
        %324 = sbr.rel (%p322) target = $region36
      $region35: #{deepvit_forward.10} parent=5 // pred_region
        // Predicated region
        $region37: #{deepvit_forward.10} parent=35 // pred_check
          %p325 = pneg %p51
        $region38: #{deepvit_forward.10} parent=35 // pred_check_branch
          %327 = sbr.rel (%p325) target = $region40
        $region39: #{deepvit_forward.10} parent=35 // pred_region
          %s328 = smul.u32 3, %s25
          %p329 = scmp.lt.s32.totalorder %s24, 1
          %s330 = scalar_select %p329, %s24, 1
          %p331 = scmp.lt.s32.totalorder %s328, 2
          %s332 = scalar_select %p331, %s328, 2
          %s333 = smul.addr %s330, 12
          %s334 = sadd.s32 %s332, %s333
          %s335 = smul.addr %s334, 8
          %s336 = scalar_lea.vmem %s0, %s335
          %s337 = smul.u32 3, %s25
        $region40: #{deepvit_forward.10} parent=35 // pred_fallthru
          _
        // Predicated region
        $region41: #{deepvit_forward.10} parent=35 // pred_check
          %p338 = pneg %p77
        $region42: #{deepvit_forward.10} parent=35 // pred_check_branch
          %340 = sbr.rel (%p338) target = $region44
        $region43: #{deepvit_forward.10} parent=35 // pred_region
          %p341 = scmp.lt.s32.totalorder %s24, 1
          %s342 = scalar_select %p341, %s24, 1
          %s343 = smul.addr %s342, 12
          %s344 = smul.addr %s343, 8
          %s345 = scalar_lea.vmem %s1, %s344
        $region44: #{deepvit_forward.10} parent=35 // pred_fallthru
          _
        // Predicated region
        $region45: #{deepvit_forward.10} parent=35 // pred_check
          %p346 = pneg %p103
        $region46: #{deepvit_forward.10} parent=35 // pred_check_branch
          %348 = sbr.rel (%p346) target = $region48
        $region47: #{deepvit_forward.10} parent=35 // pred_region
          %p349 = scmp.lt.s32.totalorder %s24, 1
          %s350 = scalar_select %p349, %s24, 1
          %s351 = smul.addr %s350, 12
          %s352 = smul.addr %s351, 8
          %s353 = scalar_lea.vmem %s2, %s352
        $region48: #{deepvit_forward.10} parent=35 // pred_fallthru
          _
        // Predicated region
        $region49: #{deepvit_forward.10} parent=35 // pred_check
          %p354 = pneg %p236
        $region50: #{deepvit_forward.10} parent=35 // pred_check_branch
          %356 = sbr.rel (%p354) target = $region52
        $region51: #{deepvit_forward.10} parent=35 // pred_region
          %s357 = smul.u32 3, %s25
          %p358 = scmp.lt.s32.totalorder %s24, 1
          %s359 = scalar_select %p358, %s24, 1
          %p360 = scmp.lt.s32.totalorder %s357, 2
          %s361 = scalar_select %p360, %s357, 2
          %s362 = smul.addr %s359, 3
          %s363 = sadd.s32 %s361, %s362
          %s364 = smul.addr %s363, 8
          %s365 = scalar_lea.vmem %s8, %s364
          %s366 = smul.u32 3, %s25
        $region52: #{deepvit_forward.10} parent=35 // pred_fallthru
          _
      $region36: #{deepvit_forward.10} parent=5 // pred_fallthru
        _
      %p367 = scmp.le.s32.totalorder 1, %s17
      %p368 = scmp.lt.s32.totalorder %s17, 3
      %p369 = pnand %p367, %p368
      %p370 = pneg %p369
      // Predicated region
      $region53: #{deepvit_forward.10} parent=5 // pred_check
        _
      $region54: #{deepvit_forward.10} parent=5 // pred_check_branch
        %372 = sbr.rel (%p369) target = $region56
      $region55: #{deepvit_forward.10} parent=5 // pred_region
        %s373 = ssub.s32 %s17, 1
        // Predicated region
        $region57: #{deepvit_forward.10} parent=55 // pred_check
          %p374 = pneg %p130
        $region58: #{deepvit_forward.10} parent=55 // pred_check_branch
          %376 = sbr.rel (%p374) target = $region60
        $region59: #{deepvit_forward.10} parent=55 // pred_region
          %378 = dma.done [#allocation3], 64
        $region60: #{deepvit_forward.10} parent=55 // pred_fallthru
          _
        // Predicated region
        $region61: #{deepvit_forward.10} parent=55 // pred_check
          %p379 = pneg %p151
        $region62: #{deepvit_forward.10} parent=55 // pred_check_branch
          %381 = sbr.rel (%p379) target = $region64
        $region63: #{deepvit_forward.10} parent=55 // pred_region
          %383 = dma.done [#allocation5], 16
        $region64: #{deepvit_forward.10} parent=55 // pred_fallthru
          _
        // Predicated region
        $region65: #{deepvit_forward.10} parent=55 // pred_check
          %p384 = pneg %p172
        $region66: #{deepvit_forward.10} parent=55 // pred_check_branch
          %386 = sbr.rel (%p384) target = $region68
        $region67: #{deepvit_forward.10} parent=55 // pred_region
          %388 = dma.done [#allocation5], 16
        $region68: #{deepvit_forward.10} parent=55 // pred_fallthru
          _
        %389 = sfence
        %s390 = smul.u32 3, %s27
        %p391 = scmp.lt.s32.totalorder %s26, 1
        %s392 = scalar_select %p391, %s26, 1
        %p393 = scmp.lt.s32.totalorder %s390, 2
        %s394 = scalar_select %p393, %s390, 2
        %s395 = smul.addr %s392, 12
        %s396 = sadd.s32 %s394, %s395
        %s397 = smul.addr %s396, 8
        %s398 = scalar_lea.vmem %s0, %s397
        %p399 = pneg %p57
        %p400 = pneg %p54
        %p401 = scmp.lt.s32.totalorder %s26, 1
        %s402 = scalar_select %p401, %s26, 1
        %s403 = smul.addr %s402, 12
        %s404 = smul.addr %s403, 8
        %s405 = scalar_lea.vmem %s1, %s404
        %p406 = pneg %p83
        %p407 = pneg %p80
        %p408 = scmp.lt.s32.totalorder %s26, 1
        %s409 = scalar_select %p408, %s26, 1
        %s410 = smul.addr %s409, 12
        %s411 = smul.addr %s410, 8
        %s412 = scalar_lea.vmem %s2, %s411
        %p413 = pneg %p109
        %p414 = pneg %p106
        %p415 = pneg %p130
        %p416 = pneg %p127
        %p417 = pneg %p151
        %p418 = pneg %p148
        %p419 = pneg %p172
        %p420 = pneg %p169
        %p421 = pneg %p193
        %p422 = pneg %p190
        %p423 = pneg %p214
        %p424 = pneg %p211
        %s425 = smul.u32 3, %s27
        %p426 = scmp.lt.s32.totalorder %s26, 1
        %s427 = scalar_select %p426, %s26, 1
        %p428 = scmp.lt.s32.totalorder %s425, 2
        %s429 = scalar_select %p428, %s425, 2
        %s430 = smul.addr %s427, 3
        %s431 = sadd.s32 %s429, %s430
        %s432 = smul.addr %s431, 8
        %s433 = scalar_lea.vmem %s8, %s432
        %p434 = pneg %p242
        %p435 = pneg %p239
        %p436 = pneg %p270
        %p437 = pneg %p267
        %s438 = smul.u32 3, %s27
        %p439 = scmp.lt.s32.totalorder %s26, 1
        %s440 = scalar_select %p439, %s26, 1
        %p441 = scmp.lt.s32.totalorder %s438, 2
        %s442 = scalar_select %p441, %s438, 2
        %s443 = smul.addr %s440, 3
        %s444 = sadd.s32 %s442, %s443
        %s445 = smul.addr %s444, 8
        %s446 = scalar_lea.vmem %s9, %s445
        %s447 = smul.u32 3, %s27
        %p448 = scmp.lt.s32.totalorder %s26, 1
        %s449 = scalar_select %p448, %s26, 1
        %p450 = scmp.lt.s32.totalorder %s447, 2
        %s451 = scalar_select %p450, %s447, 2
        %s452 = smul.addr %s449, 12
        %s453 = sadd.s32 %s451, %s452
        %s454 = smul.addr %s453, 8
        %s455 = scalar_lea.vmem %s0, %s454
        %s456 = smul.u32 3, %s27
        %p457 = scmp.lt.s32.totalorder %s26, 1
        %s458 = scalar_select %p457, %s26, 1
        %s459 = smul.addr %s458, 12
        %s460 = smul.addr %s459, 8
        %s461 = scalar_lea.vmem %s1, %s460
        %p462 = scmp.lt.s32.totalorder %s26, 1
        %s463 = scalar_select %p462, %s26, 1
        %s464 = smul.addr %s463, 12
        %s465 = smul.addr %s464, 8
        %s466 = scalar_lea.vmem %s2, %s465
        %s467 = smul.u32 3, %s27
        %p468 = scmp.lt.s32.totalorder %s26, 1
        %s469 = scalar_select %p468, %s26, 1
        %p470 = scmp.lt.s32.totalorder %s467, 2
        %s471 = scalar_select %p470, %s467, 2
        %s472 = smul.addr %s469, 3
        %s473 = sadd.s32 %s471, %s472
        %s474 = smul.addr %s473, 8
        %s475 = scalar_lea.vmem %s8, %s474
        %s476 = smul.u32 3, %s27
        %s477 = smul.u32 3, %s27
        %p478 = scmp.lt.s32.totalorder %s26, 1
        %s479 = scalar_select %p478, %s26, 1
        %p480 = scmp.lt.s32.totalorder %s477, 2
        %s481 = scalar_select %p480, %s477, 2
        %s482 = smul.addr %s479, 3
        %s483 = sadd.s32 %s481, %s482
        %s484 = smul.addr %s483, 8
        %s485 = scalar_lea.vmem %s9, %s484
        %s486 = smul.u32 3, %s27
        %v488 = vld [vmem:[%s455] sm:$0xff]
        %v489 = vld [vmem:[%s455 + $0x8] sm:$0xff]
        %v490 = vld [vmem:[%s455 + $0x10] sm:$0xff]
        %v491 = vld [vmem:[%s455 + $0x18] sm:$0xff]
        %v492 = vld [vmem:[%s455 + $0x20] sm:$0xff]
        %v493 = vld [vmem:[%s455 + $0x28] sm:$0xff]
        %v494 = vld [vmem:[%s455 + $0x30] sm:$0xff]
        %v495 = vld [vmem:[%s455 + $0x38] sm:$0xff]
        %v496 = vld [vmem:[%s455 + $0x40] sm:$0xff]
        %v497 = vld [vmem:[%s455 + $0x48] sm:$0xff]
        %v498 = vld [vmem:[%s455 + $0x50] sm:$0xff]
        %v499 = vld [vmem:[%s455 + $0x58] sm:$0xff]
        %v500 = vpack.c.bf16 %v488, %v488
        %v501 = vpack.c.bf16 %v489, %v489
        %v502 = vpack.c.bf16 %v490, %v490
        %v503 = vpack.c.bf16 %v491, %v491
        %v504 = vpack.c.bf16 %v492, %v492
        %v505 = vpack.c.bf16 %v493, %v493
        %v506 = vpack.c.bf16 %v494, %v494
        %v507 = vpack.c.bf16 %v495, %v495
        %v508 = vpack.c.bf16 %v496, %v496
        %v509 = vpack.c.bf16 %v497, %v497
        %v510 = vpack.c.bf16 %v498, %v498
        %v511 = vpack.c.bf16 %v499, %v499
        %v512 = vld [vmem:[%s461] sm:$0xff]
        %v513 = vld [vmem:[%s461 + $0x8] sm:$0xff]
        %v514 = vld [vmem:[%s461 + $0x10] sm:$0xff]
        %v515 = vld [vmem:[%s461 + $0x18] sm:$0xff]
        %v516 = vld [vmem:[%s461 + $0x20] sm:$0xff]
        %v517 = vld [vmem:[%s461 + $0x28] sm:$0xff]
        %v518 = vld [vmem:[%s461 + $0x30] sm:$0xff]
        %v519 = vld [vmem:[%s461 + $0x38] sm:$0xff]
        %v520 = vld [vmem:[%s461 + $0x40] sm:$0xff]
        %v521 = vld [vmem:[%s461 + $0x48] sm:$0xff]
        %v522 = vld [vmem:[%s461 + $0x50] sm:$0xff]
        %v523 = vld [vmem:[%s461 + $0x58] sm:$0xff]
        %v524 = vpack.c.bf16 %v512, %v512
        %v525 = vpack.c.bf16 %v513, %v513
        %v526 = vpack.c.bf16 %v514, %v514
        %v527 = vpack.c.bf16 %v515, %v515
        %v528 = vpack.c.bf16 %v516, %v516
        %v529 = vpack.c.bf16 %v517, %v517
        %v530 = vpack.c.bf16 %v518, %v518
        %v531 = vpack.c.bf16 %v519, %v519
        %v532 = vpack.c.bf16 %v520, %v520
        %v533 = vpack.c.bf16 %v521, %v521
        %v534 = vpack.c.bf16 %v522, %v522
        %v535 = vpack.c.bf16 %v523, %v523
        %v536 = vld [vmem:[%s466] sm:$0xff]
        %v537 = vld [vmem:[%s466 + $0x8] sm:$0xff]
        %v538 = vld [vmem:[%s466 + $0x10] sm:$0xff]
        %v539 = vld [vmem:[%s466 + $0x18] sm:$0xff]
        %v540 = vld [vmem:[%s466 + $0x20] sm:$0xff]
        %v541 = vld [vmem:[%s466 + $0x28] sm:$0xff]
        %v542 = vld [vmem:[%s466 + $0x30] sm:$0xff]
        %v543 = vld [vmem:[%s466 + $0x38] sm:$0xff]
        %v544 = vld [vmem:[%s466 + $0x40] sm:$0xff]
        %v545 = vld [vmem:[%s466 + $0x48] sm:$0xff]
        %v546 = vld [vmem:[%s466 + $0x50] sm:$0xff]
        %v547 = vld [vmem:[%s466 + $0x58] sm:$0xff]
        %v551 = vunpack.c.l.b16 %v500
        %v552 = vunpack.c.l.b16 %v501
        %v553 = vunpack.c.l.b16 %v502
        %v554 = vpack.c.b16 %v552, %v551
        %v555 = vpack.c.b16 %v553, %v553
        %v559 = vunpack.c.l.b16 %v524
        %v560 = vunpack.c.l.b16 %v525
        %v561 = vunpack.c.l.b16 %v526
        %v562 = vpack.c.b16 %v560, %v559
        %v563 = vpack.c.b16 %v561, %v561
        %vm564 = vcmask 261120
        %v566 = vsel %vm564, %v554, 0
        %v569 = vsel %vm564, %v555, 0
        %v572 = vsel %vm564, %v562, 0
        %v575 = vsel %vm564, %v563, 0
        %577 = vmatpush.bf16.xpose.msra.mxu0 0
        %578 = vmatpush.bf16.xpose.msra.mxu0 0
        %579 = vmatpush.bf16.xpose.msra.mxu0 0
        %580 = vmatpush.bf16.xpose.msra.mxu0 0
        %581 = vmatpush.bf16.xpose.msra.mxu0 0
        %582 = vmatpush.bf16.xpose.msra.mxu0 0
        %583 = vmatpush.bf16.xpose.msra.mxu0 %v575
        %584 = vmatpush.bf16.xpose.msra.mxu0 %v572
        %585 = vmatmul.bf16.gmra.mxu0 %v566
        %v586 = vpop.f32.mrf.mxu0
        %v587 = vadd.f32 0.0, %v586
        %v588 = vpop.f32.mrf.mxu0
        %v589 = vadd.f32 0.0, %v588
        %590 = vmatmul.bf16.gmra.mxu0 %v569
        %v591 = vpop.f32.mrf.mxu0
        %v592 = vadd.f32 0.0, %v591
        %v593 = vpop.f32.mrf.mxu0
        %594 = vdwg.mxu0
        %v598 = vunpack.c.l.b16 %v503
        %v599 = vunpack.c.l.b16 %v504
        %v600 = vunpack.c.l.b16 %v505
        %v601 = vpack.c.b16 %v599, %v598
        %v602 = vpack.c.b16 %v600, %v600
        %v606 = vunpack.c.l.b16 %v527
        %v607 = vunpack.c.l.b16 %v528
        %v608 = vunpack.c.l.b16 %v529
        %v609 = vpack.c.b16 %v607, %v606
        %v610 = vpack.c.b16 %v608, %v608
        %v612 = vsel %vm564, %v601, 0
        %v615 = vsel %vm564, %v602, 0
        %v618 = vsel %vm564, %v609, 0
        %v621 = vsel %vm564, %v610, 0
        %623 = vmatpush.bf16.xpose.msra.mxu0 0
        %624 = vmatpush.bf16.xpose.msra.mxu0 0
        %625 = vmatpush.bf16.xpose.msra.mxu0 0
        %626 = vmatpush.bf16.xpose.msra.mxu0 0
        %627 = vmatpush.bf16.xpose.msra.mxu0 0
        %628 = vmatpush.bf16.xpose.msra.mxu0 0
        %629 = vmatpush.bf16.xpose.msra.mxu0 %v621
        %630 = vmatpush.bf16.xpose.msra.mxu0 %v618
        %631 = vmatmul.bf16.gmra.mxu0 %v612
        %v632 = vpop.f32.mrf.mxu0
        %v633 = vadd.f32 0.0, %v632
        %v634 = vpop.f32.mrf.mxu0
        %v635 = vadd.f32 0.0, %v634
        %636 = vmatmul.bf16.gmra.mxu0 %v615
        %v637 = vpop.f32.mrf.mxu0
        %v638 = vadd.f32 0.0, %v637
        %v639 = vpop.f32.mrf.mxu0
        %640 = vdwg.mxu0
        %v644 = vunpack.c.l.b16 %v506
        %v645 = vunpack.c.l.b16 %v507
        %v646 = vunpack.c.l.b16 %v508
        %v647 = vpack.c.b16 %v645, %v644
        %v648 = vpack.c.b16 %v646, %v646
        %v652 = vunpack.c.l.b16 %v530
        %v653 = vunpack.c.l.b16 %v531
        %v654 = vunpack.c.l.b16 %v532
        %v655 = vpack.c.b16 %v653, %v652
        %v656 = vpack.c.b16 %v654, %v654
        %v658 = vsel %vm564, %v647, 0
        %v661 = vsel %vm564, %v648, 0
        %v664 = vsel %vm564, %v655, 0
        %v667 = vsel %vm564, %v656, 0
        %669 = vmatpush.bf16.xpose.msra.mxu0 0
        %670 = vmatpush.bf16.xpose.msra.mxu0 0
        %671 = vmatpush.bf16.xpose.msra.mxu0 0
        %672 = vmatpush.bf16.xpose.msra.mxu0 0
        %673 = vmatpush.bf16.xpose.msra.mxu0 0
        %674 = vmatpush.bf16.xpose.msra.mxu0 0
        %675 = vmatpush.bf16.xpose.msra.mxu0 %v667
        %676 = vmatpush.bf16.xpose.msra.mxu0 %v664
        %677 = vmatmul.bf16.gmra.mxu0 %v658
        %v678 = vpop.f32.mrf.mxu0
        %v679 = vadd.f32 0.0, %v678
        %v680 = vpop.f32.mrf.mxu0
        %v681 = vadd.f32 0.0, %v680
        %682 = vmatmul.bf16.gmra.mxu0 %v661
        %v683 = vpop.f32.mrf.mxu0
        %v684 = vadd.f32 0.0, %v683
        %v685 = vpop.f32.mrf.mxu0
        %686 = vdwg.mxu0
        %v690 = vunpack.c.l.b16 %v509
        %v691 = vunpack.c.l.b16 %v510
        %v692 = vunpack.c.l.b16 %v511
        %v693 = vpack.c.b16 %v691, %v690
        %v694 = vpack.c.b16 %v692, %v692
        %v698 = vunpack.c.l.b16 %v533
        %v699 = vunpack.c.l.b16 %v534
        %v700 = vunpack.c.l.b16 %v535
        %v701 = vpack.c.b16 %v699, %v698
        %v702 = vpack.c.b16 %v700, %v700
        %v704 = vsel %vm564, %v693, 0
        %v707 = vsel %vm564, %v694, 0
        %v710 = vsel %vm564, %v701, 0
        %v713 = vsel %vm564, %v702, 0
        %715 = vmatpush.bf16.xpose.msra.mxu0 0
        %716 = vmatpush.bf16.xpose.msra.mxu0 0
        %717 = vmatpush.bf16.xpose.msra.mxu0 0
        %718 = vmatpush.bf16.xpose.msra.mxu0 0
        %719 = vmatpush.bf16.xpose.msra.mxu0 0
        %720 = vmatpush.bf16.xpose.msra.mxu0 0
        %721 = vmatpush.bf16.xpose.msra.mxu0 %v713
        %722 = vmatpush.bf16.xpose.msra.mxu0 %v710
        %723 = vmatmul.bf16.gmra.mxu0 %v704
        %v724 = vpop.f32.mrf.mxu0
        %v725 = vadd.f32 0.0, %v724
        %v726 = vpop.f32.mrf.mxu0
        %v727 = vadd.f32 0.0, %v726
        %728 = vmatmul.bf16.gmra.mxu0 %v707
        %v729 = vpop.f32.mrf.mxu0
        %v730 = vadd.f32 0.0, %v729
        %v731 = vpop.f32.mrf.mxu0
        %732 = vdwg.mxu0
        %s733 = smul.u32 %s27, 24
        %v734 = vlaneseq
        %v735 = vshrl.u32 %v734, 7
        %v736 = vadd.s32 %v735, 8
        %v737 = vadd.s32 %v735, 16
        %v738 = vstv %s733
        %v739 = vadd.s32 %v735, %v738
        %v740 = vadd.s32 %v736, %v738
        %v741 = vadd.s32 %v737, %v738
        %v742 = vlaneseq
        %v743 = vand.u32 %v742, 127
        %vm744 = vcmp.eq.s32.totalorder %v743, %v739
        %vm745 = vcmp.eq.s32.totalorder %v743, %v740
        %vm746 = vcmp.eq.s32.totalorder %v743, %v741
        %vm747 = vcmp.ge.s32.totalorder %v743, 17
        %vm748 = vmor %vm744, %vm747
        %vm749 = vmor %vm745, %vm747
        %vm750 = vmor %vm746, %vm747
        %v751 = vsel %vm748, 1, 0
        %v752 = vsel %vm749, 1, 0
        %v753 = vsel %vm750, 1, 0
        %vm754 = vcmp.eq.s32.totalorder %v751, 1
        %vm755 = vcmp.eq.s32.totalorder %v752, 1
        %vm756 = vcmp.eq.s32.totalorder %v753, 1
        %v757 = vsel %vm754, -1e+30, %v587
        %v758 = vsel %vm755, -1e+30, %v589
        %v759 = vsel %vm756, -1e+30, %v592
        %v760 = vsel %vm754, -1e+30, %v633
        %v761 = vsel %vm755, -1e+30, %v635
        %v762 = vsel %vm756, -1e+30, %v638
        %v763 = vsel %vm754, -1e+30, %v679
        %v764 = vsel %vm755, -1e+30, %v681
        %v765 = vsel %vm756, -1e+30, %v684
        %v766 = vsel %vm754, -1e+30, %v725
        %v767 = vsel %vm755, -1e+30, %v727
        %v768 = vsel %vm756, -1e+30, %v730
        %vm769 = vcmask 195584
        %v770 = vsel %vm769, %v757, -inf
        %771 = vmax.xlane.f32.xlu0 %v770
        %v772 = vpop.xlane.xlu0 %771
        %v773 = vsel %vm769, %v758, -inf
        %774 = vmax.xlane.f32.xlu0 %v773
        %v775 = vpop.xlane.xlu0 %774
        %v776 = vsel %vm769, %v759, -inf
        %777 = vmax.xlane.f32.xlu0 %v776
        %v778 = vpop.xlane.xlu0 %777
        %v779 = vsel %vm769, %v760, -inf
        %780 = vmax.xlane.f32.xlu0 %v779
        %v781 = vpop.xlane.xlu0 %780
        %v782 = vsel %vm769, %v761, -inf
        %783 = vmax.xlane.f32.xlu0 %v782
        %v784 = vpop.xlane.xlu0 %783
        %v785 = vsel %vm769, %v762, -inf
        %786 = vmax.xlane.f32.xlu0 %v785
        %v787 = vpop.xlane.xlu0 %786
        %v788 = vsel %vm769, %v763, -inf
        %789 = vmax.xlane.f32.xlu0 %v788
        %v790 = vpop.xlane.xlu0 %789
        %v791 = vsel %vm769, %v764, -inf
        %792 = vmax.xlane.f32.xlu0 %v791
        %v793 = vpop.xlane.xlu0 %792
        %v794 = vsel %vm769, %v765, -inf
        %795 = vmax.xlane.f32.xlu0 %v794
        %v796 = vpop.xlane.xlu0 %795
        %v797 = vsel %vm769, %v766, -inf
        %798 = vmax.xlane.f32.xlu0 %v797
        %v799 = vpop.xlane.xlu0 %798
        %v800 = vsel %vm769, %v767, -inf
        %801 = vmax.xlane.f32.xlu0 %v800
        %v802 = vpop.xlane.xlu0 %801
        %v803 = vsel %vm769, %v768, -inf
        %804 = vmax.xlane.f32.xlu0 %v803
        %v805 = vpop.xlane.xlu0 %804
        %v806 = vsub.f32 %v757, %v772
        %v807 = vsub.f32 %v758, %v775
        %v808 = vsub.f32 %v759, %v778
        %v809 = vsub.f32 %v760, %v781
        %v810 = vsub.f32 %v761, %v784
        %v811 = vsub.f32 %v762, %v787
        %v812 = vsub.f32 %v763, %v790
        %v813 = vsub.f32 %v764, %v793
        %v814 = vsub.f32 %v765, %v796
        %v815 = vsub.f32 %v766, %v799
        %v816 = vsub.f32 %v767, %v802
        %v817 = vsub.f32 %v768, %v805
        %v818 = vmul.f32 %v806, 1.442695
        %v819 = vpow.pop %v818
        %v820 = vmul.f32 %v807, 1.442695
        %v821 = vpow.pop %v820
        %v822 = vmul.f32 %v808, 1.442695
        %v823 = vpow.pop %v822
        %v824 = vmul.f32 %v809, 1.442695
        %v825 = vpow.pop %v824
        %v826 = vmul.f32 %v810, 1.442695
        %v827 = vpow.pop %v826
        %v828 = vmul.f32 %v811, 1.442695
        %v829 = vpow.pop %v828
        %v830 = vmul.f32 %v812, 1.442695
        %v831 = vpow.pop %v830
        %v832 = vmul.f32 %v813, 1.442695
        %v833 = vpow.pop %v832
        %v834 = vmul.f32 %v814, 1.442695
        %v835 = vpow.pop %v834
        %v836 = vmul.f32 %v815, 1.442695
        %v837 = vpow.pop %v836
        %v838 = vmul.f32 %v816, 1.442695
        %v839 = vpow.pop %v838
        %v840 = vmul.f32 %v817, 1.442695
        %v841 = vpow.pop %v840
        %v842 = vsel %vm769, %v819, 0.0
        %843 = vadd.xlane.f32.xlu0 %v842
        %v844 = vpop.xlane.xlu0 %843
        %v845 = vsel %vm769, %v821, 0.0
        %846 = vadd.xlane.f32.xlu0 %v845
        %v847 = vpop.xlane.xlu0 %846
        %v848 = vsel %vm769, %v823, 0.0
        %849 = vadd.xlane.f32.xlu0 %v848
        %v850 = vpop.xlane.xlu0 %849
        %v851 = vsel %vm769, %v825, 0.0
        %852 = vadd.xlane.f32.xlu0 %v851
        %v853 = vpop.xlane.xlu0 %852
        %v854 = vsel %vm769, %v827, 0.0
        %855 = vadd.xlane.f32.xlu0 %v854
        %v856 = vpop.xlane.xlu0 %855
        %v857 = vsel %vm769, %v829, 0.0
        %858 = vadd.xlane.f32.xlu0 %v857
        %v859 = vpop.xlane.xlu0 %858
        %v860 = vsel %vm769, %v831, 0.0
        %861 = vadd.xlane.f32.xlu0 %v860
        %v862 = vpop.xlane.xlu0 %861
        %v863 = vsel %vm769, %v833, 0.0
        %864 = vadd.xlane.f32.xlu0 %v863
        %v865 = vpop.xlane.xlu0 %864
        %v866 = vsel %vm769, %v835, 0.0
        %867 = vadd.xlane.f32.xlu0 %v866
        %v868 = vpop.xlane.xlu0 %867
        %v869 = vsel %vm769, %v837, 0.0
        %870 = vadd.xlane.f32.xlu0 %v869
        %v871 = vpop.xlane.xlu0 %870
        %v872 = vsel %vm769, %v839, 0.0
        %873 = vadd.xlane.f32.xlu0 %v872
        %v874 = vpop.xlane.xlu0 %873
        %v875 = vsel %vm769, %v841, 0.0
        %876 = vadd.xlane.f32.xlu0 %v875
        %v877 = vpop.xlane.xlu0 %876
        %v878 = vrcp.pop %v844
        %v879 = vrcp.pop %v847
        %v880 = vrcp.pop %v850
        %v881 = vrcp.pop %v853
        %v882 = vrcp.pop %v856
        %v883 = vrcp.pop %v859
        %v884 = vrcp.pop %v862
        %v885 = vrcp.pop %v865
        %v886 = vrcp.pop %v868
        %v887 = vrcp.pop %v871
        %v888 = vrcp.pop %v874
        %v889 = vrcp.pop %v877
        %v890 = vmul.f32 %v819, %v878
        %v891 = vmul.f32 %v821, %v879
        %v892 = vmul.f32 %v823, %v880
        %v893 = vmul.f32 %v825, %v881
        %v894 = vmul.f32 %v827, %v882
        %v895 = vmul.f32 %v829, %v883
        %v896 = vmul.f32 %v831, %v884
        %v897 = vmul.f32 %v833, %v885
        %v898 = vmul.f32 %v835, %v886
        %v899 = vmul.f32 %v837, %v887
        %v900 = vmul.f32 %v839, %v888
        %v901 = vmul.f32 %v841, %v889
        %s902 = sld [smem:[#allocation2]]
        %v903 = vstv %s902
        %v904 = vmul.f32 %v890, %v903
        %v905 = vmul.f32 %v891, %v903
        %v906 = vmul.f32 %v892, %v903
        %s907 = sld [smem:[#allocation2 + $0x80]]
        %v908 = vstv %s907
        %v909 = vmul.f32 %v893, %v908
        %v910 = vmul.f32 %v894, %v908
        %v911 = vmul.f32 %v895, %v908
        %v912 = vadd.f32 %v904, %v909
        %v913 = vadd.f32 %v905, %v910
        %v914 = vadd.f32 %v906, %v911
        %s915 = sld [smem:[#allocation2 + $0x100]]
        %v916 = vstv %s915
        %v917 = vmul.f32 %v896, %v916
        %v918 = vmul.f32 %v897, %v916
        %v919 = vmul.f32 %v898, %v916
        %v920 = vadd.f32 %v912, %v917
        %v921 = vadd.f32 %v913, %v918
        %v922 = vadd.f32 %v914, %v919
        %s923 = sld [smem:[#allocation2 + $0x180]]
        %v924 = vstv %s923
        %v925 = vmul.f32 %v899, %v924
        %v926 = vmul.f32 %v900, %v924
        %v927 = vmul.f32 %v901, %v924
        %v928 = vadd.f32 %v920, %v925
        %v929 = vadd.f32 %v921, %v926
        %v930 = vadd.f32 %v922, %v927
        %s931 = sld [smem:[#allocation2 + $0x1]]
        %v932 = vstv %s931
        %v933 = vmul.f32 %v890, %v932
        %v934 = vmul.f32 %v891, %v932
        %v935 = vmul.f32 %v892, %v932
        %s936 = sld [smem:[#allocation2 + $0x81]]
        %v937 = vstv %s936
        %v938 = vmul.f32 %v893, %v937
        %v939 = vmul.f32 %v894, %v937
        %v940 = vmul.f32 %v895, %v937
        %v941 = vadd.f32 %v933, %v938
        %v942 = vadd.f32 %v934, %v939
        %v943 = vadd.f32 %v935, %v940
        %s944 = sld [smem:[#allocation2 + $0x101]]
        %v945 = vstv %s944
        %v946 = vmul.f32 %v896, %v945
        %v947 = vmul.f32 %v897, %v945
        %v948 = vmul.f32 %v898, %v945
        %v949 = vadd.f32 %v941, %v946
        %v950 = vadd.f32 %v942, %v947
        %v951 = vadd.f32 %v943, %v948
        %s952 = sld [smem:[#allocation2 + $0x181]]
        %v953 = vstv %s952
        %v954 = vmul.f32 %v899, %v953
        %v955 = vmul.f32 %v900, %v953
        %v956 = vmul.f32 %v901, %v953
        %v957 = vadd.f32 %v949, %v954
        %v958 = vadd.f32 %v950, %v955
        %v959 = vadd.f32 %v951, %v956
        %s960 = sld [smem:[#allocation2 + $0x2]]
        %v961 = vstv %s960
        %v962 = vmul.f32 %v890, %v961
        %v963 = vmul.f32 %v891, %v961
        %v964 = vmul.f32 %v892, %v961
        %s965 = sld [smem:[#allocation2 + $0x82]]
        %v966 = vstv %s965
        %v967 = vmul.f32 %v893, %v966
        %v968 = vmul.f32 %v894, %v966
        %v969 = vmul.f32 %v895, %v966
        %v970 = vadd.f32 %v962, %v967
        %v971 = vadd.f32 %v963, %v968
        %v972 = vadd.f32 %v964, %v969
        %s973 = sld [smem:[#allocation2 + $0x102]]
        %v974 = vstv %s973
        %v975 = vmul.f32 %v896, %v974
        %v976 = vmul.f32 %v897, %v974
        %v977 = vmul.f32 %v898, %v974
        %v978 = vadd.f32 %v970, %v975
        %v979 = vadd.f32 %v971, %v976
        %v980 = vadd.f32 %v972, %v977
        %s981 = sld [smem:[#allocation2 + $0x182]]
        %v982 = vstv %s981
        %v983 = vmul.f32 %v899, %v982
        %v984 = vmul.f32 %v900, %v982
        %v985 = vmul.f32 %v901, %v982
        %v986 = vadd.f32 %v978, %v983
        %v987 = vadd.f32 %v979, %v984
        %v988 = vadd.f32 %v980, %v985
        %s989 = sld [smem:[#allocation2 + $0x3]]
        %v990 = vstv %s989
        %v991 = vmul.f32 %v890, %v990
        %v992 = vmul.f32 %v891, %v990
        %v993 = vmul.f32 %v892, %v990
        %s994 = sld [smem:[#allocation2 + $0x83]]
        %v995 = vstv %s994
        %v996 = vmul.f32 %v893, %v995
        %v997 = vmul.f32 %v894, %v995
        %v998 = vmul.f32 %v895, %v995
        %v999 = vadd.f32 %v991, %v996
        %v1000 = vadd.f32 %v992, %v997
        %v1001 = vadd.f32 %v993, %v998
        %s1002 = sld [smem:[#allocation2 + $0x103]]
        %v1003 = vstv %s1002
        %v1004 = vmul.f32 %v896, %v1003
        %v1005 = vmul.f32 %v897, %v1003
        %v1006 = vmul.f32 %v898, %v1003
        %v1007 = vadd.f32 %v999, %v1004
        %v1008 = vadd.f32 %v1000, %v1005
        %v1009 = vadd.f32 %v1001, %v1006
        %s1010 = sld [smem:[#allocation2 + $0x183]]
        %v1011 = vstv %s1010
        %v1012 = vmul.f32 %v899, %v1011
        %v1013 = vmul.f32 %v900, %v1011
        %v1014 = vmul.f32 %v901, %v1011
        %v1015 = vadd.f32 %v1007, %v1012
        %v1016 = vadd.f32 %v1008, %v1013
        %v1017 = vadd.f32 %v1009, %v1014
        %v1018 = vadd.f32 %v928, %v957
        %v1019 = vadd.f32 %v929, %v958
        %v1020 = vadd.f32 %v930, %v959
        %v1021 = vadd.f32 %v1018, %v986
        %v1022 = vadd.f32 %v1019, %v987
        %v1023 = vadd.f32 %v1020, %v988
        %v1024 = vadd.f32 %v1021, %v1015
        %v1025 = vadd.f32 %v1022, %v1016
        %v1026 = vadd.f32 %v1023, %v1017
        %v1027 = vmul.f32 %v1024, 0.25
        %v1028 = vmul.f32 %v1025, 0.25
        %v1029 = vmul.f32 %v1026, 0.25
        %v1030 = vsub.f32 %v928, %v1027
        %v1031 = vsub.f32 %v929, %v1028
        %v1032 = vsub.f32 %v930, %v1029
        %v1033 = vmul.f32 %v1030, %v1030
        %v1034 = vmul.f32 %v1031, %v1031
        %v1035 = vmul.f32 %v1032, %v1032
        %v1036 = vsub.f32 %v957, %v1027
        %v1037 = vsub.f32 %v958, %v1028
        %v1038 = vsub.f32 %v959, %v1029
        %v1039 = vmul.f32 %v1036, %v1036
        %v1040 = vmul.f32 %v1037, %v1037
        %v1041 = vmul.f32 %v1038, %v1038
        %v1042 = vadd.f32 %v1033, %v1039
        %v1043 = vadd.f32 %v1034, %v1040
        %v1044 = vadd.f32 %v1035, %v1041
        %v1045 = vsub.f32 %v986, %v1027
        %v1046 = vsub.f32 %v987, %v1028
        %v1047 = vsub.f32 %v988, %v1029
        %v1048 = vmul.f32 %v1045, %v1045
        %v1049 = vmul.f32 %v1046, %v1046
        %v1050 = vmul.f32 %v1047, %v1047
        %v1051 = vadd.f32 %v1042, %v1048
        %v1052 = vadd.f32 %v1043, %v1049
        %v1053 = vadd.f32 %v1044, %v1050
        %v1054 = vsub.f32 %v1015, %v1027
        %v1055 = vsub.f32 %v1016, %v1028
        %v1056 = vsub.f32 %v1017, %v1029
        %v1057 = vmul.f32 %v1054, %v1054
        %v1058 = vmul.f32 %v1055, %v1055
        %v1059 = vmul.f32 %v1056, %v1056
        %v1060 = vadd.f32 %v1051, %v1057
        %v1061 = vadd.f32 %v1052, %v1058
        %v1062 = vadd.f32 %v1053, %v1059
        %v1063 = vmul.f32 %v1060, 0.25
        %v1064 = vmul.f32 %v1061, 0.25
        %v1065 = vmul.f32 %v1062, 0.25
        %v1066 = vadd.f32 %v1063, 1e-05
        %v1067 = vadd.f32 %v1064, 1e-05
        %v1068 = vadd.f32 %v1065, 1e-05
        %v1069 = vrsqrt.pop %v1066
        %v1070 = vmul.f32 %v1069, %v1066
        %v1071 = vmul.f32 %v1070, %v1069
        %v1072 = vmul.f32 0.5, %v1071
        %v1073 = vsub.f32 1.5, %v1072
        %v1074 = vmul.f32 %v1069, %v1073
        %vm1075 = vweird.f32 %v1066
        %vm1076 = vweird.f32 %v1069
        %vm1077 = vmor %vm1075, %vm1076
        %v1078 = vsel %vm1077, %v1069, %v1074
        %v1079 = vrsqrt.pop %v1067
        %v1080 = vmul.f32 %v1079, %v1067
        %v1081 = vmul.f32 %v1080, %v1079
        %v1082 = vmul.f32 0.5, %v1081
        %v1083 = vsub.f32 1.5, %v1082
        %v1084 = vmul.f32 %v1079, %v1083
        %vm1085 = vweird.f32 %v1067
        %vm1086 = vweird.f32 %v1079
        %vm1087 = vmor %vm1085, %vm1086
        %v1088 = vsel %vm1087, %v1079, %v1084
        %v1089 = vrsqrt.pop %v1068
        %v1090 = vmul.f32 %v1089, %v1068
        %v1091 = vmul.f32 %v1090, %v1089
        %v1092 = vmul.f32 0.5, %v1091
        %v1093 = vsub.f32 1.5, %v1092
        %v1094 = vmul.f32 %v1089, %v1093
        %vm1095 = vweird.f32 %v1068
        %vm1096 = vweird.f32 %v1089
        %vm1097 = vmor %vm1095, %vm1096
        %v1098 = vsel %vm1097, %v1089, %v1094
        %vm1099 = vcmp.lt.s32.totalorder %v735, 17
        %vm1100 = vcmp.lt.s32.totalorder %v736, 17
        %vm1101 = vcmp.lt.s32.totalorder %v737, 17
        %v1102 = vsel %vm1099, 1, 0
        %v1103 = vsel %vm1100, 1, 0
        %v1104 = vsel %vm1101, 1, 0
        %vm1105 = vcmp.eq.s32.totalorder %v1102, 1
        %vm1106 = vcmp.eq.s32.totalorder %v1103, 1
        %vm1107 = vcmp.eq.s32.totalorder %v1104, 1
        %v1108 = vsel %vm1105, %v536, 0.0
        %v1109 = vsel %vm1106, %v537, 0.0
        %v1110 = vsel %vm1107, %v538, 0.0
        %v1111 = vsel %vm1105, %v539, 0.0
        %v1112 = vsel %vm1106, %v540, 0.0
        %v1113 = vsel %vm1107, %v541, 0.0
        %v1114 = vsel %vm1105, %v542, 0.0
        %v1115 = vsel %vm1106, %v543, 0.0
        %v1116 = vsel %vm1107, %v544, 0.0
        %v1117 = vsel %vm1105, %v545, 0.0
        %v1118 = vsel %vm1106, %v546, 0.0
        %v1119 = vsel %vm1107, %v547, 0.0
        %v1120 = vld [vmem:[%s7] sm:$0x1]
        %v1121 = vld [vmem:[%s475] sm:$0xff]
        %v1122 = vld [vmem:[%s475 + $0x8] sm:$0xff]
        %v1123 = vld [vmem:[%s475 + $0x10] sm:$0xff]
        %v1124 = vmul.f32 %v1121, 2.0
        %v1125 = vmul.f32 %v1122, 2.0
        %v1126 = vmul.f32 %v1123, 2.0
        %v1128 = vperm.slane %v1120, 0
        %v1130 = vadd.f32 %v1128, %v1124
        %v1131 = vadd.f32 %v1128, %v1125
        %v1132 = vadd.f32 %v1128, %v1126
        %v1133 = vmul.f32 %v1030, %v1078
        %v1134 = vmul.f32 %v1031, %v1088
        %v1135 = vmul.f32 %v1032, %v1098
        %s1136 = sld [smem:[#allocation4]]
        %v1137 = vstv %s1136
        %v1138 = vmul.f32 %v1133, %v1137
        %v1139 = vmul.f32 %v1134, %v1137
        %v1140 = vmul.f32 %v1135, %v1137
        %s1141 = sld [smem:[#allocation6]]
        %v1142 = vstv %s1141
        %v1143 = vadd.f32 %v1138, %v1142
        %v1144 = vadd.f32 %v1139, %v1142
        %v1145 = vadd.f32 %v1140, %v1142
        %v1146 = vpack.c.bf16 %v1144, %v1143
        %v1147 = vpack.c.bf16 %v1145, %v1145
        %v1148 = vpack.c.bf16 %v1109, %v1108
        %v1149 = vpack.c.bf16 %v1110, %v1110
        %v1151 = vsel %vm769, %v1146, 0
        %v1154 = vsel %vm769, %v1147, 0
        %vm1156 = vcmask 1043456
        %v1158 = vsel %vm1156, %v1149, 0
        %1160 = vmatpush.bf16.msra.mxu0 0
        %1161 = vmatpush.bf16.msra.mxu0 0
        %1162 = vmatpush.bf16.msra.mxu0 0
        %1163 = vmatpush.bf16.msra.mxu0 0
        %1164 = vmatpush.bf16.msra.mxu0 0
        %1165 = vmatpush.bf16.msra.mxu0 0
        %1166 = vmatpush.bf16.msra.mxu0 %v1158
        %1167 = vmatpush.bf16.msra.mxu0 %v1148
        %1168 = vmatmul.bf16.gmra.mxu0 %v1151
        %v1169 = vpop.f32.mrf.mxu0
        %v1170 = vadd.f32 0.0, %v1169
        %v1171 = vpop.f32.mrf.mxu0
        %v1172 = vadd.f32 0.0, %v1171
        %1173 = vmatmul.bf16.gmra.mxu0 %v1154
        %v1174 = vpop.f32.mrf.mxu0
        %v1175 = vadd.f32 0.0, %v1174
        %v1176 = vpop.f32.mrf.mxu0
        %1177 = vdwg.mxu0
        %v1178 = vpack.c.bf16 %v1172, %v1170
        %v1179 = vpack.c.bf16 %v1175, %v1175
        %v1180 = vld [vmem:[%s6] sm:$0xff]
        %v1181 = vld [vmem:[%s6 + $0x8] sm:$0xff]
        %v1182 = vld [vmem:[%s6 + $0x10] sm:$0xff]
        %v1183 = vld [vmem:[%s6 + $0x18] sm:$0xff]
        %v1184 = vpack.c.bf16 %v1181, %v1180
        %v1185 = vpack.c.bf16 %v1183, %v1182
        %v1187 = vsel %vm564, %v1178, 0
        %v1190 = vsel %vm564, %v1179, 0
        %1192 = vmatpush.bf16.msra.mxu0 0
        %1193 = vmatpush.bf16.msra.mxu0 0
        %1194 = vmatpush.bf16.msra.mxu0 0
        %1195 = vmatpush.bf16.msra.mxu0 0
        %1196 = vmatpush.bf16.msra.mxu0 0
        %1197 = vmatpush.bf16.msra.mxu0 0
        %1198 = vmatpush.bf16.msra.mxu0 %v1185
        %1199 = vmatpush.bf16.msra.mxu0 %v1184
        %1200 = vmatmul.bf16.gmra.mxu0 %v1187
        %v1201 = vpop.f32.mrf.mxu0
        %v1202 = vadd.f32 0.0, %v1201
        %v1203 = vpop.f32.mrf.mxu0
        %v1204 = vadd.f32 0.0, %v1203
        %1205 = vmatmul.bf16.gmra.mxu0 %v1190
        %v1206 = vpop.f32.mrf.mxu0
        %v1207 = vadd.f32 0.0, %v1206
        %v1208 = vpop.f32.mrf.mxu0
        %1209 = vdwg.mxu0
        %v1210 = vadd.f32 %v1130, %v1202
        %v1211 = vadd.f32 %v1131, %v1204
        %v1212 = vadd.f32 %v1132, %v1207
        %v1213 = vmul.f32 %v1036, %v1078
        %v1214 = vmul.f32 %v1037, %v1088
        %v1215 = vmul.f32 %v1038, %v1098
        %s1216 = sld [smem:[#allocation4 + $0x1]]
        %v1217 = vstv %s1216
        %v1218 = vmul.f32 %v1213, %v1217
        %v1219 = vmul.f32 %v1214, %v1217
        %v1220 = vmul.f32 %v1215, %v1217
        %s1221 = sld [smem:[#allocation6 + $0x1]]
        %v1222 = vstv %s1221
        %v1223 = vadd.f32 %v1218, %v1222
        %v1224 = vadd.f32 %v1219, %v1222
        %v1225 = vadd.f32 %v1220, %v1222
        %v1226 = vpack.c.bf16 %v1224, %v1223
        %v1227 = vpack.c.bf16 %v1225, %v1225
        %v1228 = vpack.c.bf16 %v1112, %v1111
        %v1229 = vpack.c.bf16 %v1113, %v1113
        %v1231 = vsel %vm769, %v1226, 0
        %v1234 = vsel %vm769, %v1227, 0
        %v1237 = vsel %vm1156, %v1229, 0
        %1239 = vmatpush.bf16.msra.mxu0 0
        %1240 = vmatpush.bf16.msra.mxu0 0
        %1241 = vmatpush.bf16.msra.mxu0 0
        %1242 = vmatpush.bf16.msra.mxu0 0
        %1243 = vmatpush.bf16.msra.mxu0 0
        %1244 = vmatpush.bf16.msra.mxu0 0
        %1245 = vmatpush.bf16.msra.mxu0 %v1237
        %1246 = vmatpush.bf16.msra.mxu0 %v1228
        %1247 = vmatmul.bf16.gmra.mxu0 %v1231
        %v1248 = vpop.f32.mrf.mxu0
        %v1249 = vadd.f32 0.0, %v1248
        %v1250 = vpop.f32.mrf.mxu0
        %v1251 = vadd.f32 0.0, %v1250
        %1252 = vmatmul.bf16.gmra.mxu0 %v1234
        %v1253 = vpop.f32.mrf.mxu0
        %v1254 = vadd.f32 0.0, %v1253
        %v1255 = vpop.f32.mrf.mxu0
        %1256 = vdwg.mxu0
        %v1257 = vpack.c.bf16 %v1251, %v1249
        %v1258 = vpack.c.bf16 %v1254, %v1254
        %s1259 = scalar_lea.vmem %s6, 32
        %v1260 = vld [vmem:[%s1259] sm:$0xff]
        %v1261 = vld [vmem:[%s1259 + $0x8] sm:$0xff]
        %v1262 = vld [vmem:[%s1259 + $0x10] sm:$0xff]
        %v1263 = vld [vmem:[%s1259 + $0x18] sm:$0xff]
        %v1264 = vpack.c.bf16 %v1261, %v1260
        %v1265 = vpack.c.bf16 %v1263, %v1262
        %v1267 = vsel %vm564, %v1257, 0
        %v1270 = vsel %vm564, %v1258, 0
        %1272 = vmatpush.bf16.msra.mxu0 0
        %1273 = vmatpush.bf16.msra.mxu0 0
        %1274 = vmatpush.bf16.msra.mxu0 0
        %1275 = vmatpush.bf16.msra.mxu0 0
        %1276 = vmatpush.bf16.msra.mxu0 0
        %1277 = vmatpush.bf16.msra.mxu0 0
        %1278 = vmatpush.bf16.msra.mxu0 %v1265
        %1279 = vmatpush.bf16.msra.mxu0 %v1264
        %1280 = vmatmul.bf16.gmra.mxu0 %v1267
        %v1281 = vpop.f32.mrf.mxu0
        %v1282 = vadd.f32 0.0, %v1281
        %v1283 = vpop.f32.mrf.mxu0
        %v1284 = vadd.f32 0.0, %v1283
        %1285 = vmatmul.bf16.gmra.mxu0 %v1270
        %v1286 = vpop.f32.mrf.mxu0
        %v1287 = vadd.f32 0.0, %v1286
        %v1288 = vpop.f32.mrf.mxu0
        %1289 = vdwg.mxu0
        %v1290 = vadd.f32 %v1210, %v1282
        %v1291 = vadd.f32 %v1211, %v1284
        %v1292 = vadd.f32 %v1212, %v1287
        %v1293 = vmul.f32 %v1045, %v1078
        %v1294 = vmul.f32 %v1046, %v1088
        %v1295 = vmul.f32 %v1047, %v1098
        %s1296 = sld [smem:[#allocation4 + $0x2]]
        %v1297 = vstv %s1296
        %v1298 = vmul.f32 %v1293, %v1297
        %v1299 = vmul.f32 %v1294, %v1297
        %v1300 = vmul.f32 %v1295, %v1297
        %s1301 = sld [smem:[#allocation6 + $0x2]]
        %v1302 = vstv %s1301
        %v1303 = vadd.f32 %v1298, %v1302
        %v1304 = vadd.f32 %v1299, %v1302
        %v1305 = vadd.f32 %v1300, %v1302
        %v1306 = vpack.c.bf16 %v1304, %v1303
        %v1307 = vpack.c.bf16 %v1305, %v1305
        %v1308 = vpack.c.bf16 %v1115, %v1114
        %v1309 = vpack.c.bf16 %v1116, %v1116
        %v1311 = vsel %vm769, %v1306, 0
        %v1314 = vsel %vm769, %v1307, 0
        %v1317 = vsel %vm1156, %v1309, 0
        %1319 = vmatpush.bf16.msra.mxu0 0
        %1320 = vmatpush.bf16.msra.mxu0 0
        %1321 = vmatpush.bf16.msra.mxu0 0
        %1322 = vmatpush.bf16.msra.mxu0 0
        %1323 = vmatpush.bf16.msra.mxu0 0
        %1324 = vmatpush.bf16.msra.mxu0 0
        %1325 = vmatpush.bf16.msra.mxu0 %v1317
        %1326 = vmatpush.bf16.msra.mxu0 %v1308
        %1327 = vmatmul.bf16.gmra.mxu0 %v1311
        %v1328 = vpop.f32.mrf.mxu0
        %v1329 = vadd.f32 0.0, %v1328
        %v1330 = vpop.f32.mrf.mxu0
        %v1331 = vadd.f32 0.0, %v1330
        %1332 = vmatmul.bf16.gmra.mxu0 %v1314
        %v1333 = vpop.f32.mrf.mxu0
        %v1334 = vadd.f32 0.0, %v1333
        %v1335 = vpop.f32.mrf.mxu0
        %1336 = vdwg.mxu0
        %v1337 = vpack.c.bf16 %v1331, %v1329
        %v1338 = vpack.c.bf16 %v1334, %v1334
        %s1339 = scalar_lea.vmem %s6, 64
        %v1340 = vld [vmem:[%s1339] sm:$0xff]
        %v1341 = vld [vmem:[%s1339 + $0x8] sm:$0xff]
        %v1342 = vld [vmem:[%s1339 + $0x10] sm:$0xff]
        %v1343 = vld [vmem:[%s1339 + $0x18] sm:$0xff]
        %v1344 = vpack.c.bf16 %v1341, %v1340
        %v1345 = vpack.c.bf16 %v1343, %v1342
        %v1347 = vsel %vm564, %v1337, 0
        %v1350 = vsel %vm564, %v1338, 0
        %1352 = vmatpush.bf16.msra.mxu0 0
        %1353 = vmatpush.bf16.msra.mxu0 0
        %1354 = vmatpush.bf16.msra.mxu0 0
        %1355 = vmatpush.bf16.msra.mxu0 0
        %1356 = vmatpush.bf16.msra.mxu0 0
        %1357 = vmatpush.bf16.msra.mxu0 0
        %1358 = vmatpush.bf16.msra.mxu0 %v1345
        %1359 = vmatpush.bf16.msra.mxu0 %v1344
        %1360 = vmatmul.bf16.gmra.mxu0 %v1347
        %v1361 = vpop.f32.mrf.mxu0
        %v1362 = vadd.f32 0.0, %v1361
        %v1363 = vpop.f32.mrf.mxu0
        %v1364 = vadd.f32 0.0, %v1363
        %1365 = vmatmul.bf16.gmra.mxu0 %v1350
        %v1366 = vpop.f32.mrf.mxu0
        %v1367 = vadd.f32 0.0, %v1366
        %v1368 = vpop.f32.mrf.mxu0
        %1369 = vdwg.mxu0
        %v1370 = vadd.f32 %v1290, %v1362
        %v1371 = vadd.f32 %v1291, %v1364
        %v1372 = vadd.f32 %v1292, %v1367
        %v1373 = vmul.f32 %v1054, %v1078
        %v1374 = vmul.f32 %v1055, %v1088
        %v1375 = vmul.f32 %v1056, %v1098
        %s1376 = sld [smem:[#allocation4 + $0x3]]
        %v1377 = vstv %s1376
        %v1378 = vmul.f32 %v1373, %v1377
        %v1379 = vmul.f32 %v1374, %v1377
        %v1380 = vmul.f32 %v1375, %v1377
        %s1381 = sld [smem:[#allocation6 + $0x3]]
        %v1382 = vstv %s1381
        %v1383 = vadd.f32 %v1378, %v1382
        %v1384 = vadd.f32 %v1379, %v1382
        %v1385 = vadd.f32 %v1380, %v1382
        %v1386 = vpack.c.bf16 %v1384, %v1383
        %v1387 = vpack.c.bf16 %v1385, %v1385
        %v1388 = vpack.c.bf16 %v1118, %v1117
        %v1389 = vpack.c.bf16 %v1119, %v1119
        %v1391 = vsel %vm769, %v1386, 0
        %v1394 = vsel %vm769, %v1387, 0
        %v1397 = vsel %vm1156, %v1389, 0
        %1399 = vmatpush.bf16.msra.mxu0 0
        %1400 = vmatpush.bf16.msra.mxu0 0
        %1401 = vmatpush.bf16.msra.mxu0 0
        %1402 = vmatpush.bf16.msra.mxu0 0
        %1403 = vmatpush.bf16.msra.mxu0 0
        %1404 = vmatpush.bf16.msra.mxu0 0
        %1405 = vmatpush.bf16.msra.mxu0 %v1397
        %1406 = vmatpush.bf16.msra.mxu0 %v1388
        %1407 = vmatmul.bf16.gmra.mxu0 %v1391
        %v1408 = vpop.f32.mrf.mxu0
        %v1409 = vadd.f32 0.0, %v1408
        %v1410 = vpop.f32.mrf.mxu0
        %v1411 = vadd.f32 0.0, %v1410
        %1412 = vmatmul.bf16.gmra.mxu0 %v1394
        %v1413 = vpop.f32.mrf.mxu0
        %v1414 = vadd.f32 0.0, %v1413
        %v1415 = vpop.f32.mrf.mxu0
        %1416 = vdwg.mxu0
        %v1417 = vpack.c.bf16 %v1411, %v1409
        %v1418 = vpack.c.bf16 %v1414, %v1414
        %s1419 = scalar_lea.vmem %s6, 96
        %v1420 = vld [vmem:[%s1419] sm:$0xff]
        %v1421 = vld [vmem:[%s1419 + $0x8] sm:$0xff]
        %v1422 = vld [vmem:[%s1419 + $0x10] sm:$0xff]
        %v1423 = vld [vmem:[%s1419 + $0x18] sm:$0xff]
        %v1424 = vpack.c.bf16 %v1421, %v1420
        %v1425 = vpack.c.bf16 %v1423, %v1422
        %v1427 = vsel %vm564, %v1417, 0
        %v1430 = vsel %vm564, %v1418, 0
        %1432 = vmatpush.bf16.msra.mxu0 0
        %1433 = vmatpush.bf16.msra.mxu0 0
        %1434 = vmatpush.bf16.msra.mxu0 0
        %1435 = vmatpush.bf16.msra.mxu0 0
        %1436 = vmatpush.bf16.msra.mxu0 0
        %1437 = vmatpush.bf16.msra.mxu0 0
        %1438 = vmatpush.bf16.msra.mxu0 %v1425
        %1439 = vmatpush.bf16.msra.mxu0 %v1424
        %1440 = vmatmul.bf16.gmra.mxu0 %v1427
        %v1441 = vpop.f32.mrf.mxu0
        %v1442 = vadd.f32 0.0, %v1441
        %v1443 = vpop.f32.mrf.mxu0
        %v1444 = vadd.f32 0.0, %v1443
        %1445 = vmatmul.bf16.gmra.mxu0 %v1430
        %v1446 = vpop.f32.mrf.mxu0
        %v1447 = vadd.f32 0.0, %v1446
        %v1448 = vpop.f32.mrf.mxu0
        %1449 = vdwg.mxu0
        %v1450 = vadd.f32 %v1370, %v1442
        %v1451 = vadd.f32 %v1371, %v1444
        %v1452 = vadd.f32 %v1372, %v1447
        %vm1453 = vcmask 523264
        %1454 = vst.msk [vmem:[%s485] sm:$0xff] %vm1453, %v1450
        %1455 = vst.msk [vmem:[%s485 + $0x8] sm:$0xff] %vm1453, %v1451
        %1456 = vst.msk [vmem:[%s485 + $0x10] sm:$0xff] %vm1453, %v1452
        %s1457 = smul.u32 3, %s27
        %p1458 = scmp.lt.s32.totalorder %s26, 1
        %s1459 = scalar_select %p1458, %s26, 1
        %p1460 = scmp.lt.s32.totalorder %s1457, 2
        %s1461 = scalar_select %p1460, %s1457, 2
        %s1462 = smul.addr %s1459, 3
        %s1463 = sadd.s32 %s1461, %s1462
        %s1464 = smul.addr %s1463, 8
        %s1465 = scalar_lea.vmem %s9, %s1464
        // Predicated region
        $region69: #{deepvit_forward.10} parent=55 // pred_check
          %p1466 = pneg %p267
        $region70: #{deepvit_forward.10} parent=55 // pred_check_branch
          %1468 = sbr.rel (%p1466) target = $region72
        $region71: #{deepvit_forward.10} parent=55 // pred_region
          %s1469 = smul.u32 3, %s27
        $region72: #{deepvit_forward.10} parent=55 // pred_fallthru
          _
      $region56: #{deepvit_forward.10} parent=5 // pred_fallthru
        _
      %p1470 = scmp.le.s32.totalorder 2, %s17
      // Predicated region
      $region73: #{deepvit_forward.10} parent=5 // pred_check
        %p1471 = pneg %p1470
      $region74: #{deepvit_forward.10} parent=5 // pred_check_branch
        %1473 = sbr.rel (%p1471) target = $region76
      $region75: #{deepvit_forward.10} parent=5 // pred_region
        %s1474 = ssub.s32 %s17, 2
        // Predicated region
        $region77: #{deepvit_forward.10} parent=75 // pred_check
          %p1475 = pneg %p273
        $region78: #{deepvit_forward.10} parent=75 // pred_check_branch
          %1477 = sbr.rel (%p1475) target = $region80
        $region79: #{deepvit_forward.10} parent=75 // pred_region
          %s1478 = smul.u32 3, %s29
          %p1479 = scmp.lt.s32.totalorder %s28, 1
          %s1480 = scalar_select %p1479, %s28, 1
          %p1481 = scmp.lt.s32.totalorder %s1478, 2
          %s1482 = scalar_select %p1481, %s1478, 2
          %s1483 = smul.addr %s1480, 3
          %s1484 = sadd.s32 %s1482, %s1483
          %s1485 = smul.addr %s1484, 8
          %s1486 = scalar_lea.vmem %s9, %s1485
        $region80: #{deepvit_forward.10} parent=75 // pred_fallthru
          _
      $region76: #{deepvit_forward.10} parent=5 // pred_fallthru
        _
    $region6: #{deepvit_forward.10} parent=1 // loop_footer
      %s21 = sadd.s32 1, %s17
    $region7: #{deepvit_forward.10} parent=1 // loop_footer_branch
      %16 = sbr.rel target = $region3
    $region8: #{deepvit_forward.10} parent=1 // loop_exit
      _
    %1487 = vsyncpa [#allocation3], 1
    %s1488 = scalar_lea.sflag [#allocation3], 1
    %1489 = vsyncpa %s1488, 1
    %1490 = vsyncpa [#allocation5], 1

</llo_original>
